<compile_context>
chip_gen: v5e
topology: v5e:2x2
jax: 0.10.0
libtpu: 0.0.40
codegen_flags: <defaults>
</compile_context>

<pallas_src>
import functools

import jax
import jax.numpy as jnp
from jax.experimental import pallas as pl
from jax.experimental.pallas import tpu as pltpu

LEAKY_SLOPE = 0.2
BN_EPS = 1e-5
_VMEM_LIMIT = 40 * 1024 * 1024       # safe on v5e/v6e scoped budgets and v7x 64 MiB
_TILE_BUDGET = 22 * 1024 * 1024      # per-step double-buffered working-set budget
_FUSED_BN_BUDGET = 20 * 1024 * 1024  # resident conv_out + scratch budget (v7x-safe)


# ------------------------------ small helpers ------------------------------ #

def _round_up(x, m):
    return ((x + m - 1) // m) * m


def _pick_tiles(m, k, c):
    """Pick (tm, nt, m_pad): M-tile size, grid length, padded M."""
    m8 = _round_up(max(m, 1), 8)
    tm = 512
    while tm > 64:
        # double-buffered bf16 patch tile + bf16 out tile + bf16 weight
        need = 2 * tm * 2 * k + 2 * tm * 2 * c + 2 * 2 * k * c
        if need <= _TILE_BUDGET:
            break
        tm //= 2
    # v7x has 2 TensorCores: keep >=2 M-tiles whenever M permits so the
    # "parallel" grid axis can be sharded across both cores.
    if m8 >= 16:
        tm = min(tm, _round_up((m8 + 1) // 2, 8))
    tm = min(tm, m8)
    nt = -(-m8 // tm)                       # cdiv
    # Balance tiles so M-padding waste stays < 8*nt rows (avoid padding M all
    # the way up to a large power-of-two tile multiple).
    tm = _round_up(-(-m8 // nt), 8)
    m_pad = nt * tm
    return tm, nt, m_pad


def _cparams(semantics):
    return pltpu.CompilerParams(dimension_semantics=semantics,
                                vmem_limit_bytes=_VMEM_LIMIT)


# ----------------------------- Pallas kernels ------------------------------ #

def _gemm_act_kernel(x_ref, w_ref, o_ref, *, act):
    """bf16 GEMM (f32 acc) with fused activation epilogue (no-BN layers)."""
    acc = jnp.dot(x_ref[...], w_ref[...], preferred_element_type=jnp.float32)
    if act == "leaky":
        y = jnp.where(acc >= 0, acc, LEAKY_SLOPE * acc)
    else:  # sigmoid via tanh (EUP path, numerically stable)
        y = 0.5 * jnp.tanh(0.5 * acc) + 0.5
    o_ref[...] = y.astype(o_ref.dtype)


def _gemm_bn_fused_kernel(x_ref, w_ref, gamma_ref, beta_ref, o_ref, acc_ref,
                          *, m_true):
    """Single-pass conv + BatchNorm(batch stats) + LeakyReLU.

    GEMM tiles accumulate into a persistent f32 VMEM scratch; the last grid
    step computes mean / centered variance over the true rows and writes the
    normalized activation (bf16) to the resident output block.
    """
    i = pl.program_id(0)
    tm = x_ref.shape[0]
    acc = jnp.dot(x_ref[...], w_ref[...], preferred_element_type=jnp.float32)
    row0 = pl.multiple_of(i * tm, 8)
    acc_ref[pl.ds(row0, tm), :] = acc

    @pl.when(i == pl.num_programs(0) - 1)
    def _():
        data = acc_ref[...]                                    # (m_pad, c) f32
        inv_m = 1.0 / float(m_true)
        mean = jnp.sum(data, axis=0, keepdims=True) * inv_m    # padded rows are 0
        rows = jax.lax.broadcasted_iota(jnp.int32, (data.shape[0], 1), 0)
        centered = jnp.where(rows < m_true, data - mean, 0.0)  # mask padded rows
        var = jnp.sum(centered * centered, axis=0, keepdims=True) * inv_m
        inv_std = jax.lax.rsqrt(var + BN_EPS)
        scale = gamma_ref[...] * inv_std
        shift = beta_ref[...] - mean * scale
        y = data * scale + shift
        y = jnp.where(y >= 0, y, LEAKY_SLOPE * y)
        o_ref[...] = y.astype(o_ref.dtype)


def _gemm_bn_partial_kernel(x_ref, w_ref, o_ref, sum_ref, sq_ref):
    """Fallback: bf16 GEMM emitting per-tile partial sum / sum-of-squares."""
    acc = jnp.dot(x_ref[...], w_ref[...], preferred_element_type=jnp.float32)
    o_ref[...] = acc.astype(o_ref.dtype)
    sum_ref[...] = jnp.sum(acc, axis=0, keepdims=True)[None]
    sq_ref[...] = jnp.sum(acc * acc, axis=0, keepdims=True)[None]


def _affine_leaky_kernel(x_ref, scale_ref, shift_ref, o_ref):
    """Fallback: per-channel affine (folded BatchNorm) + LeakyReLU(0.2)."""
    y = x_ref[...].astype(jnp.float32) * scale_ref[...] + shift_ref[...]
    o_ref[...] = jnp.where(y >= 0, y, LEAKY_SLOPE * y).astype(o_ref.dtype)


# ------------------------------ Pallas wrappers ----------------------------- #

def conv_gemm_act(patches, w_mat, act, *, tm, nt):
    m_pad, k = patches.shape
    _, c = w_mat.shape
    return pl.pallas_call(
        functools.partial(_gemm_act_kernel, act=act),
        out_shape=jax.ShapeDtypeStruct((m_pad, c), jnp.bfloat16),
        grid=(nt,),
        in_specs=[pl.BlockSpec((tm, k), lambda i: (i, 0)),
                  pl.BlockSpec((k, c), lambda i: (0, 0))],
        out_specs=pl.BlockSpec((tm, c), lambda i: (i, 0)),
        compiler_params=_cparams(("parallel",)),
    )(patches, w_mat)


def conv_gemm_bn_fused(patches, w_mat, gamma_p, beta_p, *, tm, nt, m_true):
    m_pad, k = patches.shape
    _, c = w_mat.shape
    return pl.pallas_call(
        functools.partial(_gemm_bn_fused_kernel, m_true=m_true),
        out_shape=jax.ShapeDtypeStruct((m_pad, c), jnp.bfloat16),
        grid=(nt,),
        in_specs=[pl.BlockSpec((tm, k), lambda i: (i, 0)),
                  pl.BlockSpec((k, c), lambda i: (0, 0)),
                  pl.BlockSpec((1, c), lambda i: (0, 0)),
                  pl.BlockSpec((1, c), lambda i: (0, 0))],
        # Output block = full array, constant index -> stays resident in VMEM
        # across the whole (arbitrary) grid and is written to HBM exactly once.
        out_specs=pl.BlockSpec((m_pad, c), lambda i: (0, 0)),
        scratch_shapes=[pltpu.VMEM((m_pad, c), jnp.float32)],
        compiler_params=_cparams(("arbitrary",)),
    )(patches, w_mat, gamma_p, beta_p)


def conv_gemm_bn_partial(patches, w_mat, *, tm, nt):
    m_pad, k = patches.shape
    _, c = w_mat.shape
    return pl.pallas_call(
        _gemm_bn_partial_kernel,
        out_shape=(jax.ShapeDtypeStruct((m_pad, c), jnp.bfloat16),
                   jax.ShapeDtypeStruct((nt, 1, c), jnp.float32),
                   jax.ShapeDtypeStruct((nt, 1, c), jnp.float32)),
        grid=(nt,),
        in_specs=[pl.BlockSpec((tm, k), lambda i: (i, 0)),
                  pl.BlockSpec((k, c), lambda i: (0, 0))],
        out_specs=(pl.BlockSpec((tm, c), lambda i: (i, 0)),
                   pl.BlockSpec((1, 1, c), lambda i: (i, 0, 0)),
                   pl.BlockSpec((1, 1, c), lambda i: (i, 0, 0))),
        compiler_params=_cparams(("parallel",)),
    )(patches, w_mat)


def affine_leaky(x, scale, shift, *, tm, nt):
    m_pad, c = x.shape
    return pl.pallas_call(
        _affine_leaky_kernel,
        out_shape=jax.ShapeDtypeStruct((m_pad, c), jnp.bfloat16),
        grid=(nt,),
        in_specs=[pl.BlockSpec((tm, c), lambda i: (i, 0)),
                  pl.BlockSpec((1, c), lambda i: (0, 0)),
                  pl.BlockSpec((1, c), lambda i: (0, 0))],
        out_specs=pl.BlockSpec((tm, c), lambda i: (i, 0)),
        compiler_params=_cparams(("parallel",)),
    )(x, scale, shift)


# ------------------------------- JAX glue ---------------------------------- #

def im2col(x_nhwc, k, stride, pad):
    """Extract (N*Ho*Wo, k*k*Cin) bf16 patches; flatten order (ki, kj, cin)."""
    xp = jnp.pad(x_nhwc, ((0, 0), (pad, pad), (pad, pad), (0, 0)))
    n, hp, wp, c = xp.shape
    ho = (hp - k) // stride + 1
    wo = (wp - k) // stride + 1
    cols = []
    for ki in range(k):
        for kj in range(k):
            cols.append(xp[:, ki:ki + stride * ho:stride,
                           kj:kj + stride * wo:stride, :])       # (N, Ho, Wo, C)
    patches = jnp.stack(cols, axis=3).reshape(n * ho * wo, k * k * c)
    return patches, ho, wo


def conv_block(x, w, gamma, beta, *, stride, pad, use_bn, act):
    n, _, _, cin = x.shape
    kh, kw, _, cout = w.shape
    k_true = kh * kw * cin                 # K is NOT padded (full-dim block is exempt)
    c_pad = _round_up(cout, 128)           # lane-dense bf16 stores

    patches, ho, wo = im2col(x.astype(jnp.bfloat16), kh, stride, pad)
    m = n * ho * wo

    w_mat = w.reshape(k_true, cout).astype(jnp.bfloat16)
    w_mat = jnp.pad(w_mat, ((0, 0), (0, c_pad - cout)))

    tm, nt, m_pad = _pick_tiles(m, k_true, c_pad)
    if m_pad != m:
        patches = jnp.pad(patches, ((0, m_pad - m), (0, 0)))   # zero rows -> BN-safe

    if not use_bn:
        y = conv_gemm_act(patches, w_mat, act, tm=tm, nt=nt)
    else:
        g = jnp.pad(gamma, (0, c_pad - cout), constant_values=1.0).reshape(1, c_pad)
        b = jnp.pad(beta, (0, c_pad - cout)).reshape(1, c_pad)
        # Fused single-pass BN if the resident conv_out (+ f32 scratch + tiles)
        # fits a conservative VMEM budget (sized for v7x's 64 MiB per core).
        resident = (m_pad * c_pad * (4 + 2 * 2)          # f32 scratch + 2x bf16 out
                    + 2 * tm * k_true * 2                # double-buffered patches
                    + 2 * k_true * c_pad * 2)            # weight
        if resident <= _FUSED_BN_BUDGET:
            y = conv_gemm_bn_fused(patches, w_mat, g, b, tm=tm, nt=nt, m_true=m)
        else:
            conv_out, sums, sqs = conv_gemm_bn_partial(patches, w_mat, tm=tm, nt=nt)
            total = jnp.sum(sums, axis=(0, 1))
            totsq = jnp.sum(sqs, axis=(0, 1))
            mean = total / m                              # padded rows are zero
            var = jnp.maximum(totsq / m - mean * mean, 0.0)
            inv_std = jax.lax.rsqrt(var + BN_EPS)
            scale = (g[0] * inv_std).reshape(1, c_pad)
            shift = (b[0] - mean * g[0] * inv_std).reshape(1, c_pad)
            y = affine_leaky(conv_out, scale, shift, tm=tm, nt=nt)

    return y[:m, :cout].reshape(n, ho, wo, cout)


def init_params(key, nc, ndf):
    chans = [(nc, ndf), (ndf, ndf * 2), (ndf * 2, ndf * 4),
             (ndf * 4, ndf * 8), (ndf * 8, 1)]
    params = {}
    keys = jax.random.split(key, 2 * len(chans))
    for i, (cin, cout) in enumerate(chans, start=1):
        kw_, kb_ = keys[2 * (i - 1)], keys[2 * (i - 1) + 1]
        params[f"w{i}"] = 0.02 * jax.random.normal(kw_, (4, 4, cin, cout), jnp.float32)
        # DCGAN-style BN init (weight ~ N(1, 0.02)); small random beta exercises
        # the shift path of the fused kernel.
        params[f"gamma{i}"] = 1.0 + 0.02 * jax.random.normal(kb_, (cout,), jnp.float32)
        params[f"beta{i}"] = 0.02 * jax.random.normal(kb_, (cout,), jnp.float32)
    return params


@jax.jit
def discriminator_forward(x_nchw, params):
    x = jnp.transpose(x_nchw, (0, 2, 3, 1)).astype(jnp.float32)   # NCHW -> NHWC
    x = conv_block(x, params["w1"], params["gamma1"], params["beta1"],
                   stride=2, pad=1, use_bn=False, act="leaky")
    x = conv_block(x, params["w2"], params["gamma2"], params["beta2"],
                   stride=2, pad=1, use_bn=True, act="leaky")
    x = conv_block(x, params["w3"], params["gamma3"], params["beta3"],
                   stride=2, pad=1, use_bn=True, act="leaky")
    x = conv_block(x, params["w4"], params["gamma4"], params["beta4"],
                   stride=2, pad=1, use_bn=True, act="leaky")
    x = conv_block(x, params["w5"], params["gamma5"], params["beta5"],
                   stride=1, pad=0, use_bn=False, act="sigmoid")
    return x.reshape(-1).astype(jnp.float32)                       # .view(-1)


# --------------------------- pure-JAX reference ----------------------------- #

def _reference_forward(x_nchw, params):
    x = jnp.transpose(x_nchw, (0, 2, 3, 1)).astype(jnp.float32)

    def conv(v, w, stride, pad):
        return jax.lax.conv_general_dilated(
            v, w, window_strides=(stride, stride),
            padding=[(pad, pad), (pad, pad)],
            dimension_numbers=("NHWC", "HWIO", "NHWC"))

    def bn(v, gamma, beta):
        mean = jnp.mean(v, axis=(0, 1, 2))
        var = jnp.var(v, axis=(0, 1, 2))
        return (v - mean) * jax.lax.rsqrt(var + BN_EPS) * gamma + beta

    leaky = lambda v: jnp.where(v >= 0, v, LEAKY_SLOPE * v)
    x = leaky(conv(x, params["w1"], 2, 1))
    x = leaky(bn(conv(x, params["w2"], 2, 1), params["gamma2"], params["beta2"]))
    x = leaky(bn(conv(x, params["w3"], 2, 1), params["gamma3"], params["beta3"]))
    x = leaky(bn(conv(x, params["w4"], 2, 1), params["gamma4"], params["beta4"]))
    x = jax.nn.sigmoid(conv(x, params["w5"], 1, 0))
    return x.reshape(-1)


if __name__ == "__main__":
    nc, ndf = 3, 8           # small ndf; spatial 64 is required by the 5-conv stack
    batch, h, w = 2, 64, 64
    key = jax.random.PRNGKey(0)
    k_x, k_p = jax.random.split(key)
    x = jax.random.normal(k_x, (batch, nc, h, w), jnp.float32)     # NCHW input
    params = init_params(k_p, nc, ndf)

    out = discriminator_forward(x, params)
    out = jax.block_until_ready(out)

    assert out.shape == (batch,), out.shape
    assert bool(jnp.all(jnp.isfinite(out)))
    assert bool(jnp.all((out >= 0.0) & (out <= 1.0)))

    ref = jax.block_until_ready(_reference_forward(x, params))
    max_err = float(jnp.max(jnp.abs(out - ref)))
    # bf16 GEMM inputs vs the f32 reference: loose tolerance on the sigmoid output.
    assert max_err < 5e-2, f"max abs error vs reference: {max_err}"

    print("KERNEL_OK")
</pallas_src>

<mosaic_0001>
module attributes {stable_mosaic.version = 11 : i64} {
  func.func @_gemm_act_kernel(%arg0: i32, %arg1: memref<512x48xbf16, #tpu.memory_space<vmem>>, %arg2: memref<48x128xbf16, #tpu.memory_space<vmem>>, %arg3: memref<512x128xbf16, #tpu.memory_space<vmem>>) attributes {dimension_semantics = [#tpu.dimension_semantics<parallel>], iteration_bounds = array<i64: 4>, scalar_prefetch = 0 : i64, scratch_operands = 0 : i64, tpu.core_type = #tpu.core_type<tc>, window_params = [{transform_indices = @transform_0, window_bounds = array<i64: 512, 48>}, {pipeline_mode = #tpu.pipeline_mode<synchronous>, transform_indices = @transform_1, window_bounds = array<i64: 48, 128>}, {transform_indices = @transform_2, window_bounds = array<i64: 512, 128>}]} {
    %c0 = arith.constant 0 : index
    %c0_0 = arith.constant 0 : index
    %0 = vector.load %arg1[%c0, %c0_0] : memref<512x48xbf16, #tpu.memory_space<vmem>>, vector<512x48xbf16>
    %c0_1 = arith.constant 0 : index
    %c0_2 = arith.constant 0 : index
    %1 = vector.load %arg2[%c0_1, %c0_2] : memref<48x128xbf16, #tpu.memory_space<vmem>>, vector<48x128xbf16>
    %cst = arith.constant dense<0.000000e+00> : vector<512x128xf32>
    %2 = tpu.matmul %0, %1, %cst {dimension_numbers = #tpu.dot_dimension_numbers<[1], [0], [0], [1], [0, 0, 1, 1], [], []>} : vector<512x48xbf16>, vector<48x128xbf16>, vector<512x128xf32> -> vector<512x128xf32>
    %cst_3 = arith.constant 0.000000e+00 : f32
    %3 = vector.broadcast %cst_3 : f32 to vector<512x128xf32>
    %4 = arith.cmpf oge, %2, %3 : vector<512x128xf32>
    %cst_4 = arith.constant 2.000000e-01 : f32
    %5 = vector.broadcast %cst_4 : f32 to vector<512x128xf32>
    %6 = arith.mulf %5, %2 : vector<512x128xf32>
    %7 = arith.select %4, %2, %6 : vector<512x128xi1>, vector<512x128xf32>
    %8 = arith.truncf %7 : vector<512x128xf32> to vector<512x128xbf16>
    %c0_5 = arith.constant 0 : index
    %c0_6 = arith.constant 0 : index
    %9 = vector.load %arg3[%c0_5, %c0_6] : memref<512x128xbf16, #tpu.memory_space<vmem>>, vector<512x128xbf16>
    tpu.vector_store %arg3[%c0_5, %c0_6], %8 {strides = array<i32>} : memref<512x128xbf16, #tpu.memory_space<vmem>>, vector<512x128xbf16>,
    return
  }
  func.func @transform_0(%arg0: i32) -> (i32, i32) {
    %c0_i32 = arith.constant 0 : i32
    %c0_i32_0 = arith.constant 0 : i32
    return %arg0, %c0_i32 : i32, i32
  }
  func.func @transform_1(%arg0: i32) -> (i32, i32) {
    %c0_i32 = arith.constant 0 : i32
    %c0_i32_0 = arith.constant 0 : i32
    %c0_i32_1 = arith.constant 0 : i32
    return %c0_i32, %c0_i32_0 : i32, i32
  }
  func.func @transform_2(%arg0: i32) -> (i32, i32) {
    %c0_i32 = arith.constant 0 : i32
    %c0_i32_0 = arith.constant 0 : i32
    return %arg0, %c0_i32 : i32, i32
  }
}

module attributes {stable_mosaic.version = 11 : i64} {
  func.func @_gemm_bn_fused_kernel(%arg0: i32, %arg1: memref<256x128xbf16, #tpu.memory_space<vmem>>, %arg2: memref<128x128xbf16, #tpu.memory_space<vmem>>, %arg3: memref<1x128xf32, #tpu.memory_space<vmem>>, %arg4: memref<1x128xf32, #tpu.memory_space<vmem>>, %arg5: memref<512x128xbf16, #tpu.memory_space<vmem>>, %arg6: memref<512x128xf32, #tpu.memory_space<vmem>>) attributes {dimension_semantics = [#tpu.dimension_semantics<arbitrary>], iteration_bounds = array<i64: 2>, scalar_prefetch = 0 : i64, scratch_operands = 1 : i64, tpu.core_type = #tpu.core_type<tc>, window_params = [{transform_indices = @transform_0, window_bounds = array<i64: 256, 128>}, {pipeline_mode = #tpu.pipeline_mode<synchronous>, transform_indices = @transform_1, window_bounds = array<i64: 128, 128>}, {pipeline_mode = #tpu.pipeline_mode<synchronous>, transform_indices = @transform_2, window_bounds = array<i64: 1, 128>}, {pipeline_mode = #tpu.pipeline_mode<synchronous>, transform_indices = @transform_3, window_bounds = array<i64: 1, 128>}, {pipeline_mode = #tpu.pipeline_mode<synchronous>, transform_indices = @transform_4, window_bounds = array<i64: 512, 128>}]} {
    %c0 = arith.constant 0 : index
    %c0_0 = arith.constant 0 : index
    %0 = vector.load %arg1[%c0, %c0_0] : memref<256x128xbf16, #tpu.memory_space<vmem>>, vector<256x128xbf16>
    %c0_1 = arith.constant 0 : index
    %c0_2 = arith.constant 0 : index
    %1 = vector.load %arg2[%c0_1, %c0_2] : memref<128x128xbf16, #tpu.memory_space<vmem>>, vector<128x128xbf16>
    %cst = arith.constant dense<0.000000e+00> : vector<256x128xf32>
    %2 = tpu.matmul %0, %1, %cst {dimension_numbers = #tpu.dot_dimension_numbers<[1], [0], [0], [1], [0, 0, 1, 1], [], []>} : vector<256x128xbf16>, vector<128x128xbf16>, vector<256x128xf32> -> vector<256x128xf32>
    %c256_i32 = arith.constant 256 : i32
    %3 = arith.muli %arg0, %c256_i32 : i32
    %4 = tpu.assume_multiple %3, 8 : i32
    %5 = arith.index_cast %4 : i32 to index
    %c0_3 = arith.constant 0 : index
    %6 = vector.load %arg6[%5, %c0_3] : memref<512x128xf32, #tpu.memory_space<vmem>>, vector<256x128xf32>
    tpu.vector_store %arg6[%5, %c0_3], %2 {strides = array<i32>} : memref<512x128xf32, #tpu.memory_space<vmem>>, vector<256x128xf32>,
    %c1_i32 = arith.constant 1 : i32
    %7 = arith.cmpi eq, %arg0, %c1_i32 : i32
    %8 = arith.extui %7 : i1 to i32
    %c0_i32 = arith.constant 0 : i32
    %9 = arith.cmpi ne, %8, %c0_i32 : i32
    scf.if %9 {
      %c0_4 = arith.constant 0 : index
      %c0_5 = arith.constant 0 : index
      %10 = vector.load %arg6[%c0_4, %c0_5] : memref<512x128xf32, #tpu.memory_space<vmem>>, vector<512x128xf32>
      %cst_6 = arith.constant dense<0.000000e+00> : vector<128xf32>
      %11 = vector.multi_reduction <add>, %10, %cst_6 [0] : vector<512x128xf32> to vector<128xf32>
      %12 = vector.shape_cast %11 : vector<128xf32> to vector<1x128xf32>
      %cst_7 = arith.constant 0.001953125 : f32
      %13 = vector.broadcast %cst_7 : f32 to vector<1x128xf32>
      %14 = arith.mulf %12, %13 : vector<1x128xf32>
      %15 = tpu.iota {dimensions = array<i32: 0>} : vector<512x1xi32>
      %c512_i32 = arith.constant 512 : i32
      %16 = vector.broadcast %c512_i32 : i32 to vector<512x1xi32>
      %17 = arith.cmpi slt, %15, %16 : vector<512x1xi32>
      %18 = vector.broadcast %14 : vector<1x128xf32> to vector<512x128xf32>
      %19 = arith.subf %10, %18 : vector<512x128xf32>
      %cst_8 = arith.constant 0.000000e+00 : f32
      %20 = vector.shape_cast %17 : vector<512x1xi1> to vector<512x1xi1>
      %21 = vector.broadcast %20 : vector<512x1xi1> to vector<512x128xi1>
      %22 = vector.broadcast %cst_8 : f32 to vector<512x128xf32>
      %23 = arith.select %21, %19, %22 : vector<512x128xi1>, vector<512x128xf32>
      %24 = arith.mulf %23, %23 : vector<512x128xf32>
      %cst_9 = arith.constant dense<0.000000e+00> : vector<128xf32>
      %25 = vector.multi_reduction <add>, %24, %cst_9 [0] : vector<512x128xf32> to vector<128xf32>
      %26 = vector.shape_cast %25 : vector<128xf32> to vector<1x128xf32>
      %cst_10 = arith.constant 0.001953125 : f32
      %27 = vector.broadcast %cst_10 : f32 to vector<1x128xf32>
      %28 = arith.mulf %26, %27 : vector<1x128xf32>
      %cst_11 = arith.constant 9.99999974E-6 : f32
      %29 = vector.broadcast %cst_11 : f32 to vector<1x128xf32>
      %30 = arith.addf %28, %29 : vector<1x128xf32>
      %31 = math.rsqrt %30 : vector<1x128xf32>
      %c0_12 = arith.constant 0 : index
      %c0_13 = arith.constant 0 : index
      %32 = vector.load %arg3[%c0_12, %c0_13] : memref<1x128xf32, #tpu.memory_space<vmem>>, vector<1x128xf32>
      %33 = arith.mulf %32, %31 : vector<1x128xf32>
      %c0_14 = arith.constant 0 : index
      %c0_15 = arith.constant 0 : index
      %34 = vector.load %arg4[%c0_14, %c0_15] : memref<1x128xf32, #tpu.memory_space<vmem>>, vector<1x128xf32>
      %35 = arith.mulf %14, %33 : vector<1x128xf32>
      %36 = arith.subf %34, %35 : vector<1x128xf32>
      %37 = vector.broadcast %33 : vector<1x128xf32> to vector<512x128xf32>
      %38 = arith.mulf %10, %37 : vector<512x128xf32>
      %39 = vector.broadcast %36 : vector<1x128xf32> to vector<512x128xf32>
      %40 = arith.addf %38, %39 : vector<512x128xf32>
      %cst_16 = arith.constant 0.000000e+00 : f32
      %41 = vector.broadcast %cst_16 : f32 to vector<512x128xf32>
      %42 = arith.cmpf oge, %40, %41 : vector<512x128xf32>
      %cst_17 = arith.constant 2.000000e-01 : f32
      %43 = vector.broadcast %cst_17 : f32 to vector<512x128xf32>
      %44 = arith.mulf %43, %40 : vector<512x128xf32>
      %45 = arith.select %42, %40, %44 : vector<512x128xi1>, vector<512x128xf32>
      %46 = arith.truncf %45 : vector<512x128xf32> to vector<512x128xbf16>
      %c0_18 = arith.constant 0 : index
      %c0_19 = arith.constant 0 : index
      %47 = vector.load %arg5[%c0_18, %c0_19] : memref<512x128xbf16, #tpu.memory_space<vmem>>, vector<512x128xbf16>
      tpu.vector_store %arg5[%c0_18, %c0_19], %46 {strides = array<i32>} : memref<512x128xbf16, #tpu.memory_space<vmem>>, vector<512x128xbf16>,
    } else {
    }
    return
  }
  func.func @transform_0(%arg0: i32) -> (i32, i32) {
    %c0_i32 = arith.constant 0 : i32
    %c0_i32_0 = arith.constant 0 : i32
    return %arg0, %c0_i32 : i32, i32
  }
  func.func @transform_1(%arg0: i32) -> (i32, i32) {
    %c0_i32 = arith.constant 0 : i32
    %c0_i32_0 = arith.constant 0 : i32
    %c0_i32_1 = arith.constant 0 : i32
    return %c0_i32, %c0_i32_0 : i32, i32
  }
  func.func @transform_2(%arg0: i32) -> (i32, i32) {
    %c0_i32 = arith.constant 0 : i32
    %c0_i32_0 = arith.constant 0 : i32
    %c0_i32_1 = arith.constant 0 : i32
    return %c0_i32, %c0_i32_0 : i32, i32
  }
  func.func @transform_3(%arg0: i32) -> (i32, i32) {
    %c0_i32 = arith.constant 0 : i32
    %c0_i32_0 = arith.constant 0 : i32
    %c0_i32_1 = arith.constant 0 : i32
    return %c0_i32, %c0_i32_0 : i32, i32
  }
  func.func @transform_4(%arg0: i32) -> (i32, i32) {
    %c0_i32 = arith.constant 0 : i32
    %c0_i32_0 = arith.constant 0 : i32
    %c0_i32_1 = arith.constant 0 : i32
    return %c0_i32, %c0_i32_0 : i32, i32
  }
}

module attributes {stable_mosaic.version = 11 : i64} {
  func.func @_gemm_bn_fused_kernel(%arg0: i32, %arg1: memref<64x256xbf16, #tpu.memory_space<vmem>>, %arg2: memref<256x128xbf16, #tpu.memory_space<vmem>>, %arg3: memref<1x128xf32, #tpu.memory_space<vmem>>, %arg4: memref<1x128xf32, #tpu.memory_space<vmem>>, %arg5: memref<128x128xbf16, #tpu.memory_space<vmem>>, %arg6: memref<128x128xf32, #tpu.memory_space<vmem>>) attributes {dimension_semantics = [#tpu.dimension_semantics<arbitrary>], iteration_bounds = array<i64: 2>, scalar_prefetch = 0 : i64, scratch_operands = 1 : i64, tpu.core_type = #tpu.core_type<tc>, window_params = [{transform_indices = @transform_0, window_bounds = array<i64: 64, 256>}, {pipeline_mode = #tpu.pipeline_mode<synchronous>, transform_indices = @transform_1, window_bounds = array<i64: 256, 128>}, {pipeline_mode = #tpu.pipeline_mode<synchronous>, transform_indices = @transform_2, window_bounds = array<i64: 1, 128>}, {pipeline_mode = #tpu.pipeline_mode<synchronous>, transform_indices = @transform_3, window_bounds = array<i64: 1, 128>}, {pipeline_mode = #tpu.pipeline_mode<synchronous>, transform_indices = @transform_4, window_bounds = array<i64: 128, 128>}]} {
    %c0 = arith.constant 0 : index
    %c0_0 = arith.constant 0 : index
    %0 = vector.load %arg1[%c0, %c0_0] : memref<64x256xbf16, #tpu.memory_space<vmem>>, vector<64x256xbf16>
    %c0_1 = arith.constant 0 : index
    %c0_2 = arith.constant 0 : index
    %1 = vector.load %arg2[%c0_1, %c0_2] : memref<256x128xbf16, #tpu.memory_space<vmem>>, vector<256x128xbf16>
    %cst = arith.constant dense<0.000000e+00> : vector<64x128xf32>
    %2 = tpu.matmul %0, %1, %cst {dimension_numbers = #tpu.dot_dimension_numbers<[1], [0], [0], [1], [0, 0, 1, 1], [], []>} : vector<64x256xbf16>, vector<256x128xbf16>, vector<64x128xf32> -> vector<64x128xf32>
    %c64_i32 = arith.constant 64 : i32
    %3 = arith.muli %arg0, %c64_i32 : i32
    %4 = tpu.assume_multiple %3, 8 : i32
    %5 = arith.index_cast %4 : i32 to index
    %c0_3 = arith.constant 0 : index
    %6 = vector.load %arg6[%5, %c0_3] : memref<128x128xf32, #tpu.memory_space<vmem>>, vector<64x128xf32>
    tpu.vector_store %arg6[%5, %c0_3], %2 {strides = array<i32>} : memref<128x128xf32, #tpu.memory_space<vmem>>, vector<64x128xf32>,
    %c1_i32 = arith.constant 1 : i32
    %7 = arith.cmpi eq, %arg0, %c1_i32 : i32
    %8 = arith.extui %7 : i1 to i32
    %c0_i32 = arith.constant 0 : i32
    %9 = arith.cmpi ne, %8, %c0_i32 : i32
    scf.if %9 {
      %c0_4 = arith.constant 0 : index
      %c0_5 = arith.constant 0 : index
      %10 = vector.load %arg6[%c0_4, %c0_5] : memref<128x128xf32, #tpu.memory_space<vmem>>, vector<128x128xf32>
      %cst_6 = arith.constant dense<0.000000e+00> : vector<128xf32>
      %11 = vector.multi_reduction <add>, %10, %cst_6 [0] : vector<128x128xf32> to vector<128xf32>
      %12 = vector.shape_cast %11 : vector<128xf32> to vector<1x128xf32>
      %cst_7 = arith.constant 7.812500e-03 : f32
      %13 = vector.broadcast %cst_7 : f32 to vector<1x128xf32>
      %14 = arith.mulf %12, %13 : vector<1x128xf32>
      %15 = tpu.iota {dimensions = array<i32: 0>} : vector<128x1xi32>
      %c128_i32 = arith.constant 128 : i32
      %16 = vector.broadcast %c128_i32 : i32 to vector<128x1xi32>
      %17 = arith.cmpi slt, %15, %16 : vector<128x1xi32>
      %18 = vector.broadcast %14 : vector<1x128xf32> to vector<128x128xf32>
      %19 = arith.subf %10, %18 : vector<128x128xf32>
      %cst_8 = arith.constant 0.000000e+00 : f32
      %20 = vector.shape_cast %17 : vector<128x1xi1> to vector<128x1xi1>
      %21 = vector.broadcast %20 : vector<128x1xi1> to vector<128x128xi1>
      %22 = vector.broadcast %cst_8 : f32 to vector<128x128xf32>
      %23 = arith.select %21, %19, %22 : vector<128x128xi1>, vector<128x128xf32>
      %24 = arith.mulf %23, %23 : vector<128x128xf32>
      %cst_9 = arith.constant dense<0.000000e+00> : vector<128xf32>
      %25 = vector.multi_reduction <add>, %24, %cst_9 [0] : vector<128x128xf32> to vector<128xf32>
      %26 = vector.shape_cast %25 : vector<128xf32> to vector<1x128xf32>
      %cst_10 = arith.constant 7.812500e-03 : f32
      %27 = vector.broadcast %cst_10 : f32 to vector<1x128xf32>
      %28 = arith.mulf %26, %27 : vector<1x128xf32>
      %cst_11 = arith.constant 9.99999974E-6 : f32
      %29 = vector.broadcast %cst_11 : f32 to vector<1x128xf32>
      %30 = arith.addf %28, %29 : vector<1x128xf32>
      %31 = math.rsqrt %30 : vector<1x128xf32>
      %c0_12 = arith.constant 0 : index
      %c0_13 = arith.constant 0 : index
      %32 = vector.load %arg3[%c0_12, %c0_13] : memref<1x128xf32, #tpu.memory_space<vmem>>, vector<1x128xf32>
      %33 = arith.mulf %32, %31 : vector<1x128xf32>
      %c0_14 = arith.constant 0 : index
      %c0_15 = arith.constant 0 : index
      %34 = vector.load %arg4[%c0_14, %c0_15] : memref<1x128xf32, #tpu.memory_space<vmem>>, vector<1x128xf32>
      %35 = arith.mulf %14, %33 : vector<1x128xf32>
      %36 = arith.subf %34, %35 : vector<1x128xf32>
      %37 = vector.broadcast %33 : vector<1x128xf32> to vector<128x128xf32>
      %38 = arith.mulf %10, %37 : vector<128x128xf32>
      %39 = vector.broadcast %36 : vector<1x128xf32> to vector<128x128xf32>
      %40 = arith.addf %38, %39 : vector<128x128xf32>
      %cst_16 = arith.constant 0.000000e+00 : f32
      %41 = vector.broadcast %cst_16 : f32 to vector<128x128xf32>
      %42 = arith.cmpf oge, %40, %41 : vector<128x128xf32>
      %cst_17 = arith.constant 2.000000e-01 : f32
      %43 = vector.broadcast %cst_17 : f32 to vector<128x128xf32>
      %44 = arith.mulf %43, %40 : vector<128x128xf32>
      %45 = arith.select %42, %40, %44 : vector<128x128xi1>, vector<128x128xf32>
      %46 = arith.truncf %45 : vector<128x128xf32> to vector<128x128xbf16>
      %c0_18 = arith.constant 0 : index
      %c0_19 = arith.constant 0 : index
      %47 = vector.load %arg5[%c0_18, %c0_19] : memref<128x128xbf16, #tpu.memory_space<vmem>>, vector<128x128xbf16>
      tpu.vector_store %arg5[%c0_18, %c0_19], %46 {strides = array<i32>} : memref<128x128xbf16, #tpu.memory_space<vmem>>, vector<128x128xbf16>,
    } else {
    }
    return
  }
  func.func @transform_0(%arg0: i32) -> (i32, i32) {
    %c0_i32 = arith.constant 0 : i32
    %c0_i32_0 = arith.constant 0 : i32
    return %arg0, %c0_i32 : i32, i32
  }
  func.func @transform_1(%arg0: i32) -> (i32, i32) {
    %c0_i32 = arith.constant 0 : i32
    %c0_i32_0 = arith.constant 0 : i32
    %c0_i32_1 = arith.constant 0 : i32
    return %c0_i32, %c0_i32_0 : i32, i32
  }
  func.func @transform_2(%arg0: i32) -> (i32, i32) {
    %c0_i32 = arith.constant 0 : i32
    %c0_i32_0 = arith.constant 0 : i32
    %c0_i32_1 = arith.constant 0 : i32
    return %c0_i32, %c0_i32_0 : i32, i32
  }
  func.func @transform_3(%arg0: i32) -> (i32, i32) {
    %c0_i32 = arith.constant 0 : i32
    %c0_i32_0 = arith.constant 0 : i32
    %c0_i32_1 = arith.constant 0 : i32
    return %c0_i32, %c0_i32_0 : i32, i32
  }
  func.func @transform_4(%arg0: i32) -> (i32, i32) {
    %c0_i32 = arith.constant 0 : i32
    %c0_i32_0 = arith.constant 0 : i32
    %c0_i32_1 = arith.constant 0 : i32
    return %c0_i32, %c0_i32_0 : i32, i32
  }
}

module attributes {stable_mosaic.version = 11 : i64} {
  func.func @_gemm_bn_fused_kernel(%arg0: i32, %arg1: memref<16x512xbf16, #tpu.memory_space<vmem>>, %arg2: memref<512x128xbf16, #tpu.memory_space<vmem>>, %arg3: memref<1x128xf32, #tpu.memory_space<vmem>>, %arg4: memref<1x128xf32, #tpu.memory_space<vmem>>, %arg5: memref<32x128xbf16, #tpu.memory_space<vmem>>, %arg6: memref<32x128xf32, #tpu.memory_space<vmem>>) attributes {dimension_semantics = [#tpu.dimension_semantics<arbitrary>], iteration_bounds = array<i64: 2>, scalar_prefetch = 0 : i64, scratch_operands = 1 : i64, tpu.core_type = #tpu.core_type<tc>, window_params = [{transform_indices = @transform_0, window_bounds = array<i64: 16, 512>}, {pipeline_mode = #tpu.pipeline_mode<synchronous>, transform_indices = @transform_1, window_bounds = array<i64: 512, 128>}, {pipeline_mode = #tpu.pipeline_mode<synchronous>, transform_indices = @transform_2, window_bounds = array<i64: 1, 128>}, {pipeline_mode = #tpu.pipeline_mode<synchronous>, transform_indices = @transform_3, window_bounds = array<i64: 1, 128>}, {pipeline_mode = #tpu.pipeline_mode<synchronous>, transform_indices = @transform_4, window_bounds = array<i64: 32, 128>}]} {
    %c0 = arith.constant 0 : index
    %c0_0 = arith.constant 0 : index
    %0 = vector.load %arg1[%c0, %c0_0] : memref<16x512xbf16, #tpu.memory_space<vmem>>, vector<16x512xbf16>
    %c0_1 = arith.constant 0 : index
    %c0_2 = arith.constant 0 : index
    %1 = vector.load %arg2[%c0_1, %c0_2] : memref<512x128xbf16, #tpu.memory_space<vmem>>, vector<512x128xbf16>
    %cst = arith.constant dense<0.000000e+00> : vector<16x128xf32>
    %2 = tpu.matmul %0, %1, %cst {dimension_numbers = #tpu.dot_dimension_numbers<[1], [0], [0], [1], [0, 0, 1, 1], [], []>} : vector<16x512xbf16>, vector<512x128xbf16>, vector<16x128xf32> -> vector<16x128xf32>
    %c16_i32 = arith.constant 16 : i32
    %3 = arith.muli %arg0, %c16_i32 : i32
    %4 = tpu.assume_multiple %3, 8 : i32
    %5 = arith.index_cast %4 : i32 to index
    %c0_3 = arith.constant 0 : index
    %6 = vector.load %arg6[%5, %c0_3] : memref<32x128xf32, #tpu.memory_space<vmem>>, vector<16x128xf32>
    tpu.vector_store %arg6[%5, %c0_3], %2 {strides = array<i32>} : memref<32x128xf32, #tpu.memory_space<vmem>>, vector<16x128xf32>,
    %c1_i32 = arith.constant 1 : i32
    %7 = arith.cmpi eq, %arg0, %c1_i32 : i32
    %8 = arith.extui %7 : i1 to i32
    %c0_i32 = arith.constant 0 : i32
    %9 = arith.cmpi ne, %8, %c0_i32 : i32
    scf.if %9 {
      %c0_4 = arith.constant 0 : index
      %c0_5 = arith.constant 0 : index
      %10 = vector.load %arg6[%c0_4, %c0_5] : memref<32x128xf32, #tpu.memory_space<vmem>>, vector<32x128xf32>
      %cst_6 = arith.constant dense<0.000000e+00> : vector<128xf32>
      %11 = vector.multi_reduction <add>, %10, %cst_6 [0] : vector<32x128xf32> to vector<128xf32>
      %12 = vector.shape_cast %11 : vector<128xf32> to vector<1x128xf32>
      %cst_7 = arith.constant 3.125000e-02 : f32
      %13 = vector.broadcast %cst_7 : f32 to vector<1x128xf32>
      %14 = arith.mulf %12, %13 : vector<1x128xf32>
      %15 = tpu.iota {dimensions = array<i32: 0>} : vector<32x1xi32>
      %c32_i32 = arith.constant 32 : i32
      %16 = vector.broadcast %c32_i32 : i32 to vector<32x1xi32>
      %17 = arith.cmpi slt, %15, %16 : vector<32x1xi32>
      %18 = vector.broadcast %14 : vector<1x128xf32> to vector<32x128xf32>
      %19 = arith.subf %10, %18 : vector<32x128xf32>
      %cst_8 = arith.constant 0.000000e+00 : f32
      %20 = vector.shape_cast %17 : vector<32x1xi1> to vector<32x1xi1>
      %21 = vector.broadcast %20 : vector<32x1xi1> to vector<32x128xi1>
      %22 = vector.broadcast %cst_8 : f32 to vector<32x128xf32>
      %23 = arith.select %21, %19, %22 : vector<32x128xi1>, vector<32x128xf32>
      %24 = arith.mulf %23, %23 : vector<32x128xf32>
      %cst_9 = arith.constant dense<0.000000e+00> : vector<128xf32>
      %25 = vector.multi_reduction <add>, %24, %cst_9 [0] : vector<32x128xf32> to vector<128xf32>
      %26 = vector.shape_cast %25 : vector<128xf32> to vector<1x128xf32>
      %cst_10 = arith.constant 3.125000e-02 : f32
      %27 = vector.broadcast %cst_10 : f32 to vector<1x128xf32>
      %28 = arith.mulf %26, %27 : vector<1x128xf32>
      %cst_11 = arith.constant 9.99999974E-6 : f32
      %29 = vector.broadcast %cst_11 : f32 to vector<1x128xf32>
      %30 = arith.addf %28, %29 : vector<1x128xf32>
      %31 = math.rsqrt %30 : vector<1x128xf32>
      %c0_12 = arith.constant 0 : index
      %c0_13 = arith.constant 0 : index
      %32 = vector.load %arg3[%c0_12, %c0_13] : memref<1x128xf32, #tpu.memory_space<vmem>>, vector<1x128xf32>
      %33 = arith.mulf %32, %31 : vector<1x128xf32>
      %c0_14 = arith.constant 0 : index
      %c0_15 = arith.constant 0 : index
      %34 = vector.load %arg4[%c0_14, %c0_15] : memref<1x128xf32, #tpu.memory_space<vmem>>, vector<1x128xf32>
      %35 = arith.mulf %14, %33 : vector<1x128xf32>
      %36 = arith.subf %34, %35 : vector<1x128xf32>
      %37 = vector.broadcast %33 : vector<1x128xf32> to vector<32x128xf32>
      %38 = arith.mulf %10, %37 : vector<32x128xf32>
      %39 = vector.broadcast %36 : vector<1x128xf32> to vector<32x128xf32>
      %40 = arith.addf %38, %39 : vector<32x128xf32>
      %cst_16 = arith.constant 0.000000e+00 : f32
      %41 = vector.broadcast %cst_16 : f32 to vector<32x128xf32>
      %42 = arith.cmpf oge, %40, %41 : vector<32x128xf32>
      %cst_17 = arith.constant 2.000000e-01 : f32
      %43 = vector.broadcast %cst_17 : f32 to vector<32x128xf32>
      %44 = arith.mulf %43, %40 : vector<32x128xf32>
      %45 = arith.select %42, %40, %44 : vector<32x128xi1>, vector<32x128xf32>
      %46 = arith.truncf %45 : vector<32x128xf32> to vector<32x128xbf16>
      %c0_18 = arith.constant 0 : index
      %c0_19 = arith.constant 0 : index
      %47 = vector.load %arg5[%c0_18, %c0_19] : memref<32x128xbf16, #tpu.memory_space<vmem>>, vector<32x128xbf16>
      tpu.vector_store %arg5[%c0_18, %c0_19], %46 {strides = array<i32>} : memref<32x128xbf16, #tpu.memory_space<vmem>>, vector<32x128xbf16>,
    } else {
    }
    return
  }
  func.func @transform_0(%arg0: i32) -> (i32, i32) {
    %c0_i32 = arith.constant 0 : i32
    %c0_i32_0 = arith.constant 0 : i32
    return %arg0, %c0_i32 : i32, i32
  }
  func.func @transform_1(%arg0: i32) -> (i32, i32) {
    %c0_i32 = arith.constant 0 : i32
    %c0_i32_0 = arith.constant 0 : i32
    %c0_i32_1 = arith.constant 0 : i32
    return %c0_i32, %c0_i32_0 : i32, i32
  }
  func.func @transform_2(%arg0: i32) -> (i32, i32) {
    %c0_i32 = arith.constant 0 : i32
    %c0_i32_0 = arith.constant 0 : i32
    %c0_i32_1 = arith.constant 0 : i32
    return %c0_i32, %c0_i32_0 : i32, i32
  }
  func.func @transform_3(%arg0: i32) -> (i32, i32) {
    %c0_i32 = arith.constant 0 : i32
    %c0_i32_0 = arith.constant 0 : i32
    %c0_i32_1 = arith.constant 0 : i32
    return %c0_i32, %c0_i32_0 : i32, i32
  }
  func.func @transform_4(%arg0: i32) -> (i32, i32) {
    %c0_i32 = arith.constant 0 : i32
    %c0_i32_0 = arith.constant 0 : i32
    %c0_i32_1 = arith.constant 0 : i32
    return %c0_i32, %c0_i32_0 : i32, i32
  }
}

module attributes {stable_mosaic.version = 11 : i64} {
  func.func @_gemm_act_kernel(%arg0: i32, %arg1: memref<8x1024xbf16, #tpu.memory_space<vmem>>, %arg2: memref<1024x128xbf16, #tpu.memory_space<vmem>>, %arg3: memref<8x128xbf16, #tpu.memory_space<vmem>>) attributes {dimension_semantics = [#tpu.dimension_semantics<parallel>], iteration_bounds = array<i64: 1>, scalar_prefetch = 0 : i64, scratch_operands = 0 : i64, tpu.core_type = #tpu.core_type<tc>, window_params = [{transform_indices = @transform_0, window_bounds = array<i64: 8, 1024>}, {pipeline_mode = #tpu.pipeline_mode<synchronous>, transform_indices = @transform_1, window_bounds = array<i64: 1024, 128>}, {transform_indices = @transform_2, window_bounds = array<i64: 8, 128>}]} {
    %c0 = arith.constant 0 : index
    %c0_0 = arith.constant 0 : index
    %0 = vector.load %arg1[%c0, %c0_0] : memref<8x1024xbf16, #tpu.memory_space<vmem>>, vector<8x1024xbf16>
    %c0_1 = arith.constant 0 : index
    %c0_2 = arith.constant 0 : index
    %1 = vector.load %arg2[%c0_1, %c0_2] : memref<1024x128xbf16, #tpu.memory_space<vmem>>, vector<1024x128xbf16>
    %cst = arith.constant dense<0.000000e+00> : vector<8x128xf32>
    %2 = tpu.matmul %0, %1, %cst {dimension_numbers = #tpu.dot_dimension_numbers<[1], [0], [0], [1], [0, 0, 1, 1], [], []>} : vector<8x1024xbf16>, vector<1024x128xbf16>, vector<8x128xf32> -> vector<8x128xf32>
    %cst_3 = arith.constant 5.000000e-01 : f32
    %3 = vector.broadcast %cst_3 : f32 to vector<8x128xf32>
    %4 = arith.mulf %3, %2 : vector<8x128xf32>
    %5 = math.tanh %4 : vector<8x128xf32>
    %cst_4 = arith.constant 5.000000e-01 : f32
    %6 = vector.broadcast %cst_4 : f32 to vector<8x128xf32>
    %7 = arith.mulf %6, %5 : vector<8x128xf32>
    %cst_5 = arith.constant 5.000000e-01 : f32
    %8 = vector.broadcast %cst_5 : f32 to vector<8x128xf32>
    %9 = arith.addf %7, %8 : vector<8x128xf32>
    %10 = arith.truncf %9 : vector<8x128xf32> to vector<8x128xbf16>
    %c0_6 = arith.constant 0 : index
    %c0_7 = arith.constant 0 : index
    %11 = vector.load %arg3[%c0_6, %c0_7] : memref<8x128xbf16, #tpu.memory_space<vmem>>, vector<8x128xbf16>
    tpu.vector_store %arg3[%c0_6, %c0_7], %10 {strides = array<i32>} : memref<8x128xbf16, #tpu.memory_space<vmem>>, vector<8x128xbf16>,
    return
  }
  func.func @transform_0(%arg0: i32) -> (i32, i32) {
    %c0_i32 = arith.constant 0 : i32
    %c0_i32_0 = arith.constant 0 : i32
    return %arg0, %c0_i32 : i32, i32
  }
  func.func @transform_1(%arg0: i32) -> (i32, i32) {
    %c0_i32 = arith.constant 0 : i32
    %c0_i32_0 = arith.constant 0 : i32
    %c0_i32_1 = arith.constant 0 : i32
    return %c0_i32, %c0_i32_0 : i32, i32
  }
  func.func @transform_2(%arg0: i32) -> (i32, i32) {
    %c0_i32 = arith.constant 0 : i32
    %c0_i32_0 = arith.constant 0 : i32
    return %arg0, %c0_i32 : i32, i32
  }
}

</mosaic_0001>

<llo_original>
// kernel: discriminator_forward.5
$region0: #{discriminator_forward.5}
  #allocation0 [shape = 'u32[]', space=smem, size = 0x4, offset = 0x4, fixed_abs, tag = 'smem constant byte address 0x4 - core index']
  #allocation1 [shape = 'u32[72,128]{1,0:T(1,128)}', space=vmem, size = 0x9000, scoped, tag = 'internal scratch']
  %s0 = inlined_call_operand.vmem [shape: bf16[2048,48], index: 0, kind: input, shape index: {}]
  %s1 = inlined_call_operand.vmem [shape: bf16[48,128], index: 1, kind: input, shape index: {}]
  %s2 = inlined_call_operand.vmem [shape: bf16[2048,128], index: 2, kind: output, shape index: {}]
  %s3 = sld [smem:[#allocation0]]
  $region41: #{discriminator_forward.5} parent=0
    _
  %s5 = ssub.s32 1, %s3
  %s6 = scalar_select 0, %s5, %s3
  loop: start=0, step=1, limit=6
  $region2: #{discriminator_forward.5} parent=0 // loop_pre_header
    _
  $region3: #{discriminator_forward.5} parent=0 // loop_header
    %s8 = sphi 0, %s12
    %p9 = scmp.ge.s32.totalorder %s8, 6
    %s18 = sphi 0, %s20
    %s21 = sphi 0, %s18
    %s22 = sphi 0, %s21
    %s38 = sphi 0, %s22
    %s42 = sphi 0, %s42
    %s44 = sphi 0, %s42
    %s45 = sphi 0, %s44
    %s59 = sphi 0, %s45
    %s65 = sphi 0, %s67
    %s68 = sphi 0, %s65
    %s69 = sphi 0, %s68
    %s85 = sphi 0, %s69
  $region4: #{discriminator_forward.5} parent=0 // loop_header_branch
    %11 = sbr.rel (%p9) target = $region8
  $region5: #{discriminator_forward.5} parent=0 // loop_body
    %s13 = ssub.s32 %s8, 1
    %s14 = ssub.s32 %s8, 2
    %s15 = sadd.s32 %s8, 1
    %s16 = ssub.s32 %s8, %s15
    %p17 = scmp.eq.s32.totalorder %s16, 0
    %s19 = sadd.s32 %s18, 1
    %s20 = scalar_select %p17, %s18, %s19
    %p23 = pneg %p17
    %p24 = scmp.eq.s32.totalorder %s8, 3
    %p25 = por %p23, %p24
    %p26 = scmp.ne.s32.totalorder %s18, %s21
    %p27 = scmp.eq.s32.totalorder %s8, 0
    %p28 = por %p26, %p27
    %p29 = scmp.ne.s32.totalorder %s18, %s21
    %p30 = scmp.eq.s32.totalorder %s13, 3
    %p31 = por %p29, %p30
    %p32 = scmp.ne.s32.totalorder %s21, %s22
    %p33 = scmp.eq.s32.totalorder %s13, 0
    %p34 = por %p32, %p33
    %p35 = scmp.ne.s32.totalorder %s21, %s22
    %p36 = scmp.eq.s32.totalorder %s14, 3
    %p37 = por %p35, %p36
    %p39 = scmp.ne.s32.totalorder %s22, %s38
    %p40 = scmp.eq.s32.totalorder %s14, 0
    %p41 = por %p39, %p40
    %s43 = sadd.s32 %s42, 1
    %p46 = scmp.eq.s32.totalorder %s8, 3
    %p47 = scmp.ne.s32.totalorder %s42, %s44
    %p48 = scmp.eq.s32.totalorder %s8, 0
    %p49 = por %p47, %p48
    %p50 = scmp.ne.s32.totalorder %s42, %s44
    %p51 = scmp.eq.s32.totalorder %s13, 3
    %p52 = por %p50, %p51
    %p53 = scmp.ne.s32.totalorder %s44, %s45
    %p54 = scmp.eq.s32.totalorder %s13, 0
    %p55 = por %p53, %p54
    %p56 = scmp.ne.s32.totalorder %s44, %s45
    %p57 = scmp.eq.s32.totalorder %s14, 3
    %p58 = por %p56, %p57
    %p60 = scmp.ne.s32.totalorder %s45, %s59
    %p61 = scmp.eq.s32.totalorder %s14, 0
    %p62 = por %p60, %p61
    %s63 = ssub.s32 %s8, %s15
    %p64 = scmp.eq.s32.totalorder %s63, 0
    %s66 = sadd.s32 %s65, 1
    %s67 = scalar_select %p64, %s65, %s66
    %p70 = pneg %p64
    %p71 = scmp.eq.s32.totalorder %s8, 3
    %p72 = por %p70, %p71
    %p73 = scmp.ne.s32.totalorder %s65, %s68
    %p74 = scmp.eq.s32.totalorder %s8, 0
    %p75 = por %p73, %p74
    %p76 = scmp.ne.s32.totalorder %s65, %s68
    %p77 = scmp.eq.s32.totalorder %s13, 3
    %p78 = por %p76, %p77
    %p79 = scmp.ne.s32.totalorder %s68, %s69
    %p80 = scmp.eq.s32.totalorder %s13, 0
    %p81 = por %p79, %p80
    %p82 = scmp.ne.s32.totalorder %s68, %s69
    %p83 = scmp.eq.s32.totalorder %s14, 3
    %p84 = por %p82, %p83
    %p86 = scmp.ne.s32.totalorder %s69, %s85
    %p87 = scmp.eq.s32.totalorder %s14, 0
    %p88 = por %p86, %p87
    %p89 = scmp.le.s32.totalorder 1, %s8
    %p90 = scmp.lt.s32.totalorder %s8, 5
    %p91 = pnand %p89, %p90
    %p92 = pneg %p91
    // Predicated region
    $region9: #{discriminator_forward.5} parent=5 // pred_check
      _
    $region10: #{discriminator_forward.5} parent=5 // pred_check_branch
      %94 = sbr.rel (%p91) target = $region12
    $region11: #{discriminator_forward.5} parent=5 // pred_region
      %s95 = ssub.s32 %s8, 1
      // Predicated region
      $region13: #{discriminator_forward.5} parent=11 // pred_check
        %p96 = pneg %p55
      $region14: #{discriminator_forward.5} parent=11 // pred_check_branch
        %98 = sbr.rel (%p96) target = $region16
      $region15: #{discriminator_forward.5} parent=11 // pred_region
        _
      $region16: #{discriminator_forward.5} parent=11 // pred_fallthru
        _
    $region12: #{discriminator_forward.5} parent=5 // pred_fallthru
      _
    %p99 = scmp.lt.s32.totalorder %s8, 4
    // Predicated region
    $region17: #{discriminator_forward.5} parent=5 // pred_check
      %p100 = pneg %p99
    $region18: #{discriminator_forward.5} parent=5 // pred_check_branch
      %102 = sbr.rel (%p100) target = $region20
    $region19: #{discriminator_forward.5} parent=5 // pred_region
      // Predicated region
      $region21: #{discriminator_forward.5} parent=19 // pred_check
        %p103 = pneg %p28
      $region22: #{discriminator_forward.5} parent=19 // pred_check_branch
        %105 = sbr.rel (%p103) target = $region24
      $region23: #{discriminator_forward.5} parent=19 // pred_region
        %s106 = smul.u32 64, %s8
        %p107 = scmp.lt.s32.totalorder %s106, 255
        %s108 = scalar_select %p107, %s106, 255
        %s109 = smul.addr %s108, 4
        %s110 = scalar_lea.vmem %s0, %s109
        %s111 = smul.u32 64, %s8
      $region24: #{discriminator_forward.5} parent=19 // pred_fallthru
        _
    $region20: #{discriminator_forward.5} parent=5 // pred_fallthru
      _
    %p112 = scmp.le.s32.totalorder 1, %s8
    %p113 = scmp.lt.s32.totalorder %s8, 5
    %p114 = pnand %p112, %p113
    %p115 = pneg %p114
    // Predicated region
    $region25: #{discriminator_forward.5} parent=5 // pred_check
      _
    $region26: #{discriminator_forward.5} parent=5 // pred_check_branch
      %117 = sbr.rel (%p114) target = $region28
    $region27: #{discriminator_forward.5} parent=5 // pred_region
      %s118 = ssub.s32 %s8, 1
      %s119 = smul.u32 64, %s13
      %p120 = scmp.lt.s32.totalorder %s119, 255
      %s121 = scalar_select %p120, %s119, 255
      %s122 = smul.addr %s121, 4
      %s123 = scalar_lea.vmem %s0, %s122
      %p124 = pneg %p34
      %p125 = pneg %p31
      %p126 = pneg %p55
      %p127 = pneg %p52
      %p128 = pneg %p81
      %p129 = pneg %p78
      %s130 = smul.u32 64, %s13
      %p131 = scmp.lt.s32.totalorder %s130, 255
      %s132 = scalar_select %p131, %s130, 255
      %s133 = smul.addr %s132, 4
      %s134 = scalar_lea.vmem %s2, %s133
      %s135 = smul.u32 64, %s13
      %p136 = scmp.lt.s32.totalorder %s135, 255
      %s137 = scalar_select %p136, %s135, 255
      %s138 = smul.addr %s137, 4
      %s139 = scalar_lea.vmem %s0, %s138
      %s140 = smul.u32 64, %s13
      %s141 = smul.u32 64, %s13
      %p142 = scmp.lt.s32.totalorder %s141, 255
      %s143 = scalar_select %p142, %s141, 255
      %s144 = smul.addr %s143, 4
      %s145 = scalar_lea.vmem %s2, %s144
      %s146 = smul.u32 64, %s13
      %v148 = vld [vmem:[%s139] sm:$0xf]
      %v149 = vld [vmem:[%s139 + $0x4] sm:$0xf]
      %v150 = vld [vmem:[%s139 + $0x8] sm:$0xf]
      %v151 = vld [vmem:[%s139 + $0xc] sm:$0xf]
      %v152 = vld [vmem:[%s139 + $0x10] sm:$0xf]
      %v153 = vld [vmem:[%s139 + $0x14] sm:$0xf]
      %v154 = vld [vmem:[%s139 + $0x18] sm:$0xf]
      %v155 = vld [vmem:[%s139 + $0x1c] sm:$0xf]
      %v156 = vld [vmem:[%s139 + $0x20] sm:$0xf]
      %v157 = vld [vmem:[%s139 + $0x24] sm:$0xf]
      %v158 = vld [vmem:[%s139 + $0x28] sm:$0xf]
      %v159 = vld [vmem:[%s139 + $0x2c] sm:$0xf]
      %v160 = vld [vmem:[%s139 + $0x30] sm:$0xf]
      %v161 = vld [vmem:[%s139 + $0x34] sm:$0xf]
      %v162 = vld [vmem:[%s139 + $0x38] sm:$0xf]
      %v163 = vld [vmem:[%s139 + $0x3c] sm:$0xf]
      %v164 = vld [vmem:[%s139 + $0x40] sm:$0xf]
      %v165 = vld [vmem:[%s139 + $0x44] sm:$0xf]
      %v166 = vld [vmem:[%s139 + $0x48] sm:$0xf]
      %v167 = vld [vmem:[%s139 + $0x4c] sm:$0xf]
      %v168 = vld [vmem:[%s139 + $0x50] sm:$0xf]
      %v169 = vld [vmem:[%s139 + $0x54] sm:$0xf]
      %v170 = vld [vmem:[%s139 + $0x58] sm:$0xf]
      %v171 = vld [vmem:[%s139 + $0x5c] sm:$0xf]
      %v172 = vld [vmem:[%s139 + $0x60] sm:$0xf]
      %v173 = vld [vmem:[%s139 + $0x64] sm:$0xf]
      %v174 = vld [vmem:[%s139 + $0x68] sm:$0xf]
      %v175 = vld [vmem:[%s139 + $0x6c] sm:$0xf]
      %v176 = vld [vmem:[%s139 + $0x70] sm:$0xf]
      %v177 = vld [vmem:[%s139 + $0x74] sm:$0xf]
      %v178 = vld [vmem:[%s139 + $0x78] sm:$0xf]
      %v179 = vld [vmem:[%s139 + $0x7c] sm:$0xf]
      %v180 = vld [vmem:[%s139 + $0x80] sm:$0xf]
      %v181 = vld [vmem:[%s139 + $0x84] sm:$0xf]
      %v182 = vld [vmem:[%s139 + $0x88] sm:$0xf]
      %v183 = vld [vmem:[%s139 + $0x8c] sm:$0xf]
      %v184 = vld [vmem:[%s139 + $0x90] sm:$0xf]
      %v185 = vld [vmem:[%s139 + $0x94] sm:$0xf]
      %v186 = vld [vmem:[%s139 + $0x98] sm:$0xf]
      %v187 = vld [vmem:[%s139 + $0x9c] sm:$0xf]
      %v188 = vld [vmem:[%s139 + $0xa0] sm:$0xf]
      %v189 = vld [vmem:[%s139 + $0xa4] sm:$0xf]
      %v190 = vld [vmem:[%s139 + $0xa8] sm:$0xf]
      %v191 = vld [vmem:[%s139 + $0xac] sm:$0xf]
      %v192 = vld [vmem:[%s139 + $0xb0] sm:$0xf]
      %v193 = vld [vmem:[%s139 + $0xb4] sm:$0xf]
      %v194 = vld [vmem:[%s139 + $0xb8] sm:$0xf]
      %v195 = vld [vmem:[%s139 + $0xbc] sm:$0xf]
      %v196 = vld [vmem:[%s139 + $0xc0] sm:$0xf]
      %v197 = vld [vmem:[%s139 + $0xc4] sm:$0xf]
      %v198 = vld [vmem:[%s139 + $0xc8] sm:$0xf]
      %v199 = vld [vmem:[%s139 + $0xcc] sm:$0xf]
      %v200 = vld [vmem:[%s139 + $0xd0] sm:$0xf]
      %v201 = vld [vmem:[%s139 + $0xd4] sm:$0xf]
      %v202 = vld [vmem:[%s139 + $0xd8] sm:$0xf]
      %v203 = vld [vmem:[%s139 + $0xdc] sm:$0xf]
      %v204 = vld [vmem:[%s139 + $0xe0] sm:$0xf]
      %v205 = vld [vmem:[%s139 + $0xe4] sm:$0xf]
      %v206 = vld [vmem:[%s139 + $0xe8] sm:$0xf]
      %v207 = vld [vmem:[%s139 + $0xec] sm:$0xf]
      %v208 = vld [vmem:[%s139 + $0xf0] sm:$0xf]
      %v209 = vld [vmem:[%s139 + $0xf4] sm:$0xf]
      %v210 = vld [vmem:[%s139 + $0xf8] sm:$0xf]
      %v211 = vld [vmem:[%s139 + $0xfc] sm:$0xf]
      %v212 = vld [vmem:[%s1] sm:$0xf]
      %v213 = vld [vmem:[%s1 + $0x4] sm:$0xf]
      %v214 = vld [vmem:[%s1 + $0x8] sm:$0xf]
      %v215 = vld [vmem:[%s1 + $0xc] sm:$0xf]
      %v216 = vld [vmem:[%s1 + $0x10] sm:$0xf]
      %v217 = vld [vmem:[%s1 + $0x14] sm:$0xf]
      %v282 = vunpack.c.l.b16 %v148
      %v283 = vunpack.c.l.b16 %v149
      %v284 = vunpack.c.l.b16 %v150
      %v285 = vunpack.c.l.b16 %v151
      %v286 = vunpack.c.l.b16 %v152
      %v287 = vunpack.c.l.b16 %v153
      %v288 = vunpack.c.l.b16 %v154
      %v289 = vunpack.c.l.b16 %v155
      %v290 = vunpack.c.l.b16 %v156
      %v291 = vunpack.c.l.b16 %v157
      %v292 = vunpack.c.l.b16 %v158
      %v293 = vunpack.c.l.b16 %v159
      %v294 = vunpack.c.l.b16 %v160
      %v295 = vunpack.c.l.b16 %v161
      %v296 = vunpack.c.l.b16 %v162
      %v297 = vunpack.c.l.b16 %v163
      %v298 = vunpack.c.l.b16 %v164
      %v299 = vunpack.c.l.b16 %v165
      %v300 = vunpack.c.l.b16 %v166
      %v301 = vunpack.c.l.b16 %v167
      %v302 = vunpack.c.l.b16 %v168
      %v303 = vunpack.c.l.b16 %v169
      %v304 = vunpack.c.l.b16 %v170
      %v305 = vunpack.c.l.b16 %v171
      %v306 = vunpack.c.l.b16 %v172
      %v307 = vunpack.c.l.b16 %v173
      %v308 = vunpack.c.l.b16 %v174
      %v309 = vunpack.c.l.b16 %v175
      %v310 = vunpack.c.l.b16 %v176
      %v311 = vunpack.c.l.b16 %v177
      %v312 = vunpack.c.l.b16 %v178
      %v313 = vunpack.c.l.b16 %v179
      %v314 = vunpack.c.l.b16 %v180
      %v315 = vunpack.c.l.b16 %v181
      %v316 = vunpack.c.l.b16 %v182
      %v317 = vunpack.c.l.b16 %v183
      %v318 = vunpack.c.l.b16 %v184
      %v319 = vunpack.c.l.b16 %v185
      %v320 = vunpack.c.l.b16 %v186
      %v321 = vunpack.c.l.b16 %v187
      %v322 = vunpack.c.l.b16 %v188
      %v323 = vunpack.c.l.b16 %v189
      %v324 = vunpack.c.l.b16 %v190
      %v325 = vunpack.c.l.b16 %v191
      %v326 = vunpack.c.l.b16 %v192
      %v327 = vunpack.c.l.b16 %v193
      %v328 = vunpack.c.l.b16 %v194
      %v329 = vunpack.c.l.b16 %v195
      %v330 = vunpack.c.l.b16 %v196
      %v331 = vunpack.c.l.b16 %v197
      %v332 = vunpack.c.l.b16 %v198
      %v333 = vunpack.c.l.b16 %v199
      %v334 = vunpack.c.l.b16 %v200
      %v335 = vunpack.c.l.b16 %v201
      %v336 = vunpack.c.l.b16 %v202
      %v337 = vunpack.c.l.b16 %v203
      %v338 = vunpack.c.l.b16 %v204
      %v339 = vunpack.c.l.b16 %v205
      %v340 = vunpack.c.l.b16 %v206
      %v341 = vunpack.c.l.b16 %v207
      %v342 = vunpack.c.l.b16 %v208
      %v343 = vunpack.c.l.b16 %v209
      %v344 = vunpack.c.l.b16 %v210
      %v345 = vunpack.c.l.b16 %v211
      %v346 = vpack.c.b16 %v283, %v282
      %v347 = vpack.c.b16 %v285, %v284
      %v348 = vpack.c.b16 %v287, %v286
      %v349 = vpack.c.b16 %v289, %v288
      %v350 = vpack.c.b16 %v291, %v290
      %v351 = vpack.c.b16 %v293, %v292
      %v352 = vpack.c.b16 %v295, %v294
      %v353 = vpack.c.b16 %v297, %v296
      %v354 = vpack.c.b16 %v299, %v298
      %v355 = vpack.c.b16 %v301, %v300
      %v356 = vpack.c.b16 %v303, %v302
      %v357 = vpack.c.b16 %v305, %v304
      %v358 = vpack.c.b16 %v307, %v306
      %v359 = vpack.c.b16 %v309, %v308
      %v360 = vpack.c.b16 %v311, %v310
      %v361 = vpack.c.b16 %v313, %v312
      %v362 = vpack.c.b16 %v315, %v314
      %v363 = vpack.c.b16 %v317, %v316
      %v364 = vpack.c.b16 %v319, %v318
      %v365 = vpack.c.b16 %v321, %v320
      %v366 = vpack.c.b16 %v323, %v322
      %v367 = vpack.c.b16 %v325, %v324
      %v368 = vpack.c.b16 %v327, %v326
      %v369 = vpack.c.b16 %v329, %v328
      %v370 = vpack.c.b16 %v331, %v330
      %v371 = vpack.c.b16 %v333, %v332
      %v372 = vpack.c.b16 %v335, %v334
      %v373 = vpack.c.b16 %v337, %v336
      %v374 = vpack.c.b16 %v339, %v338
      %v375 = vpack.c.b16 %v341, %v340
      %v376 = vpack.c.b16 %v343, %v342
      %v377 = vpack.c.b16 %v345, %v344
      %v384 = vunpack.c.l.b16 %v212
      %v385 = vunpack.c.l.b16 %v213
      %v386 = vunpack.c.l.b16 %v214
      %v387 = vunpack.c.l.b16 %v215
      %v388 = vunpack.c.l.b16 %v216
      %v389 = vunpack.c.l.b16 %v217
      %v390 = vpack.c.b16 %v385, %v384
      %v391 = vpack.c.b16 %v387, %v386
      %v392 = vpack.c.b16 %v389, %v388
      %vm396 = vcmask 392192
      %v398 = vsel %vm396, %v346, 0
      %v401 = vsel %vm396, %v347, 0
      %v404 = vsel %vm396, %v348, 0
      %v407 = vsel %vm396, %v349, 0
      %v410 = vsel %vm396, %v350, 0
      %v413 = vsel %vm396, %v351, 0
      %v416 = vsel %vm396, %v352, 0
      %v419 = vsel %vm396, %v353, 0
      %v422 = vsel %vm396, %v354, 0
      %v425 = vsel %vm396, %v355, 0
      %v428 = vsel %vm396, %v356, 0
      %v431 = vsel %vm396, %v357, 0
      %v434 = vsel %vm396, %v358, 0
      %v437 = vsel %vm396, %v359, 0
      %v440 = vsel %vm396, %v360, 0
      %v443 = vsel %vm396, %v361, 0
      %v446 = vsel %vm396, %v362, 0
      %v449 = vsel %vm396, %v363, 0
      %v452 = vsel %vm396, %v364, 0
      %v455 = vsel %vm396, %v365, 0
      %v458 = vsel %vm396, %v366, 0
      %v461 = vsel %vm396, %v367, 0
      %v464 = vsel %vm396, %v368, 0
      %v467 = vsel %vm396, %v369, 0
      %v470 = vsel %vm396, %v370, 0
      %v473 = vsel %vm396, %v371, 0
      %v476 = vsel %vm396, %v372, 0
      %v479 = vsel %vm396, %v373, 0
      %v482 = vsel %vm396, %v374, 0
      %v485 = vsel %vm396, %v375, 0
      %v488 = vsel %vm396, %v376, 0
      %v491 = vsel %vm396, %v377, 0
      %493 = vmatpush.bf16.msra.mxu0 0
      %494 = vmatpush.bf16.msra.mxu0 0
      %495 = vmatpush.bf16.msra.mxu0 0
      %496 = vmatpush.bf16.msra.mxu0 0
      %497 = vmatpush.bf16.msra.mxu0 0
      %498 = vmatpush.bf16.msra.mxu0 %v392
      %499 = vmatpush.bf16.msra.mxu0 %v391
      %500 = vmatpush.bf16.msra.mxu0 %v390
      %501 = vmatmul.bf16.gmra.mxu0 %v398
      %v502 = vpop.f32.mrf.mxu0
      %v503 = vadd.f32 0.0, %v502
      %v504 = vpop.f32.mrf.mxu0
      %v505 = vadd.f32 0.0, %v504
      %506 = vmatmul.bf16.gmra.mxu0 %v401
      %v507 = vpop.f32.mrf.mxu0
      %v508 = vadd.f32 0.0, %v507
      %v509 = vpop.f32.mrf.mxu0
      %v510 = vadd.f32 0.0, %v509
      %511 = vmatmul.bf16.gmra.mxu0 %v404
      %v512 = vpop.f32.mrf.mxu0
      %v513 = vadd.f32 0.0, %v512
      %v514 = vpop.f32.mrf.mxu0
      %v515 = vadd.f32 0.0, %v514
      %516 = vmatmul.bf16.gmra.mxu0 %v407
      %v517 = vpop.f32.mrf.mxu0
      %v518 = vadd.f32 0.0, %v517
      %v519 = vpop.f32.mrf.mxu0
      %v520 = vadd.f32 0.0, %v519
      %521 = vmatmul.bf16.gmra.mxu0 %v410
      %v522 = vpop.f32.mrf.mxu0
      %v523 = vadd.f32 0.0, %v522
      %v524 = vpop.f32.mrf.mxu0
      %v525 = vadd.f32 0.0, %v524
      %526 = vmatmul.bf16.gmra.mxu0 %v413
      %v527 = vpop.f32.mrf.mxu0
      %v528 = vadd.f32 0.0, %v527
      %v529 = vpop.f32.mrf.mxu0
      %v530 = vadd.f32 0.0, %v529
      %531 = vmatmul.bf16.gmra.mxu0 %v416
      %v532 = vpop.f32.mrf.mxu0
      %v533 = vadd.f32 0.0, %v532
      %v534 = vpop.f32.mrf.mxu0
      %v535 = vadd.f32 0.0, %v534
      %536 = vmatmul.bf16.gmra.mxu0 %v419
      %v537 = vpop.f32.mrf.mxu0
      %v538 = vadd.f32 0.0, %v537
      %v539 = vpop.f32.mrf.mxu0
      %v540 = vadd.f32 0.0, %v539
      %541 = vmatmul.bf16.gmra.mxu0 %v422
      %v542 = vpop.f32.mrf.mxu0
      %v543 = vadd.f32 0.0, %v542
      %v544 = vpop.f32.mrf.mxu0
      %v545 = vadd.f32 0.0, %v544
      %546 = vmatmul.bf16.gmra.mxu0 %v425
      %v547 = vpop.f32.mrf.mxu0
      %v548 = vadd.f32 0.0, %v547
      %v549 = vpop.f32.mrf.mxu0
      %v550 = vadd.f32 0.0, %v549
      %551 = vmatmul.bf16.gmra.mxu0 %v428
      %v552 = vpop.f32.mrf.mxu0
      %v553 = vadd.f32 0.0, %v552
      %v554 = vpop.f32.mrf.mxu0
      %v555 = vadd.f32 0.0, %v554
      %556 = vmatmul.bf16.gmra.mxu0 %v431
      %v557 = vpop.f32.mrf.mxu0
      %v558 = vadd.f32 0.0, %v557
      %v559 = vpop.f32.mrf.mxu0
      %v560 = vadd.f32 0.0, %v559
      %561 = vmatmul.bf16.gmra.mxu0 %v434
      %v562 = vpop.f32.mrf.mxu0
      %v563 = vadd.f32 0.0, %v562
      %v564 = vpop.f32.mrf.mxu0
      %v565 = vadd.f32 0.0, %v564
      %566 = vmatmul.bf16.gmra.mxu0 %v437
      %v567 = vpop.f32.mrf.mxu0
      %v568 = vadd.f32 0.0, %v567
      %v569 = vpop.f32.mrf.mxu0
      %v570 = vadd.f32 0.0, %v569
      %571 = vmatmul.bf16.gmra.mxu0 %v440
      %v572 = vpop.f32.mrf.mxu0
      %v573 = vadd.f32 0.0, %v572
      %v574 = vpop.f32.mrf.mxu0
      %v575 = vadd.f32 0.0, %v574
      %576 = vmatmul.bf16.gmra.mxu0 %v443
      %v577 = vpop.f32.mrf.mxu0
      %v578 = vadd.f32 0.0, %v577
      %v579 = vpop.f32.mrf.mxu0
      %v580 = vadd.f32 0.0, %v579
      %581 = vmatmul.bf16.gmra.mxu0 %v446
      %v582 = vpop.f32.mrf.mxu0
      %v583 = vadd.f32 0.0, %v582
      %v584 = vpop.f32.mrf.mxu0
      %v585 = vadd.f32 0.0, %v584
      %586 = vmatmul.bf16.gmra.mxu0 %v449
      %v587 = vpop.f32.mrf.mxu0
      %v588 = vadd.f32 0.0, %v587
      %v589 = vpop.f32.mrf.mxu0
      %v590 = vadd.f32 0.0, %v589
      %591 = vmatmul.bf16.gmra.mxu0 %v452
      %v592 = vpop.f32.mrf.mxu0
      %v593 = vadd.f32 0.0, %v592
      %v594 = vpop.f32.mrf.mxu0
      %v595 = vadd.f32 0.0, %v594
      %596 = vmatmul.bf16.gmra.mxu0 %v455
      %v597 = vpop.f32.mrf.mxu0
      %v598 = vadd.f32 0.0, %v597
      %v599 = vpop.f32.mrf.mxu0
      %v600 = vadd.f32 0.0, %v599
      %601 = vmatmul.bf16.gmra.mxu0 %v458
      %v602 = vpop.f32.mrf.mxu0
      %v603 = vadd.f32 0.0, %v602
      %v604 = vpop.f32.mrf.mxu0
      %v605 = vadd.f32 0.0, %v604
      %606 = vmatmul.bf16.gmra.mxu0 %v461
      %v607 = vpop.f32.mrf.mxu0
      %v608 = vadd.f32 0.0, %v607
      %v609 = vpop.f32.mrf.mxu0
      %v610 = vadd.f32 0.0, %v609
      %611 = vmatmul.bf16.gmra.mxu0 %v464
      %v612 = vpop.f32.mrf.mxu0
      %v613 = vadd.f32 0.0, %v612
      %v614 = vpop.f32.mrf.mxu0
      %v615 = vadd.f32 0.0, %v614
      %616 = vmatmul.bf16.gmra.mxu0 %v467
      %v617 = vpop.f32.mrf.mxu0
      %v618 = vadd.f32 0.0, %v617
      %v619 = vpop.f32.mrf.mxu0
      %v620 = vadd.f32 0.0, %v619
      %621 = vmatmul.bf16.gmra.mxu0 %v470
      %v622 = vpop.f32.mrf.mxu0
      %v623 = vadd.f32 0.0, %v622
      %v624 = vpop.f32.mrf.mxu0
      %v625 = vadd.f32 0.0, %v624
      %626 = vmatmul.bf16.gmra.mxu0 %v473
      %v627 = vpop.f32.mrf.mxu0
      %v628 = vadd.f32 0.0, %v627
      %v629 = vpop.f32.mrf.mxu0
      %v630 = vadd.f32 0.0, %v629
      %631 = vmatmul.bf16.gmra.mxu0 %v476
      %v632 = vpop.f32.mrf.mxu0
      %v633 = vadd.f32 0.0, %v632
      %v634 = vpop.f32.mrf.mxu0
      %v635 = vadd.f32 0.0, %v634
      %636 = vmatmul.bf16.gmra.mxu0 %v479
      %v637 = vpop.f32.mrf.mxu0
      %v638 = vadd.f32 0.0, %v637
      %v639 = vpop.f32.mrf.mxu0
      %v640 = vadd.f32 0.0, %v639
      %641 = vmatmul.bf16.gmra.mxu0 %v482
      %v642 = vpop.f32.mrf.mxu0
      %v643 = vadd.f32 0.0, %v642
      %v644 = vpop.f32.mrf.mxu0
      %v645 = vadd.f32 0.0, %v644
      %646 = vmatmul.bf16.gmra.mxu0 %v485
      %v647 = vpop.f32.mrf.mxu0
      %v648 = vadd.f32 0.0, %v647
      %v649 = vpop.f32.mrf.mxu0
      %v650 = vadd.f32 0.0, %v649
      %651 = vmatmul.bf16.gmra.mxu0 %v488
      %v652 = vpop.f32.mrf.mxu0
      %v653 = vadd.f32 0.0, %v652
      %v654 = vpop.f32.mrf.mxu0
      %v655 = vadd.f32 0.0, %v654
      %656 = vmatmul.bf16.gmra.mxu0 %v491
      %v657 = vpop.f32.mrf.mxu0
      %v658 = vadd.f32 0.0, %v657
      %v659 = vpop.f32.mrf.mxu0
      %v660 = vadd.f32 0.0, %v659
      %661 = vdwg.mxu0
      %vm662 = vcmp.ge.f32.partialorder %v503, 0.0
      %vm663 = vcmp.ge.f32.partialorder %v505, 0.0
      %vm664 = vcmp.ge.f32.partialorder %v508, 0.0
      %vm665 = vcmp.ge.f32.partialorder %v510, 0.0
      %vm666 = vcmp.ge.f32.partialorder %v513, 0.0
      %vm667 = vcmp.ge.f32.partialorder %v515, 0.0
      %vm668 = vcmp.ge.f32.partialorder %v518, 0.0
      %vm669 = vcmp.ge.f32.partialorder %v520, 0.0
      %vm670 = vcmp.ge.f32.partialorder %v523, 0.0
      %vm671 = vcmp.ge.f32.partialorder %v525, 0.0
      %vm672 = vcmp.ge.f32.partialorder %v528, 0.0
      %vm673 = vcmp.ge.f32.partialorder %v530, 0.0
      %vm674 = vcmp.ge.f32.partialorder %v533, 0.0
      %vm675 = vcmp.ge.f32.partialorder %v535, 0.0
      %vm676 = vcmp.ge.f32.partialorder %v538, 0.0
      %vm677 = vcmp.ge.f32.partialorder %v540, 0.0
      %vm678 = vcmp.ge.f32.partialorder %v543, 0.0
      %vm679 = vcmp.ge.f32.partialorder %v545, 0.0
      %vm680 = vcmp.ge.f32.partialorder %v548, 0.0
      %vm681 = vcmp.ge.f32.partialorder %v550, 0.0
      %vm682 = vcmp.ge.f32.partialorder %v553, 0.0
      %vm683 = vcmp.ge.f32.partialorder %v555, 0.0
      %vm684 = vcmp.ge.f32.partialorder %v558, 0.0
      %vm685 = vcmp.ge.f32.partialorder %v560, 0.0
      %vm686 = vcmp.ge.f32.partialorder %v563, 0.0
      %vm687 = vcmp.ge.f32.partialorder %v565, 0.0
      %vm688 = vcmp.ge.f32.partialorder %v568, 0.0
      %vm689 = vcmp.ge.f32.partialorder %v570, 0.0
      %vm690 = vcmp.ge.f32.partialorder %v573, 0.0
      %vm691 = vcmp.ge.f32.partialorder %v575, 0.0
      %vm692 = vcmp.ge.f32.partialorder %v578, 0.0
      %vm693 = vcmp.ge.f32.partialorder %v580, 0.0
      %vm694 = vcmp.ge.f32.partialorder %v583, 0.0
      %vm695 = vcmp.ge.f32.partialorder %v585, 0.0
      %vm696 = vcmp.ge.f32.partialorder %v588, 0.0
      %vm697 = vcmp.ge.f32.partialorder %v590, 0.0
      %vm698 = vcmp.ge.f32.partialorder %v593, 0.0
      %vm699 = vcmp.ge.f32.partialorder %v595, 0.0
      %vm700 = vcmp.ge.f32.partialorder %v598, 0.0
      %vm701 = vcmp.ge.f32.partialorder %v600, 0.0
      %vm702 = vcmp.ge.f32.partialorder %v603, 0.0
      %vm703 = vcmp.ge.f32.partialorder %v605, 0.0
      %vm704 = vcmp.ge.f32.partialorder %v608, 0.0
      %vm705 = vcmp.ge.f32.partialorder %v610, 0.0
      %vm706 = vcmp.ge.f32.partialorder %v613, 0.0
      %vm707 = vcmp.ge.f32.partialorder %v615, 0.0
      %vm708 = vcmp.ge.f32.partialorder %v618, 0.0
      %vm709 = vcmp.ge.f32.partialorder %v620, 0.0
      %vm710 = vcmp.ge.f32.partialorder %v623, 0.0
      %vm711 = vcmp.ge.f32.partialorder %v625, 0.0
      %vm712 = vcmp.ge.f32.partialorder %v628, 0.0
      %vm713 = vcmp.ge.f32.partialorder %v630, 0.0
      %vm714 = vcmp.ge.f32.partialorder %v633, 0.0
      %vm715 = vcmp.ge.f32.partialorder %v635, 0.0
      %vm716 = vcmp.ge.f32.partialorder %v638, 0.0
      %vm717 = vcmp.ge.f32.partialorder %v640, 0.0
      %vm718 = vcmp.ge.f32.partialorder %v643, 0.0
      %vm719 = vcmp.ge.f32.partialorder %v645, 0.0
      %vm720 = vcmp.ge.f32.partialorder %v648, 0.0
      %vm721 = vcmp.ge.f32.partialorder %v650, 0.0
      %vm722 = vcmp.ge.f32.partialorder %v653, 0.0
      %vm723 = vcmp.ge.f32.partialorder %v655, 0.0
      %vm724 = vcmp.ge.f32.partialorder %v658, 0.0
      %vm725 = vcmp.ge.f32.partialorder %v660, 0.0
      %v726 = vmul.f32 %v503, 0.2
      %v727 = vmul.f32 %v505, 0.2
      %v728 = vmul.f32 %v508, 0.2
      %v729 = vmul.f32 %v510, 0.2
      %v730 = vmul.f32 %v513, 0.2
      %v731 = vmul.f32 %v515, 0.2
      %v732 = vmul.f32 %v518, 0.2
      %v733 = vmul.f32 %v520, 0.2
      %v734 = vmul.f32 %v523, 0.2
      %v735 = vmul.f32 %v525, 0.2
      %v736 = vmul.f32 %v528, 0.2
      %v737 = vmul.f32 %v530, 0.2
      %v738 = vmul.f32 %v533, 0.2
      %v739 = vmul.f32 %v535, 0.2
      %v740 = vmul.f32 %v538, 0.2
      %v741 = vmul.f32 %v540, 0.2
      %v742 = vmul.f32 %v543, 0.2
      %v743 = vmul.f32 %v545, 0.2
      %v744 = vmul.f32 %v548, 0.2
      %v745 = vmul.f32 %v550, 0.2
      %v746 = vmul.f32 %v553, 0.2
      %v747 = vmul.f32 %v555, 0.2
      %v748 = vmul.f32 %v558, 0.2
      %v749 = vmul.f32 %v560, 0.2
      %v750 = vmul.f32 %v563, 0.2
      %v751 = vmul.f32 %v565, 0.2
      %v752 = vmul.f32 %v568, 0.2
      %v753 = vmul.f32 %v570, 0.2
      %v754 = vmul.f32 %v573, 0.2
      %v755 = vmul.f32 %v575, 0.2
      %v756 = vmul.f32 %v578, 0.2
      %v757 = vmul.f32 %v580, 0.2
      %v758 = vmul.f32 %v583, 0.2
      %v759 = vmul.f32 %v585, 0.2
      %v760 = vmul.f32 %v588, 0.2
      %v761 = vmul.f32 %v590, 0.2
      %v762 = vmul.f32 %v593, 0.2
      %v763 = vmul.f32 %v595, 0.2
      %v764 = vmul.f32 %v598, 0.2
      %v765 = vmul.f32 %v600, 0.2
      %v766 = vmul.f32 %v603, 0.2
      %v767 = vmul.f32 %v605, 0.2
      %v768 = vmul.f32 %v608, 0.2
      %v769 = vmul.f32 %v610, 0.2
      %v770 = vmul.f32 %v613, 0.2
      %v771 = vmul.f32 %v615, 0.2
      %v772 = vmul.f32 %v618, 0.2
      %v773 = vmul.f32 %v620, 0.2
      %v774 = vmul.f32 %v623, 0.2
      %v775 = vmul.f32 %v625, 0.2
      %v776 = vmul.f32 %v628, 0.2
      %v777 = vmul.f32 %v630, 0.2
      %v778 = vmul.f32 %v633, 0.2
      %v779 = vmul.f32 %v635, 0.2
      %v780 = vmul.f32 %v638, 0.2
      %v781 = vmul.f32 %v640, 0.2
      %v782 = vmul.f32 %v643, 0.2
      %v783 = vmul.f32 %v645, 0.2
      %v784 = vmul.f32 %v648, 0.2
      %v785 = vmul.f32 %v650, 0.2
      %v786 = vmul.f32 %v653, 0.2
      %v787 = vmul.f32 %v655, 0.2
      %v788 = vmul.f32 %v658, 0.2
      %v789 = vmul.f32 %v660, 0.2
      %v790 = vsel %vm662, %v503, %v726
      %v791 = vsel %vm663, %v505, %v727
      %v792 = vsel %vm664, %v508, %v728
      %v793 = vsel %vm665, %v510, %v729
      %v794 = vsel %vm666, %v513, %v730
      %v795 = vsel %vm667, %v515, %v731
      %v796 = vsel %vm668, %v518, %v732
      %v797 = vsel %vm669, %v520, %v733
      %v798 = vsel %vm670, %v523, %v734
      %v799 = vsel %vm671, %v525, %v735
      %v800 = vsel %vm672, %v528, %v736
      %v801 = vsel %vm673, %v530, %v737
      %v802 = vsel %vm674, %v533, %v738
      %v803 = vsel %vm675, %v535, %v739
      %v804 = vsel %vm676, %v538, %v740
      %v805 = vsel %vm677, %v540, %v741
      %v806 = vsel %vm678, %v543, %v742
      %v807 = vsel %vm679, %v545, %v743
      %v808 = vsel %vm680, %v548, %v744
      %v809 = vsel %vm681, %v550, %v745
      %v810 = vsel %vm682, %v553, %v746
      %v811 = vsel %vm683, %v555, %v747
      %v812 = vsel %vm684, %v558, %v748
      %v813 = vsel %vm685, %v560, %v749
      %v814 = vsel %vm686, %v563, %v750
      %v815 = vsel %vm687, %v565, %v751
      %v816 = vsel %vm688, %v568, %v752
      %v817 = vsel %vm689, %v570, %v753
      %v818 = vsel %vm690, %v573, %v754
      %v819 = vsel %vm691, %v575, %v755
      %v820 = vsel %vm692, %v578, %v756
      %v821 = vsel %vm693, %v580, %v757
      %v822 = vsel %vm694, %v583, %v758
      %v823 = vsel %vm695, %v585, %v759
      %v824 = vsel %vm696, %v588, %v760
      %v825 = vsel %vm697, %v590, %v761
      %v826 = vsel %vm698, %v593, %v762
      %v827 = vsel %vm699, %v595, %v763
      %v828 = vsel %vm700, %v598, %v764
      %v829 = vsel %vm701, %v600, %v765
      %v830 = vsel %vm702, %v603, %v766
      %v831 = vsel %vm703, %v605, %v767
      %v832 = vsel %vm704, %v608, %v768
      %v833 = vsel %vm705, %v610, %v769
      %v834 = vsel %vm706, %v613, %v770
      %v835 = vsel %vm707, %v615, %v771
      %v836 = vsel %vm708, %v618, %v772
      %v837 = vsel %vm709, %v620, %v773
      %v838 = vsel %vm710, %v623, %v774
      %v839 = vsel %vm711, %v625, %v775
      %v840 = vsel %vm712, %v628, %v776
      %v841 = vsel %vm713, %v630, %v777
      %v842 = vsel %vm714, %v633, %v778
      %v843 = vsel %vm715, %v635, %v779
      %v844 = vsel %vm716, %v638, %v780
      %v845 = vsel %vm717, %v640, %v781
      %v846 = vsel %vm718, %v643, %v782
      %v847 = vsel %vm719, %v645, %v783
      %v848 = vsel %vm720, %v648, %v784
      %v849 = vsel %vm721, %v650, %v785
      %v850 = vsel %vm722, %v653, %v786
      %v851 = vsel %vm723, %v655, %v787
      %v852 = vsel %vm724, %v658, %v788
      %v853 = vsel %vm725, %v660, %v789
      %v854 = vpack.c.bf16 %v790, %v790
      %v855 = vpack.c.bf16 %v791, %v791
      %v856 = vpack.c.bf16 %v792, %v792
      %v857 = vpack.c.bf16 %v793, %v793
      %v858 = vpack.c.bf16 %v794, %v794
      %v859 = vpack.c.bf16 %v795, %v795
      %v860 = vpack.c.bf16 %v796, %v796
      %v861 = vpack.c.bf16 %v797, %v797
      %v862 = vpack.c.bf16 %v798, %v798
      %v863 = vpack.c.bf16 %v799, %v799
      %v864 = vpack.c.bf16 %v800, %v800
      %v865 = vpack.c.bf16 %v801, %v801
      %v866 = vpack.c.bf16 %v802, %v802
      %v867 = vpack.c.bf16 %v803, %v803
      %v868 = vpack.c.bf16 %v804, %v804
      %v869 = vpack.c.bf16 %v805, %v805
      %v870 = vpack.c.bf16 %v806, %v806
      %v871 = vpack.c.bf16 %v807, %v807
      %v872 = vpack.c.bf16 %v808, %v808
      %v873 = vpack.c.bf16 %v809, %v809
      %v874 = vpack.c.bf16 %v810, %v810
      %v875 = vpack.c.bf16 %v811, %v811
      %v876 = vpack.c.bf16 %v812, %v812
      %v877 = vpack.c.bf16 %v813, %v813
      %v878 = vpack.c.bf16 %v814, %v814
      %v879 = vpack.c.bf16 %v815, %v815
      %v880 = vpack.c.bf16 %v816, %v816
      %v881 = vpack.c.bf16 %v817, %v817
      %v882 = vpack.c.bf16 %v818, %v818
      %v883 = vpack.c.bf16 %v819, %v819
      %v884 = vpack.c.bf16 %v820, %v820
      %v885 = vpack.c.bf16 %v821, %v821
      %v886 = vpack.c.bf16 %v822, %v822
      %v887 = vpack.c.bf16 %v823, %v823
      %v888 = vpack.c.bf16 %v824, %v824
      %v889 = vpack.c.bf16 %v825, %v825
      %v890 = vpack.c.bf16 %v826, %v826
      %v891 = vpack.c.bf16 %v827, %v827
      %v892 = vpack.c.bf16 %v828, %v828
      %v893 = vpack.c.bf16 %v829, %v829
      %v894 = vpack.c.bf16 %v830, %v830
      %v895 = vpack.c.bf16 %v831, %v831
      %v896 = vpack.c.bf16 %v832, %v832
      %v897 = vpack.c.bf16 %v833, %v833
      %v898 = vpack.c.bf16 %v834, %v834
      %v899 = vpack.c.bf16 %v835, %v835
      %v900 = vpack.c.bf16 %v836, %v836
      %v901 = vpack.c.bf16 %v837, %v837
      %v902 = vpack.c.bf16 %v838, %v838
      %v903 = vpack.c.bf16 %v839, %v839
      %v904 = vpack.c.bf16 %v840, %v840
      %v905 = vpack.c.bf16 %v841, %v841
      %v906 = vpack.c.bf16 %v842, %v842
      %v907 = vpack.c.bf16 %v843, %v843
      %v908 = vpack.c.bf16 %v844, %v844
      %v909 = vpack.c.bf16 %v845, %v845
      %v910 = vpack.c.bf16 %v846, %v846
      %v911 = vpack.c.bf16 %v847, %v847
      %v912 = vpack.c.bf16 %v848, %v848
      %v913 = vpack.c.bf16 %v849, %v849
      %v914 = vpack.c.bf16 %v850, %v850
      %v915 = vpack.c.bf16 %v851, %v851
      %v916 = vpack.c.bf16 %v852, %v852
      %v917 = vpack.c.bf16 %v853, %v853
      %918 = vst [vmem:[%s145] sm:$0xf] %v854
      %919 = vst [vmem:[%s145 + $0x4] sm:$0xf] %v855
      %920 = vst [vmem:[%s145 + $0x8] sm:$0xf] %v856
      %921 = vst [vmem:[%s145 + $0xc] sm:$0xf] %v857
      %922 = vst [vmem:[%s145 + $0x10] sm:$0xf] %v858
      %923 = vst [vmem:[%s145 + $0x14] sm:$0xf] %v859
      %924 = vst [vmem:[%s145 + $0x18] sm:$0xf] %v860
      %925 = vst [vmem:[%s145 + $0x1c] sm:$0xf] %v861
      %926 = vst [vmem:[%s145 + $0x20] sm:$0xf] %v862
      %927 = vst [vmem:[%s145 + $0x24] sm:$0xf] %v863
      %928 = vst [vmem:[%s145 + $0x28] sm:$0xf] %v864
      %929 = vst [vmem:[%s145 + $0x2c] sm:$0xf] %v865
      %930 = vst [vmem:[%s145 + $0x30] sm:$0xf] %v866
      %931 = vst [vmem:[%s145 + $0x34] sm:$0xf] %v867
      %932 = vst [vmem:[%s145 + $0x38] sm:$0xf] %v868
      %933 = vst [vmem:[%s145 + $0x3c] sm:$0xf] %v869
      %934 = vst [vmem:[%s145 + $0x40] sm:$0xf] %v870
      %935 = vst [vmem:[%s145 + $0x44] sm:$0xf] %v871
      %936 = vst [vmem:[%s145 + $0x48] sm:$0xf] %v872
      %937 = vst [vmem:[%s145 + $0x4c] sm:$0xf] %v873
      %938 = vst [vmem:[%s145 + $0x50] sm:$0xf] %v874
      %939 = vst [vmem:[%s145 + $0x54] sm:$0xf] %v875
      %940 = vst [vmem:[%s145 + $0x58] sm:$0xf] %v876
      %941 = vst [vmem:[%s145 + $0x5c] sm:$0xf] %v877
      %942 = vst [vmem:[%s145 + $0x60] sm:$0xf] %v878
      %943 = vst [vmem:[%s145 + $0x64] sm:$0xf] %v879
      %944 = vst [vmem:[%s145 + $0x68] sm:$0xf] %v880
      %945 = vst [vmem:[%s145 + $0x6c] sm:$0xf] %v881
      %946 = vst [vmem:[%s145 + $0x70] sm:$0xf] %v882
      %947 = vst [vmem:[%s145 + $0x74] sm:$0xf] %v883
      %948 = vst [vmem:[%s145 + $0x78] sm:$0xf] %v884
      %949 = vst [vmem:[%s145 + $0x7c] sm:$0xf] %v885
      %950 = vst [vmem:[%s145 + $0x80] sm:$0xf] %v886
      %951 = vst [vmem:[%s145 + $0x84] sm:$0xf] %v887
      %952 = vst [vmem:[%s145 + $0x88] sm:$0xf] %v888
      %953 = vst [vmem:[%s145 + $0x8c] sm:$0xf] %v889
      %954 = vst [vmem:[%s145 + $0x90] sm:$0xf] %v890
      %955 = vst [vmem:[%s145 + $0x94] sm:$0xf] %v891
      %956 = vst [vmem:[%s145 + $0x98] sm:$0xf] %v892
      %957 = vst [vmem:[%s145 + $0x9c] sm:$0xf] %v893
      %958 = vst [vmem:[%s145 + $0xa0] sm:$0xf] %v894
      %959 = vst [vmem:[%s145 + $0xa4] sm:$0xf] %v895
      %960 = vst [vmem:[%s145 + $0xa8] sm:$0xf] %v896
      %961 = vst [vmem:[%s145 + $0xac] sm:$0xf] %v897
      %962 = vst [vmem:[%s145 + $0xb0] sm:$0xf] %v898
      %963 = vst [vmem:[%s145 + $0xb4] sm:$0xf] %v899
      %964 = vst [vmem:[%s145 + $0xb8] sm:$0xf] %v900
      %965 = vst [vmem:[%s145 + $0xbc] sm:$0xf] %v901
      %966 = vst [vmem:[%s145 + $0xc0] sm:$0xf] %v902
      %967 = vst [vmem:[%s145 + $0xc4] sm:$0xf] %v903
      %968 = vst [vmem:[%s145 + $0xc8] sm:$0xf] %v904
      %969 = vst [vmem:[%s145 + $0xcc] sm:$0xf] %v905
      %970 = vst [vmem:[%s145 + $0xd0] sm:$0xf] %v906
      %971 = vst [vmem:[%s145 + $0xd4] sm:$0xf] %v907
      %972 = vst [vmem:[%s145 + $0xd8] sm:$0xf] %v908
      %973 = vst [vmem:[%s145 + $0xdc] sm:$0xf] %v909
      %974 = vst [vmem:[%s145 + $0xe0] sm:$0xf] %v910
      %975 = vst [vmem:[%s145 + $0xe4] sm:$0xf] %v911
      %976 = vst [vmem:[%s145 + $0xe8] sm:$0xf] %v912
      %977 = vst [vmem:[%s145 + $0xec] sm:$0xf] %v913
      %978 = vst [vmem:[%s145 + $0xf0] sm:$0xf] %v914
      %979 = vst [vmem:[%s145 + $0xf4] sm:$0xf] %v915
      %980 = vst [vmem:[%s145 + $0xf8] sm:$0xf] %v916
      %981 = vst [vmem:[%s145 + $0xfc] sm:$0xf] %v917
      %s982 = smul.u32 64, %s13
      %p983 = scmp.lt.s32.totalorder %s982, 255
      %s984 = scalar_select %p983, %s982, 255
      %s985 = smul.addr %s984, 4
      %s986 = scalar_lea.vmem %s2, %s985
      // Predicated region
      $region29: #{discriminator_forward.5} parent=27 // pred_check
        %p987 = pneg %p78
      $region30: #{discriminator_forward.5} parent=27 // pred_check_branch
        %989 = sbr.rel (%p987) target = $region32
      $region31: #{discriminator_forward.5} parent=27 // pred_region
        %s990 = smul.u32 64, %s13
      $region32: #{discriminator_forward.5} parent=27 // pred_fallthru
        _
    $region28: #{discriminator_forward.5} parent=5 // pred_fallthru
      _
    %p991 = scmp.le.s32.totalorder 2, %s8
    // Predicated region
    $region33: #{discriminator_forward.5} parent=5 // pred_check
      %p992 = pneg %p991
    $region34: #{discriminator_forward.5} parent=5 // pred_check_branch
      %994 = sbr.rel (%p992) target = $region36
    $region35: #{discriminator_forward.5} parent=5 // pred_region
      %s995 = ssub.s32 %s8, 2
      // Predicated region
      $region37: #{discriminator_forward.5} parent=35 // pred_check
        %p996 = pneg %p84
      $region38: #{discriminator_forward.5} parent=35 // pred_check_branch
        %998 = sbr.rel (%p996) target = $region40
      $region39: #{discriminator_forward.5} parent=35 // pred_region
        %s999 = smul.u32 64, %s14
        %p1000 = scmp.lt.s32.totalorder %s999, 255
        %s1001 = scalar_select %p1000, %s999, 255
        %s1002 = smul.addr %s1001, 4
        %s1003 = scalar_lea.vmem %s2, %s1002
      $region40: #{discriminator_forward.5} parent=35 // pred_fallthru
        _
    $region36: #{discriminator_forward.5} parent=5 // pred_fallthru
      _
  $region6: #{discriminator_forward.5} parent=0 // loop_footer
    %s12 = sadd.s32 1, %s8
  $region7: #{discriminator_forward.5} parent=0 // loop_footer_branch
    %7 = sbr.rel target = $region3
  $region8: #{discriminator_forward.5} parent=0 // loop_exit
    _

// kernel: discriminator_forward.6
$region0: #{discriminator_forward.6}
  #allocation0 [shape = 'u32[]', space=smem, size = 0x4, offset = 0x4, fixed_abs, tag = 'smem constant byte address 0x4 - core index']
  #allocation1 [shape = 'u32[72,128]{1,0:T(1,128)}', space=vmem, size = 0x9000, scoped, tag = 'internal scratch']
  #allocation2 [shape = 'f32[512,128]{1,0:T(8,128)}', space=vmem, size = 0x40000, scoped, tag = 'scratch operand']
  %s0 = inlined_call_operand.vmem [shape: bf16[512,128], index: 0, kind: input, shape index: {}]
  %s1 = inlined_call_operand.vmem [shape: bf16[128,128], index: 1, kind: input, shape index: {}]
  %s2 = inlined_call_operand.vmem [shape: f32[1,128], index: 2, kind: input, shape index: {}]
  %s3 = inlined_call_operand.vmem [shape: f32[1,128], index: 3, kind: input, shape index: {}]
  %s4 = inlined_call_operand.vmem [shape: bf16[512,128], index: 4, kind: output, shape index: {}]
  %s5 = sld [smem:[#allocation0]]
  $region53: #{discriminator_forward.6} parent=0
    _
  %s7 = ssub.s32 1, %s5
  %s8 = scalar_select 0, %s7, %s5
  loop: start=0, step=1, limit=4
  $region2: #{discriminator_forward.6} parent=0 // loop_pre_header
    _
  $region3: #{discriminator_forward.6} parent=0 // loop_header
    %s10 = sphi 0, %s14
    %p11 = scmp.ge.s32.totalorder %s10, 4
    %s20 = sphi 0, %s22
    %s23 = sphi 0, %s20
    %s24 = sphi 0, %s23
    %s40 = sphi 0, %s24
    %s44 = sphi 0, %s44
    %s46 = sphi 0, %s44
    %s47 = sphi 0, %s46
    %s61 = sphi 0, %s47
    %s65 = sphi 0, %s65
    %s67 = sphi 0, %s65
    %s68 = sphi 0, %s67
    %s82 = sphi 0, %s68
    %s86 = sphi 0, %s86
    %s88 = sphi 0, %s86
    %s89 = sphi 0, %s88
    %s103 = sphi 0, %s89
    %s107 = sphi 0, %s107
    %s109 = sphi 0, %s107
    %s110 = sphi 0, %s109
    %s124 = sphi 0, %s110
  $region4: #{discriminator_forward.6} parent=0 // loop_header_branch
    %13 = sbr.rel (%p11) target = $region8
  $region5: #{discriminator_forward.6} parent=0 // loop_body
    %s15 = ssub.s32 %s10, 1
    %s16 = ssub.s32 %s10, 2
    %s17 = sadd.s32 %s10, 1
    %s18 = ssub.s32 %s10, %s17
    %p19 = scmp.eq.s32.totalorder %s18, 0
    %s21 = sadd.s32 %s20, 1
    %s22 = scalar_select %p19, %s20, %s21
    %p25 = pneg %p19
    %p26 = scmp.eq.s32.totalorder %s10, 1
    %p27 = por %p25, %p26
    %p28 = scmp.ne.s32.totalorder %s20, %s23
    %p29 = scmp.eq.s32.totalorder %s10, 0
    %p30 = por %p28, %p29
    %p31 = scmp.ne.s32.totalorder %s20, %s23
    %p32 = scmp.eq.s32.totalorder %s15, 1
    %p33 = por %p31, %p32
    %p34 = scmp.ne.s32.totalorder %s23, %s24
    %p35 = scmp.eq.s32.totalorder %s15, 0
    %p36 = por %p34, %p35
    %p37 = scmp.ne.s32.totalorder %s23, %s24
    %p38 = scmp.eq.s32.totalorder %s16, 1
    %p39 = por %p37, %p38
    %p41 = scmp.ne.s32.totalorder %s24, %s40
    %p42 = scmp.eq.s32.totalorder %s16, 0
    %p43 = por %p41, %p42
    %s45 = sadd.s32 %s44, 1
    %p48 = scmp.eq.s32.totalorder %s10, 1
    %p49 = scmp.ne.s32.totalorder %s44, %s46
    %p50 = scmp.eq.s32.totalorder %s10, 0
    %p51 = por %p49, %p50
    %p52 = scmp.ne.s32.totalorder %s44, %s46
    %p53 = scmp.eq.s32.totalorder %s15, 1
    %p54 = por %p52, %p53
    %p55 = scmp.ne.s32.totalorder %s46, %s47
    %p56 = scmp.eq.s32.totalorder %s15, 0
    %p57 = por %p55, %p56
    %p58 = scmp.ne.s32.totalorder %s46, %s47
    %p59 = scmp.eq.s32.totalorder %s16, 1
    %p60 = por %p58, %p59
    %p62 = scmp.ne.s32.totalorder %s47, %s61
    %p63 = scmp.eq.s32.totalorder %s16, 0
    %p64 = por %p62, %p63
    %s66 = sadd.s32 %s65, 1
    %p69 = scmp.eq.s32.totalorder %s10, 1
    %p70 = scmp.ne.s32.totalorder %s65, %s67
    %p71 = scmp.eq.s32.totalorder %s10, 0
    %p72 = por %p70, %p71
    %p73 = scmp.ne.s32.totalorder %s65, %s67
    %p74 = scmp.eq.s32.totalorder %s15, 1
    %p75 = por %p73, %p74
    %p76 = scmp.ne.s32.totalorder %s67, %s68
    %p77 = scmp.eq.s32.totalorder %s15, 0
    %p78 = por %p76, %p77
    %p79 = scmp.ne.s32.totalorder %s67, %s68
    %p80 = scmp.eq.s32.totalorder %s16, 1
    %p81 = por %p79, %p80
    %p83 = scmp.ne.s32.totalorder %s68, %s82
    %p84 = scmp.eq.s32.totalorder %s16, 0
    %p85 = por %p83, %p84
    %s87 = sadd.s32 %s86, 1
    %p90 = scmp.eq.s32.totalorder %s10, 1
    %p91 = scmp.ne.s32.totalorder %s86, %s88
    %p92 = scmp.eq.s32.totalorder %s10, 0
    %p93 = por %p91, %p92
    %p94 = scmp.ne.s32.totalorder %s86, %s88
    %p95 = scmp.eq.s32.totalorder %s15, 1
    %p96 = por %p94, %p95
    %p97 = scmp.ne.s32.totalorder %s88, %s89
    %p98 = scmp.eq.s32.totalorder %s15, 0
    %p99 = por %p97, %p98
    %p100 = scmp.ne.s32.totalorder %s88, %s89
    %p101 = scmp.eq.s32.totalorder %s16, 1
    %p102 = por %p100, %p101
    %p104 = scmp.ne.s32.totalorder %s89, %s103
    %p105 = scmp.eq.s32.totalorder %s16, 0
    %p106 = por %p104, %p105
    %s108 = sadd.s32 %s107, 1
    %p111 = scmp.eq.s32.totalorder %s10, 1
    %p112 = scmp.ne.s32.totalorder %s107, %s109
    %p113 = scmp.eq.s32.totalorder %s10, 0
    %p114 = por %p112, %p113
    %p115 = scmp.ne.s32.totalorder %s107, %s109
    %p116 = scmp.eq.s32.totalorder %s15, 1
    %p117 = por %p115, %p116
    %p118 = scmp.ne.s32.totalorder %s109, %s110
    %p119 = scmp.eq.s32.totalorder %s15, 0
    %p120 = por %p118, %p119
    %p121 = scmp.ne.s32.totalorder %s109, %s110
    %p122 = scmp.eq.s32.totalorder %s16, 1
    %p123 = por %p121, %p122
    %p125 = scmp.ne.s32.totalorder %s110, %s124
    %p126 = scmp.eq.s32.totalorder %s16, 0
    %p127 = por %p125, %p126
    %p128 = scmp.le.s32.totalorder 1, %s10
    %p129 = scmp.lt.s32.totalorder %s10, 3
    %p130 = pnand %p128, %p129
    %p131 = pneg %p130
    // Predicated region
    $region9: #{discriminator_forward.6} parent=5 // pred_check
      _
    $region10: #{discriminator_forward.6} parent=5 // pred_check_branch
      %133 = sbr.rel (%p130) target = $region12
    $region11: #{discriminator_forward.6} parent=5 // pred_region
      %s134 = ssub.s32 %s10, 1
      // Predicated region
      $region13: #{discriminator_forward.6} parent=11 // pred_check
        %p135 = pneg %p57
      $region14: #{discriminator_forward.6} parent=11 // pred_check_branch
        %137 = sbr.rel (%p135) target = $region16
      $region15: #{discriminator_forward.6} parent=11 // pred_region
        _
      $region16: #{discriminator_forward.6} parent=11 // pred_fallthru
        _
      // Predicated region
      $region17: #{discriminator_forward.6} parent=11 // pred_check
        %p138 = pneg %p78
      $region18: #{discriminator_forward.6} parent=11 // pred_check_branch
        %140 = sbr.rel (%p138) target = $region20
      $region19: #{discriminator_forward.6} parent=11 // pred_region
        _
      $region20: #{discriminator_forward.6} parent=11 // pred_fallthru
        _
      // Predicated region
      $region21: #{discriminator_forward.6} parent=11 // pred_check
        %p141 = pneg %p99
      $region22: #{discriminator_forward.6} parent=11 // pred_check_branch
        %143 = sbr.rel (%p141) target = $region24
      $region23: #{discriminator_forward.6} parent=11 // pred_region
        _
      $region24: #{discriminator_forward.6} parent=11 // pred_fallthru
        _
    $region12: #{discriminator_forward.6} parent=5 // pred_fallthru
      _
    %p144 = scmp.lt.s32.totalorder %s10, 2
    // Predicated region
    $region25: #{discriminator_forward.6} parent=5 // pred_check
      %p145 = pneg %p144
    $region26: #{discriminator_forward.6} parent=5 // pred_check_branch
      %147 = sbr.rel (%p145) target = $region28
    $region27: #{discriminator_forward.6} parent=5 // pred_region
      // Predicated region
      $region29: #{discriminator_forward.6} parent=27 // pred_check
        %p148 = pneg %p30
      $region30: #{discriminator_forward.6} parent=27 // pred_check_branch
        %150 = sbr.rel (%p148) target = $region32
      $region31: #{discriminator_forward.6} parent=27 // pred_region
        %s151 = smul.u32 32, %s10
        %p152 = scmp.lt.s32.totalorder %s151, 63
        %s153 = scalar_select %p152, %s151, 63
        %s154 = smul.addr %s153, 4
        %s155 = scalar_lea.vmem %s0, %s154
        %s156 = smul.u32 32, %s10
      $region32: #{discriminator_forward.6} parent=27 // pred_fallthru
        _
    $region28: #{discriminator_forward.6} parent=5 // pred_fallthru
      _
    %p157 = scmp.le.s32.totalorder 1, %s10
    %p158 = scmp.lt.s32.totalorder %s10, 3
    %p159 = pnand %p157, %p158
    %p160 = pneg %p159
    // Predicated region
    $region33: #{discriminator_forward.6} parent=5 // pred_check
      _
    $region34: #{discriminator_forward.6} parent=5 // pred_check_branch
      %162 = sbr.rel (%p159) target = $region36
    $region35: #{discriminator_forward.6} parent=5 // pred_region
      %s163 = ssub.s32 %s10, 1
      %s164 = smul.u32 32, %s15
      %p165 = scmp.lt.s32.totalorder %s164, 63
      %s166 = scalar_select %p165, %s164, 63
      %s167 = smul.addr %s166, 4
      %s168 = scalar_lea.vmem %s0, %s167
      %p169 = pneg %p36
      %p170 = pneg %p33
      %p171 = pneg %p57
      %p172 = pneg %p54
      %p173 = pneg %p78
      %p174 = pneg %p75
      %p175 = pneg %p99
      %p176 = pneg %p96
      %p177 = pneg %p120
      %p178 = pneg %p117
      %s179 = smul.u32 32, %s15
      %p180 = scmp.lt.s32.totalorder %s179, 63
      %s181 = scalar_select %p180, %s179, 63
      %s182 = smul.addr %s181, 4
      %s183 = scalar_lea.vmem %s0, %s182
      %s184 = smul.u32 32, %s15
      %v185 = vld [vmem:[%s183] sm:$0xf]
      %v186 = vld [vmem:[%s183 + $0x4] sm:$0xf]
      %v187 = vld [vmem:[%s183 + $0x8] sm:$0xf]
      %v188 = vld [vmem:[%s183 + $0xc] sm:$0xf]
      %v189 = vld [vmem:[%s183 + $0x10] sm:$0xf]
      %v190 = vld [vmem:[%s183 + $0x14] sm:$0xf]
      %v191 = vld [vmem:[%s183 + $0x18] sm:$0xf]
      %v192 = vld [vmem:[%s183 + $0x1c] sm:$0xf]
      %v193 = vld [vmem:[%s183 + $0x20] sm:$0xf]
      %v194 = vld [vmem:[%s183 + $0x24] sm:$0xf]
      %v195 = vld [vmem:[%s183 + $0x28] sm:$0xf]
      %v196 = vld [vmem:[%s183 + $0x2c] sm:$0xf]
      %v197 = vld [vmem:[%s183 + $0x30] sm:$0xf]
      %v198 = vld [vmem:[%s183 + $0x34] sm:$0xf]
      %v199 = vld [vmem:[%s183 + $0x38] sm:$0xf]
      %v200 = vld [vmem:[%s183 + $0x3c] sm:$0xf]
      %v201 = vld [vmem:[%s183 + $0x40] sm:$0xf]
      %v202 = vld [vmem:[%s183 + $0x44] sm:$0xf]
      %v203 = vld [vmem:[%s183 + $0x48] sm:$0xf]
      %v204 = vld [vmem:[%s183 + $0x4c] sm:$0xf]
      %v205 = vld [vmem:[%s183 + $0x50] sm:$0xf]
      %v206 = vld [vmem:[%s183 + $0x54] sm:$0xf]
      %v207 = vld [vmem:[%s183 + $0x58] sm:$0xf]
      %v208 = vld [vmem:[%s183 + $0x5c] sm:$0xf]
      %v209 = vld [vmem:[%s183 + $0x60] sm:$0xf]
      %v210 = vld [vmem:[%s183 + $0x64] sm:$0xf]
      %v211 = vld [vmem:[%s183 + $0x68] sm:$0xf]
      %v212 = vld [vmem:[%s183 + $0x6c] sm:$0xf]
      %v213 = vld [vmem:[%s183 + $0x70] sm:$0xf]
      %v214 = vld [vmem:[%s183 + $0x74] sm:$0xf]
      %v215 = vld [vmem:[%s183 + $0x78] sm:$0xf]
      %v216 = vld [vmem:[%s183 + $0x7c] sm:$0xf]
      %v217 = vld [vmem:[%s1] sm:$0xf]
      %v218 = vld [vmem:[%s1 + $0x4] sm:$0xf]
      %v219 = vld [vmem:[%s1 + $0x8] sm:$0xf]
      %v220 = vld [vmem:[%s1 + $0xc] sm:$0xf]
      %v221 = vld [vmem:[%s1 + $0x10] sm:$0xf]
      %v222 = vld [vmem:[%s1 + $0x14] sm:$0xf]
      %v223 = vld [vmem:[%s1 + $0x18] sm:$0xf]
      %v224 = vld [vmem:[%s1 + $0x1c] sm:$0xf]
      %v225 = vld [vmem:[%s1 + $0x20] sm:$0xf]
      %v226 = vld [vmem:[%s1 + $0x24] sm:$0xf]
      %v227 = vld [vmem:[%s1 + $0x28] sm:$0xf]
      %v228 = vld [vmem:[%s1 + $0x2c] sm:$0xf]
      %v229 = vld [vmem:[%s1 + $0x30] sm:$0xf]
      %v230 = vld [vmem:[%s1 + $0x34] sm:$0xf]
      %v231 = vld [vmem:[%s1 + $0x38] sm:$0xf]
      %v232 = vld [vmem:[%s1 + $0x3c] sm:$0xf]
      %v265 = vunpack.c.l.b16 %v185
      %v266 = vunpack.c.l.b16 %v186
      %v267 = vunpack.c.l.b16 %v187
      %v268 = vunpack.c.l.b16 %v188
      %v269 = vunpack.c.l.b16 %v189
      %v270 = vunpack.c.l.b16 %v190
      %v271 = vunpack.c.l.b16 %v191
      %v272 = vunpack.c.l.b16 %v192
      %v273 = vunpack.c.l.b16 %v193
      %v274 = vunpack.c.l.b16 %v194
      %v275 = vunpack.c.l.b16 %v195
      %v276 = vunpack.c.l.b16 %v196
      %v277 = vunpack.c.l.b16 %v197
      %v278 = vunpack.c.l.b16 %v198
      %v279 = vunpack.c.l.b16 %v199
      %v280 = vunpack.c.l.b16 %v200
      %v281 = vunpack.c.l.b16 %v201
      %v282 = vunpack.c.l.b16 %v202
      %v283 = vunpack.c.l.b16 %v203
      %v284 = vunpack.c.l.b16 %v204
      %v285 = vunpack.c.l.b16 %v205
      %v286 = vunpack.c.l.b16 %v206
      %v287 = vunpack.c.l.b16 %v207
      %v288 = vunpack.c.l.b16 %v208
      %v289 = vunpack.c.l.b16 %v209
      %v290 = vunpack.c.l.b16 %v210
      %v291 = vunpack.c.l.b16 %v211
      %v292 = vunpack.c.l.b16 %v212
      %v293 = vunpack.c.l.b16 %v213
      %v294 = vunpack.c.l.b16 %v214
      %v295 = vunpack.c.l.b16 %v215
      %v296 = vunpack.c.l.b16 %v216
      %v297 = vpack.c.b16 %v266, %v265
      %v298 = vpack.c.b16 %v268, %v267
      %v299 = vpack.c.b16 %v270, %v269
      %v300 = vpack.c.b16 %v272, %v271
      %v301 = vpack.c.b16 %v274, %v273
      %v302 = vpack.c.b16 %v276, %v275
      %v303 = vpack.c.b16 %v278, %v277
      %v304 = vpack.c.b16 %v280, %v279
      %v305 = vpack.c.b16 %v282, %v281
      %v306 = vpack.c.b16 %v284, %v283
      %v307 = vpack.c.b16 %v286, %v285
      %v308 = vpack.c.b16 %v288, %v287
      %v309 = vpack.c.b16 %v290, %v289
      %v310 = vpack.c.b16 %v292, %v291
      %v311 = vpack.c.b16 %v294, %v293
      %v312 = vpack.c.b16 %v296, %v295
      %v345 = vunpack.c.l.b16 %v217
      %v346 = vunpack.c.l.b16 %v218
      %v347 = vunpack.c.l.b16 %v219
      %v348 = vunpack.c.l.b16 %v220
      %v349 = vunpack.c.l.b16 %v221
      %v350 = vunpack.c.l.b16 %v222
      %v351 = vunpack.c.l.b16 %v223
      %v352 = vunpack.c.l.b16 %v224
      %v353 = vunpack.c.l.b16 %v225
      %v354 = vunpack.c.l.b16 %v226
      %v355 = vunpack.c.l.b16 %v227
      %v356 = vunpack.c.l.b16 %v228
      %v357 = vunpack.c.l.b16 %v229
      %v358 = vunpack.c.l.b16 %v230
      %v359 = vunpack.c.l.b16 %v231
      %v360 = vunpack.c.l.b16 %v232
      %v361 = vpack.c.b16 %v346, %v345
      %v362 = vpack.c.b16 %v348, %v347
      %v363 = vpack.c.b16 %v350, %v349
      %v364 = vpack.c.b16 %v352, %v351
      %v365 = vpack.c.b16 %v354, %v353
      %v366 = vpack.c.b16 %v356, %v355
      %v367 = vpack.c.b16 %v358, %v357
      %v368 = vpack.c.b16 %v360, %v359
      %377 = vmatpush.bf16.msra.mxu0 %v368
      %378 = vmatpush.bf16.msra.mxu0 %v367
      %379 = vmatpush.bf16.msra.mxu0 %v366
      %380 = vmatpush.bf16.msra.mxu0 %v365
      %381 = vmatpush.bf16.msra.mxu0 %v364
      %382 = vmatpush.bf16.msra.mxu0 %v363
      %383 = vmatpush.bf16.msra.mxu0 %v362
      %384 = vmatpush.bf16.msra.mxu0 %v361
      %385 = vmatmul.bf16.gmra.mxu0 %v297
      %v386 = vpop.f32.mrf.mxu0
      %v387 = vadd.f32 0.0, %v386
      %v388 = vpop.f32.mrf.mxu0
      %v389 = vadd.f32 0.0, %v388
      %390 = vmatmul.bf16.gmra.mxu0 %v298
      %v391 = vpop.f32.mrf.mxu0
      %v392 = vadd.f32 0.0, %v391
      %v393 = vpop.f32.mrf.mxu0
      %v394 = vadd.f32 0.0, %v393
      %395 = vmatmul.bf16.gmra.mxu0 %v299
      %v396 = vpop.f32.mrf.mxu0
      %v397 = vadd.f32 0.0, %v396
      %v398 = vpop.f32.mrf.mxu0
      %v399 = vadd.f32 0.0, %v398
      %400 = vmatmul.bf16.gmra.mxu0 %v300
      %v401 = vpop.f32.mrf.mxu0
      %v402 = vadd.f32 0.0, %v401
      %v403 = vpop.f32.mrf.mxu0
      %v404 = vadd.f32 0.0, %v403
      %405 = vmatmul.bf16.gmra.mxu0 %v301
      %v406 = vpop.f32.mrf.mxu0
      %v407 = vadd.f32 0.0, %v406
      %v408 = vpop.f32.mrf.mxu0
      %v409 = vadd.f32 0.0, %v408
      %410 = vmatmul.bf16.gmra.mxu0 %v302
      %v411 = vpop.f32.mrf.mxu0
      %v412 = vadd.f32 0.0, %v411
      %v413 = vpop.f32.mrf.mxu0
      %v414 = vadd.f32 0.0, %v413
      %415 = vmatmul.bf16.gmra.mxu0 %v303
      %v416 = vpop.f32.mrf.mxu0
      %v417 = vadd.f32 0.0, %v416
      %v418 = vpop.f32.mrf.mxu0
      %v419 = vadd.f32 0.0, %v418
      %420 = vmatmul.bf16.gmra.mxu0 %v304
      %v421 = vpop.f32.mrf.mxu0
      %v422 = vadd.f32 0.0, %v421
      %v423 = vpop.f32.mrf.mxu0
      %v424 = vadd.f32 0.0, %v423
      %425 = vmatmul.bf16.gmra.mxu0 %v305
      %v426 = vpop.f32.mrf.mxu0
      %v427 = vadd.f32 0.0, %v426
      %v428 = vpop.f32.mrf.mxu0
      %v429 = vadd.f32 0.0, %v428
      %430 = vmatmul.bf16.gmra.mxu0 %v306
      %v431 = vpop.f32.mrf.mxu0
      %v432 = vadd.f32 0.0, %v431
      %v433 = vpop.f32.mrf.mxu0
      %v434 = vadd.f32 0.0, %v433
      %435 = vmatmul.bf16.gmra.mxu0 %v307
      %v436 = vpop.f32.mrf.mxu0
      %v437 = vadd.f32 0.0, %v436
      %v438 = vpop.f32.mrf.mxu0
      %v439 = vadd.f32 0.0, %v438
      %440 = vmatmul.bf16.gmra.mxu0 %v308
      %v441 = vpop.f32.mrf.mxu0
      %v442 = vadd.f32 0.0, %v441
      %v443 = vpop.f32.mrf.mxu0
      %v444 = vadd.f32 0.0, %v443
      %445 = vmatmul.bf16.gmra.mxu0 %v309
      %v446 = vpop.f32.mrf.mxu0
      %v447 = vadd.f32 0.0, %v446
      %v448 = vpop.f32.mrf.mxu0
      %v449 = vadd.f32 0.0, %v448
      %450 = vmatmul.bf16.gmra.mxu0 %v310
      %v451 = vpop.f32.mrf.mxu0
      %v452 = vadd.f32 0.0, %v451
      %v453 = vpop.f32.mrf.mxu0
      %v454 = vadd.f32 0.0, %v453
      %455 = vmatmul.bf16.gmra.mxu0 %v311
      %v456 = vpop.f32.mrf.mxu0
      %v457 = vadd.f32 0.0, %v456
      %v458 = vpop.f32.mrf.mxu0
      %v459 = vadd.f32 0.0, %v458
      %460 = vmatmul.bf16.gmra.mxu0 %v312
      %v461 = vpop.f32.mrf.mxu0
      %v462 = vadd.f32 0.0, %v461
      %v463 = vpop.f32.mrf.mxu0
      %v464 = vadd.f32 0.0, %v463
      %465 = vdwg.mxu0
      %s466 = smul.u32 %s15, 256
      %s467 = scalar_lea.vmem [#allocation2], %s466
      %468 = vst [vmem:[%s467] sm:$0xff] %v387
      %469 = vst [vmem:[%s467 + $0x8] sm:$0xff] %v389
      %470 = vst [vmem:[%s467 + $0x10] sm:$0xff] %v392
      %471 = vst [vmem:[%s467 + $0x18] sm:$0xff] %v394
      %472 = vst [vmem:[%s467 + $0x20] sm:$0xff] %v397
      %473 = vst [vmem:[%s467 + $0x28] sm:$0xff] %v399
      %474 = vst [vmem:[%s467 + $0x30] sm:$0xff] %v402
      %475 = vst [vmem:[%s467 + $0x38] sm:$0xff] %v404
      %476 = vst [vmem:[%s467 + $0x40] sm:$0xff] %v407
      %477 = vst [vmem:[%s467 + $0x48] sm:$0xff] %v409
      %478 = vst [vmem:[%s467 + $0x50] sm:$0xff] %v412
      %479 = vst [vmem:[%s467 + $0x58] sm:$0xff] %v414
      %480 = vst [vmem:[%s467 + $0x60] sm:$0xff] %v417
      %481 = vst [vmem:[%s467 + $0x68] sm:$0xff] %v419
      %482 = vst [vmem:[%s467 + $0x70] sm:$0xff] %v422
      %483 = vst [vmem:[%s467 + $0x78] sm:$0xff] %v424
      %484 = vst [vmem:[%s467 + $0x80] sm:$0xff] %v427
      %485 = vst [vmem:[%s467 + $0x88] sm:$0xff] %v429
      %486 = vst [vmem:[%s467 + $0x90] sm:$0xff] %v432
      %487 = vst [vmem:[%s467 + $0x98] sm:$0xff] %v434
      %488 = vst [vmem:[%s467 + $0xa0] sm:$0xff] %v437
      %489 = vst [vmem:[%s467 + $0xa8] sm:$0xff] %v439
      %490 = vst [vmem:[%s467 + $0xb0] sm:$0xff] %v442
      %491 = vst [vmem:[%s467 + $0xb8] sm:$0xff] %v444
      %492 = vst [vmem:[%s467 + $0xc0] sm:$0xff] %v447
      %493 = vst [vmem:[%s467 + $0xc8] sm:$0xff] %v449
      %494 = vst [vmem:[%s467 + $0xd0] sm:$0xff] %v452
      %495 = vst [vmem:[%s467 + $0xd8] sm:$0xff] %v454
      %496 = vst [vmem:[%s467 + $0xe0] sm:$0xff] %v457
      %497 = vst [vmem:[%s467 + $0xe8] sm:$0xff] %v459
      %498 = vst [vmem:[%s467 + $0xf0] sm:$0xff] %v462
      %499 = vst [vmem:[%s467 + $0xf8] sm:$0xff] %v464
      %p500 = scmp.eq.s32.totalorder %s15, 1
      // Predicated region
      $region37: #{discriminator_forward.6} parent=35 // pred_check
        %p501 = pneg %p500
      $region38: #{discriminator_forward.6} parent=35 // pred_check_branch
        %503 = sbr.rel (%p501) target = $region40
      $region39: #{discriminator_forward.6} parent=35 // pred_region
        %v504 = vld [vmem:[#allocation2] sm:$0xff]
        %v505 = vld [vmem:[#allocation2 + $0x8] sm:$0xff]
        %v506 = vld [vmem:[#allocation2 + $0x10] sm:$0xff]
        %v507 = vld [vmem:[#allocation2 + $0x18] sm:$0xff]
        %v508 = vld [vmem:[#allocation2 + $0x20] sm:$0xff]
        %v509 = vld [vmem:[#allocation2 + $0x28] sm:$0xff]
        %v510 = vld [vmem:[#allocation2 + $0x30] sm:$0xff]
        %v511 = vld [vmem:[#allocation2 + $0x38] sm:$0xff]
        %v512 = vld [vmem:[#allocation2 + $0x40] sm:$0xff]
        %v513 = vld [vmem:[#allocation2 + $0x48] sm:$0xff]
        %v514 = vld [vmem:[#allocation2 + $0x50] sm:$0xff]
        %v515 = vld [vmem:[#allocation2 + $0x58] sm:$0xff]
        %v516 = vld [vmem:[#allocation2 + $0x60] sm:$0xff]
        %v517 = vld [vmem:[#allocation2 + $0x68] sm:$0xff]
        %v518 = vld [vmem:[#allocation2 + $0x70] sm:$0xff]
        %v519 = vld [vmem:[#allocation2 + $0x78] sm:$0xff]
        %v520 = vld [vmem:[#allocation2 + $0x80] sm:$0xff]
        %v521 = vld [vmem:[#allocation2 + $0x88] sm:$0xff]
        %v522 = vld [vmem:[#allocation2 + $0x90] sm:$0xff]
        %v523 = vld [vmem:[#allocation2 + $0x98] sm:$0xff]
        %v524 = vld [vmem:[#allocation2 + $0xa0] sm:$0xff]
        %v525 = vld [vmem:[#allocation2 + $0xa8] sm:$0xff]
        %v526 = vld [vmem:[#allocation2 + $0xb0] sm:$0xff]
        %v527 = vld [vmem:[#allocation2 + $0xb8] sm:$0xff]
        %v528 = vld [vmem:[#allocation2 + $0xc0] sm:$0xff]
        %v529 = vld [vmem:[#allocation2 + $0xc8] sm:$0xff]
        %v530 = vld [vmem:[#allocation2 + $0xd0] sm:$0xff]
        %v531 = vld [vmem:[#allocation2 + $0xd8] sm:$0xff]
        %v532 = vld [vmem:[#allocation2 + $0xe0] sm:$0xff]
        %v533 = vld [vmem:[#allocation2 + $0xe8] sm:$0xff]
        %v534 = vld [vmem:[#allocation2 + $0xf0] sm:$0xff]
        %v535 = vld [vmem:[#allocation2 + $0xf8] sm:$0xff]
        %v536 = vld [vmem:[#allocation2 + $0x100] sm:$0xff]
        %v537 = vld [vmem:[#allocation2 + $0x108] sm:$0xff]
        %v538 = vld [vmem:[#allocation2 + $0x110] sm:$0xff]
        %v539 = vld [vmem:[#allocation2 + $0x118] sm:$0xff]
        %v540 = vld [vmem:[#allocation2 + $0x120] sm:$0xff]
        %v541 = vld [vmem:[#allocation2 + $0x128] sm:$0xff]
        %v542 = vld [vmem:[#allocation2 + $0x130] sm:$0xff]
        %v543 = vld [vmem:[#allocation2 + $0x138] sm:$0xff]
        %v544 = vld [vmem:[#allocation2 + $0x140] sm:$0xff]
        %v545 = vld [vmem:[#allocation2 + $0x148] sm:$0xff]
        %v546 = vld [vmem:[#allocation2 + $0x150] sm:$0xff]
        %v547 = vld [vmem:[#allocation2 + $0x158] sm:$0xff]
        %v548 = vld [vmem:[#allocation2 + $0x160] sm:$0xff]
        %v549 = vld [vmem:[#allocation2 + $0x168] sm:$0xff]
        %v550 = vld [vmem:[#allocation2 + $0x170] sm:$0xff]
        %v551 = vld [vmem:[#allocation2 + $0x178] sm:$0xff]
        %v552 = vld [vmem:[#allocation2 + $0x180] sm:$0xff]
        %v553 = vld [vmem:[#allocation2 + $0x188] sm:$0xff]
        %v554 = vld [vmem:[#allocation2 + $0x190] sm:$0xff]
        %v555 = vld [vmem:[#allocation2 + $0x198] sm:$0xff]
        %v556 = vld [vmem:[#allocation2 + $0x1a0] sm:$0xff]
        %v557 = vld [vmem:[#allocation2 + $0x1a8] sm:$0xff]
        %v558 = vld [vmem:[#allocation2 + $0x1b0] sm:$0xff]
        %v559 = vld [vmem:[#allocation2 + $0x1b8] sm:$0xff]
        %v560 = vld [vmem:[#allocation2 + $0x1c0] sm:$0xff]
        %v561 = vld [vmem:[#allocation2 + $0x1c8] sm:$0xff]
        %v562 = vld [vmem:[#allocation2 + $0x1d0] sm:$0xff]
        %v563 = vld [vmem:[#allocation2 + $0x1d8] sm:$0xff]
        %v564 = vld [vmem:[#allocation2 + $0x1e0] sm:$0xff]
        %v565 = vld [vmem:[#allocation2 + $0x1e8] sm:$0xff]
        %v566 = vld [vmem:[#allocation2 + $0x1f0] sm:$0xff]
        %v567 = vld [vmem:[#allocation2 + $0x1f8] sm:$0xff]
        %v568 = vadd.f32 %v504, %v505
        %v569 = vadd.f32 %v568, %v506
        %v570 = vadd.f32 %v569, %v507
        %v571 = vadd.f32 %v570, %v508
        %v572 = vadd.f32 %v571, %v509
        %v573 = vadd.f32 %v572, %v510
        %v574 = vadd.f32 %v573, %v511
        %v575 = vadd.f32 %v574, %v512
        %v576 = vadd.f32 %v575, %v513
        %v577 = vadd.f32 %v576, %v514
        %v578 = vadd.f32 %v577, %v515
        %v579 = vadd.f32 %v578, %v516
        %v580 = vadd.f32 %v579, %v517
        %v581 = vadd.f32 %v580, %v518
        %v582 = vadd.f32 %v581, %v519
        %v583 = vadd.f32 %v582, %v520
        %v584 = vadd.f32 %v583, %v521
        %v585 = vadd.f32 %v584, %v522
        %v586 = vadd.f32 %v585, %v523
        %v587 = vadd.f32 %v586, %v524
        %v588 = vadd.f32 %v587, %v525
        %v589 = vadd.f32 %v588, %v526
        %v590 = vadd.f32 %v589, %v527
        %v591 = vadd.f32 %v590, %v528
        %v592 = vadd.f32 %v591, %v529
        %v593 = vadd.f32 %v592, %v530
        %v594 = vadd.f32 %v593, %v531
        %v595 = vadd.f32 %v594, %v532
        %v596 = vadd.f32 %v595, %v533
        %v597 = vadd.f32 %v596, %v534
        %v598 = vadd.f32 %v597, %v535
        %v599 = vadd.f32 %v598, %v536
        %v600 = vadd.f32 %v599, %v537
        %v601 = vadd.f32 %v600, %v538
        %v602 = vadd.f32 %v601, %v539
        %v603 = vadd.f32 %v602, %v540
        %v604 = vadd.f32 %v603, %v541
        %v605 = vadd.f32 %v604, %v542
        %v606 = vadd.f32 %v605, %v543
        %v607 = vadd.f32 %v606, %v544
        %v608 = vadd.f32 %v607, %v545
        %v609 = vadd.f32 %v608, %v546
        %v610 = vadd.f32 %v609, %v547
        %v611 = vadd.f32 %v610, %v548
        %v612 = vadd.f32 %v611, %v549
        %v613 = vadd.f32 %v612, %v550
        %v614 = vadd.f32 %v613, %v551
        %v615 = vadd.f32 %v614, %v552
        %v616 = vadd.f32 %v615, %v553
        %v617 = vadd.f32 %v616, %v554
        %v618 = vadd.f32 %v617, %v555
        %v619 = vadd.f32 %v618, %v556
        %v620 = vadd.f32 %v619, %v557
        %v621 = vadd.f32 %v620, %v558
        %v622 = vadd.f32 %v621, %v559
        %v623 = vadd.f32 %v622, %v560
        %v624 = vadd.f32 %v623, %v561
        %v625 = vadd.f32 %v624, %v562
        %v626 = vadd.f32 %v625, %v563
        %v627 = vadd.f32 %v626, %v564
        %v628 = vadd.f32 %v627, %v565
        %v629 = vadd.f32 %v628, %v566
        %v630 = vadd.f32 %v629, %v567
        %v631 = vrot.slane %v630, 4
        %v632 = vadd.f32 %v630, %v631
        %v633 = vrot.slane %v632, 2
        %v634 = vadd.f32 %v632, %v633
        %v635 = vrot.slane %v634, 1
        %v636 = vadd.f32 %v634, %v635
        %v637 = vmul.f32 %v636, 0.001953125
        %v638 = vlaneseq
        %v639 = vshrl.u32 %v638, 7
        %v640 = vadd.s32 %v639, 8
        %v641 = vadd.s32 %v639, 16
        %v642 = vadd.s32 %v639, 24
        %v643 = vadd.s32 %v639, 32
        %v644 = vadd.s32 %v639, 40
        %v645 = vadd.s32 %v639, 48
        %v646 = vadd.s32 %v639, 56
        %v647 = vadd.s32 %v639, 64
        %v648 = vadd.s32 %v639, 72
        %v649 = vadd.s32 %v639, 80
        %v650 = vadd.s32 %v639, 88
        %v651 = vadd.s32 %v639, 96
        %v652 = vadd.s32 %v639, 104
        %v653 = vadd.s32 %v639, 112
        %v654 = vadd.s32 %v639, 120
        %v655 = vadd.s32 %v639, 128
        %v656 = vadd.s32 %v639, 136
        %v657 = vadd.s32 %v639, 144
        %v658 = vadd.s32 %v639, 152
        %v659 = vadd.s32 %v639, 160
        %v660 = vadd.s32 %v639, 168
        %v661 = vadd.s32 %v639, 176
        %v662 = vadd.s32 %v639, 184
        %v663 = vadd.s32 %v639, 192
        %v664 = vadd.s32 %v639, 200
        %v665 = vadd.s32 %v639, 208
        %v666 = vadd.s32 %v639, 216
        %v667 = vadd.s32 %v639, 224
        %v668 = vadd.s32 %v639, 232
        %v669 = vadd.s32 %v639, 240
        %v670 = vadd.s32 %v639, 248
        %v671 = vadd.s32 %v639, 256
        %v672 = vadd.s32 %v639, 264
        %v673 = vadd.s32 %v639, 272
        %v674 = vadd.s32 %v639, 280
        %v675 = vadd.s32 %v639, 288
        %v676 = vadd.s32 %v639, 296
        %v677 = vadd.s32 %v639, 304
        %v678 = vadd.s32 %v639, 312
        %v679 = vadd.s32 %v639, 320
        %v680 = vadd.s32 %v639, 328
        %v681 = vadd.s32 %v639, 336
        %v682 = vadd.s32 %v639, 344
        %v683 = vadd.s32 %v639, 352
        %v684 = vadd.s32 %v639, 360
        %v685 = vadd.s32 %v639, 368
        %v686 = vadd.s32 %v639, 376
        %v687 = vadd.s32 %v639, 384
        %v688 = vadd.s32 %v639, 392
        %v689 = vadd.s32 %v639, 400
        %v690 = vadd.s32 %v639, 408
        %v691 = vadd.s32 %v639, 416
        %v692 = vadd.s32 %v639, 424
        %v693 = vadd.s32 %v639, 432
        %v694 = vadd.s32 %v639, 440
        %v695 = vadd.s32 %v639, 448
        %v696 = vadd.s32 %v639, 456
        %v697 = vadd.s32 %v639, 464
        %v698 = vadd.s32 %v639, 472
        %v699 = vadd.s32 %v639, 480
        %v700 = vadd.s32 %v639, 488
        %v701 = vadd.s32 %v639, 496
        %v702 = vadd.s32 %v639, 504
        %vm703 = vcmp.lt.s32.totalorder %v639, 512
        %vm704 = vcmp.lt.s32.totalorder %v640, 512
        %vm705 = vcmp.lt.s32.totalorder %v641, 512
        %vm706 = vcmp.lt.s32.totalorder %v642, 512
        %vm707 = vcmp.lt.s32.totalorder %v643, 512
        %vm708 = vcmp.lt.s32.totalorder %v644, 512
        %vm709 = vcmp.lt.s32.totalorder %v645, 512
        %vm710 = vcmp.lt.s32.totalorder %v646, 512
        %vm711 = vcmp.lt.s32.totalorder %v647, 512
        %vm712 = vcmp.lt.s32.totalorder %v648, 512
        %vm713 = vcmp.lt.s32.totalorder %v649, 512
        %vm714 = vcmp.lt.s32.totalorder %v650, 512
        %vm715 = vcmp.lt.s32.totalorder %v651, 512
        %vm716 = vcmp.lt.s32.totalorder %v652, 512
        %vm717 = vcmp.lt.s32.totalorder %v653, 512
        %vm718 = vcmp.lt.s32.totalorder %v654, 512
        %vm719 = vcmp.lt.s32.totalorder %v655, 512
        %vm720 = vcmp.lt.s32.totalorder %v656, 512
        %vm721 = vcmp.lt.s32.totalorder %v657, 512
        %vm722 = vcmp.lt.s32.totalorder %v658, 512
        %vm723 = vcmp.lt.s32.totalorder %v659, 512
        %vm724 = vcmp.lt.s32.totalorder %v660, 512
        %vm725 = vcmp.lt.s32.totalorder %v661, 512
        %vm726 = vcmp.lt.s32.totalorder %v662, 512
        %vm727 = vcmp.lt.s32.totalorder %v663, 512
        %vm728 = vcmp.lt.s32.totalorder %v664, 512
        %vm729 = vcmp.lt.s32.totalorder %v665, 512
        %vm730 = vcmp.lt.s32.totalorder %v666, 512
        %vm731 = vcmp.lt.s32.totalorder %v667, 512
        %vm732 = vcmp.lt.s32.totalorder %v668, 512
        %vm733 = vcmp.lt.s32.totalorder %v669, 512
        %vm734 = vcmp.lt.s32.totalorder %v670, 512
        %vm735 = vcmp.lt.s32.totalorder %v671, 512
        %vm736 = vcmp.lt.s32.totalorder %v672, 512
        %vm737 = vcmp.lt.s32.totalorder %v673, 512
        %vm738 = vcmp.lt.s32.totalorder %v674, 512
        %vm739 = vcmp.lt.s32.totalorder %v675, 512
        %vm740 = vcmp.lt.s32.totalorder %v676, 512
        %vm741 = vcmp.lt.s32.totalorder %v677, 512
        %vm742 = vcmp.lt.s32.totalorder %v678, 512
        %vm743 = vcmp.lt.s32.totalorder %v679, 512
        %vm744 = vcmp.lt.s32.totalorder %v680, 512
        %vm745 = vcmp.lt.s32.totalorder %v681, 512
        %vm746 = vcmp.lt.s32.totalorder %v682, 512
        %vm747 = vcmp.lt.s32.totalorder %v683, 512
        %vm748 = vcmp.lt.s32.totalorder %v684, 512
        %vm749 = vcmp.lt.s32.totalorder %v685, 512
        %vm750 = vcmp.lt.s32.totalorder %v686, 512
        %vm751 = vcmp.lt.s32.totalorder %v687, 512
        %vm752 = vcmp.lt.s32.totalorder %v688, 512
        %vm753 = vcmp.lt.s32.totalorder %v689, 512
        %vm754 = vcmp.lt.s32.totalorder %v690, 512
        %vm755 = vcmp.lt.s32.totalorder %v691, 512
        %vm756 = vcmp.lt.s32.totalorder %v692, 512
        %vm757 = vcmp.lt.s32.totalorder %v693, 512
        %vm758 = vcmp.lt.s32.totalorder %v694, 512
        %vm759 = vcmp.lt.s32.totalorder %v695, 512
        %vm760 = vcmp.lt.s32.totalorder %v696, 512
        %vm761 = vcmp.lt.s32.totalorder %v697, 512
        %vm762 = vcmp.lt.s32.totalorder %v698, 512
        %vm763 = vcmp.lt.s32.totalorder %v699, 512
        %vm764 = vcmp.lt.s32.totalorder %v700, 512
        %vm765 = vcmp.lt.s32.totalorder %v701, 512
        %vm766 = vcmp.lt.s32.totalorder %v702, 512
        %v767 = vsub.f32 %v504, %v637
        %v768 = vsub.f32 %v505, %v637
        %v769 = vsub.f32 %v506, %v637
        %v770 = vsub.f32 %v507, %v637
        %v771 = vsub.f32 %v508, %v637
        %v772 = vsub.f32 %v509, %v637
        %v773 = vsub.f32 %v510, %v637
        %v774 = vsub.f32 %v511, %v637
        %v775 = vsub.f32 %v512, %v637
        %v776 = vsub.f32 %v513, %v637
        %v777 = vsub.f32 %v514, %v637
        %v778 = vsub.f32 %v515, %v637
        %v779 = vsub.f32 %v516, %v637
        %v780 = vsub.f32 %v517, %v637
        %v781 = vsub.f32 %v518, %v637
        %v782 = vsub.f32 %v519, %v637
        %v783 = vsub.f32 %v520, %v637
        %v784 = vsub.f32 %v521, %v637
        %v785 = vsub.f32 %v522, %v637
        %v786 = vsub.f32 %v523, %v637
        %v787 = vsub.f32 %v524, %v637
        %v788 = vsub.f32 %v525, %v637
        %v789 = vsub.f32 %v526, %v637
        %v790 = vsub.f32 %v527, %v637
        %v791 = vsub.f32 %v528, %v637
        %v792 = vsub.f32 %v529, %v637
        %v793 = vsub.f32 %v530, %v637
        %v794 = vsub.f32 %v531, %v637
        %v795 = vsub.f32 %v532, %v637
        %v796 = vsub.f32 %v533, %v637
        %v797 = vsub.f32 %v534, %v637
        %v798 = vsub.f32 %v535, %v637
        %v799 = vsub.f32 %v536, %v637
        %v800 = vsub.f32 %v537, %v637
        %v801 = vsub.f32 %v538, %v637
        %v802 = vsub.f32 %v539, %v637
        %v803 = vsub.f32 %v540, %v637
        %v804 = vsub.f32 %v541, %v637
        %v805 = vsub.f32 %v542, %v637
        %v806 = vsub.f32 %v543, %v637
        %v807 = vsub.f32 %v544, %v637
        %v808 = vsub.f32 %v545, %v637
        %v809 = vsub.f32 %v546, %v637
        %v810 = vsub.f32 %v547, %v637
        %v811 = vsub.f32 %v548, %v637
        %v812 = vsub.f32 %v549, %v637
        %v813 = vsub.f32 %v550, %v637
        %v814 = vsub.f32 %v551, %v637
        %v815 = vsub.f32 %v552, %v637
        %v816 = vsub.f32 %v553, %v637
        %v817 = vsub.f32 %v554, %v637
        %v818 = vsub.f32 %v555, %v637
        %v819 = vsub.f32 %v556, %v637
        %v820 = vsub.f32 %v557, %v637
        %v821 = vsub.f32 %v558, %v637
        %v822 = vsub.f32 %v559, %v637
        %v823 = vsub.f32 %v560, %v637
        %v824 = vsub.f32 %v561, %v637
        %v825 = vsub.f32 %v562, %v637
        %v826 = vsub.f32 %v563, %v637
        %v827 = vsub.f32 %v564, %v637
        %v828 = vsub.f32 %v565, %v637
        %v829 = vsub.f32 %v566, %v637
        %v830 = vsub.f32 %v567, %v637
        %v831 = vsel %vm703, 1, 0
        %v832 = vsel %vm704, 1, 0
        %v833 = vsel %vm705, 1, 0
        %v834 = vsel %vm706, 1, 0
        %v835 = vsel %vm707, 1, 0
        %v836 = vsel %vm708, 1, 0
        %v837 = vsel %vm709, 1, 0
        %v838 = vsel %vm710, 1, 0
        %v839 = vsel %vm711, 1, 0
        %v840 = vsel %vm712, 1, 0
        %v841 = vsel %vm713, 1, 0
        %v842 = vsel %vm714, 1, 0
        %v843 = vsel %vm715, 1, 0
        %v844 = vsel %vm716, 1, 0
        %v845 = vsel %vm717, 1, 0
        %v846 = vsel %vm718, 1, 0
        %v847 = vsel %vm719, 1, 0
        %v848 = vsel %vm720, 1, 0
        %v849 = vsel %vm721, 1, 0
        %v850 = vsel %vm722, 1, 0
        %v851 = vsel %vm723, 1, 0
        %v852 = vsel %vm724, 1, 0
        %v853 = vsel %vm725, 1, 0
        %v854 = vsel %vm726, 1, 0
        %v855 = vsel %vm727, 1, 0
        %v856 = vsel %vm728, 1, 0
        %v857 = vsel %vm729, 1, 0
        %v858 = vsel %vm730, 1, 0
        %v859 = vsel %vm731, 1, 0
        %v860 = vsel %vm732, 1, 0
        %v861 = vsel %vm733, 1, 0
        %v862 = vsel %vm734, 1, 0
        %v863 = vsel %vm735, 1, 0
        %v864 = vsel %vm736, 1, 0
        %v865 = vsel %vm737, 1, 0
        %v866 = vsel %vm738, 1, 0
        %v867 = vsel %vm739, 1, 0
        %v868 = vsel %vm740, 1, 0
        %v869 = vsel %vm741, 1, 0
        %v870 = vsel %vm742, 1, 0
        %v871 = vsel %vm743, 1, 0
        %v872 = vsel %vm744, 1, 0
        %v873 = vsel %vm745, 1, 0
        %v874 = vsel %vm746, 1, 0
        %v875 = vsel %vm747, 1, 0
        %v876 = vsel %vm748, 1, 0
        %v877 = vsel %vm749, 1, 0
        %v878 = vsel %vm750, 1, 0
        %v879 = vsel %vm751, 1, 0
        %v880 = vsel %vm752, 1, 0
        %v881 = vsel %vm753, 1, 0
        %v882 = vsel %vm754, 1, 0
        %v883 = vsel %vm755, 1, 0
        %v884 = vsel %vm756, 1, 0
        %v885 = vsel %vm757, 1, 0
        %v886 = vsel %vm758, 1, 0
        %v887 = vsel %vm759, 1, 0
        %v888 = vsel %vm760, 1, 0
        %v889 = vsel %vm761, 1, 0
        %v890 = vsel %vm762, 1, 0
        %v891 = vsel %vm763, 1, 0
        %v892 = vsel %vm764, 1, 0
        %v893 = vsel %vm765, 1, 0
        %v894 = vsel %vm766, 1, 0
        %vm895 = vcmp.eq.s32.totalorder %v831, 1
        %vm896 = vcmp.eq.s32.totalorder %v832, 1
        %vm897 = vcmp.eq.s32.totalorder %v833, 1
        %vm898 = vcmp.eq.s32.totalorder %v834, 1
        %vm899 = vcmp.eq.s32.totalorder %v835, 1
        %vm900 = vcmp.eq.s32.totalorder %v836, 1
        %vm901 = vcmp.eq.s32.totalorder %v837, 1
        %vm902 = vcmp.eq.s32.totalorder %v838, 1
        %vm903 = vcmp.eq.s32.totalorder %v839, 1
        %vm904 = vcmp.eq.s32.totalorder %v840, 1
        %vm905 = vcmp.eq.s32.totalorder %v841, 1
        %vm906 = vcmp.eq.s32.totalorder %v842, 1
        %vm907 = vcmp.eq.s32.totalorder %v843, 1
        %vm908 = vcmp.eq.s32.totalorder %v844, 1
        %vm909 = vcmp.eq.s32.totalorder %v845, 1
        %vm910 = vcmp.eq.s32.totalorder %v846, 1
        %vm911 = vcmp.eq.s32.totalorder %v847, 1
        %vm912 = vcmp.eq.s32.totalorder %v848, 1
        %vm913 = vcmp.eq.s32.totalorder %v849, 1
        %vm914 = vcmp.eq.s32.totalorder %v850, 1
        %vm915 = vcmp.eq.s32.totalorder %v851, 1
        %vm916 = vcmp.eq.s32.totalorder %v852, 1
        %vm917 = vcmp.eq.s32.totalorder %v853, 1
        %vm918 = vcmp.eq.s32.totalorder %v854, 1
        %vm919 = vcmp.eq.s32.totalorder %v855, 1
        %vm920 = vcmp.eq.s32.totalorder %v856, 1
        %vm921 = vcmp.eq.s32.totalorder %v857, 1
        %vm922 = vcmp.eq.s32.totalorder %v858, 1
        %vm923 = vcmp.eq.s32.totalorder %v859, 1
        %vm924 = vcmp.eq.s32.totalorder %v860, 1
        %vm925 = vcmp.eq.s32.totalorder %v861, 1
        %vm926 = vcmp.eq.s32.totalorder %v862, 1
        %vm927 = vcmp.eq.s32.totalorder %v863, 1
        %vm928 = vcmp.eq.s32.totalorder %v864, 1
        %vm929 = vcmp.eq.s32.totalorder %v865, 1
        %vm930 = vcmp.eq.s32.totalorder %v866, 1
        %vm931 = vcmp.eq.s32.totalorder %v867, 1
        %vm932 = vcmp.eq.s32.totalorder %v868, 1
        %vm933 = vcmp.eq.s32.totalorder %v869, 1
        %vm934 = vcmp.eq.s32.totalorder %v870, 1
        %vm935 = vcmp.eq.s32.totalorder %v871, 1
        %vm936 = vcmp.eq.s32.totalorder %v872, 1
        %vm937 = vcmp.eq.s32.totalorder %v873, 1
        %vm938 = vcmp.eq.s32.totalorder %v874, 1
        %vm939 = vcmp.eq.s32.totalorder %v875, 1
        %vm940 = vcmp.eq.s32.totalorder %v876, 1
        %vm941 = vcmp.eq.s32.totalorder %v877, 1
        %vm942 = vcmp.eq.s32.totalorder %v878, 1
        %vm943 = vcmp.eq.s32.totalorder %v879, 1
        %vm944 = vcmp.eq.s32.totalorder %v880, 1
        %vm945 = vcmp.eq.s32.totalorder %v881, 1
        %vm946 = vcmp.eq.s32.totalorder %v882, 1
        %vm947 = vcmp.eq.s32.totalorder %v883, 1
        %vm948 = vcmp.eq.s32.totalorder %v884, 1
        %vm949 = vcmp.eq.s32.totalorder %v885, 1
        %vm950 = vcmp.eq.s32.totalorder %v886, 1
        %vm951 = vcmp.eq.s32.totalorder %v887, 1
        %vm952 = vcmp.eq.s32.totalorder %v888, 1
        %vm953 = vcmp.eq.s32.totalorder %v889, 1
        %vm954 = vcmp.eq.s32.totalorder %v890, 1
        %vm955 = vcmp.eq.s32.totalorder %v891, 1
        %vm956 = vcmp.eq.s32.totalorder %v892, 1
        %vm957 = vcmp.eq.s32.totalorder %v893, 1
        %vm958 = vcmp.eq.s32.totalorder %v894, 1
        %v959 = vsel %vm895, %v767, 0.0
        %v960 = vsel %vm896, %v768, 0.0
        %v961 = vsel %vm897, %v769, 0.0
        %v962 = vsel %vm898, %v770, 0.0
        %v963 = vsel %vm899, %v771, 0.0
        %v964 = vsel %vm900, %v772, 0.0
        %v965 = vsel %vm901, %v773, 0.0
        %v966 = vsel %vm902, %v774, 0.0
        %v967 = vsel %vm903, %v775, 0.0
        %v968 = vsel %vm904, %v776, 0.0
        %v969 = vsel %vm905, %v777, 0.0
        %v970 = vsel %vm906, %v778, 0.0
        %v971 = vsel %vm907, %v779, 0.0
        %v972 = vsel %vm908, %v780, 0.0
        %v973 = vsel %vm909, %v781, 0.0
        %v974 = vsel %vm910, %v782, 0.0
        %v975 = vsel %vm911, %v783, 0.0
        %v976 = vsel %vm912, %v784, 0.0
        %v977 = vsel %vm913, %v785, 0.0
        %v978 = vsel %vm914, %v786, 0.0
        %v979 = vsel %vm915, %v787, 0.0
        %v980 = vsel %vm916, %v788, 0.0
        %v981 = vsel %vm917, %v789, 0.0
        %v982 = vsel %vm918, %v790, 0.0
        %v983 = vsel %vm919, %v791, 0.0
        %v984 = vsel %vm920, %v792, 0.0
        %v985 = vsel %vm921, %v793, 0.0
        %v986 = vsel %vm922, %v794, 0.0
        %v987 = vsel %vm923, %v795, 0.0
        %v988 = vsel %vm924, %v796, 0.0
        %v989 = vsel %vm925, %v797, 0.0
        %v990 = vsel %vm926, %v798, 0.0
        %v991 = vsel %vm927, %v799, 0.0
        %v992 = vsel %vm928, %v800, 0.0
        %v993 = vsel %vm929, %v801, 0.0
        %v994 = vsel %vm930, %v802, 0.0
        %v995 = vsel %vm931, %v803, 0.0
        %v996 = vsel %vm932, %v804, 0.0
        %v997 = vsel %vm933, %v805, 0.0
        %v998 = vsel %vm934, %v806, 0.0
        %v999 = vsel %vm935, %v807, 0.0
        %v1000 = vsel %vm936, %v808, 0.0
        %v1001 = vsel %vm937, %v809, 0.0
        %v1002 = vsel %vm938, %v810, 0.0
        %v1003 = vsel %vm939, %v811, 0.0
        %v1004 = vsel %vm940, %v812, 0.0
        %v1005 = vsel %vm941, %v813, 0.0
        %v1006 = vsel %vm942, %v814, 0.0
        %v1007 = vsel %vm943, %v815, 0.0
        %v1008 = vsel %vm944, %v816, 0.0
        %v1009 = vsel %vm945, %v817, 0.0
        %v1010 = vsel %vm946, %v818, 0.0
        %v1011 = vsel %vm947, %v819, 0.0
        %v1012 = vsel %vm948, %v820, 0.0
        %v1013 = vsel %vm949, %v821, 0.0
        %v1014 = vsel %vm950, %v822, 0.0
        %v1015 = vsel %vm951, %v823, 0.0
        %v1016 = vsel %vm952, %v824, 0.0
        %v1017 = vsel %vm953, %v825, 0.0
        %v1018 = vsel %vm954, %v826, 0.0
        %v1019 = vsel %vm955, %v827, 0.0
        %v1020 = vsel %vm956, %v828, 0.0
        %v1021 = vsel %vm957, %v829, 0.0
        %v1022 = vsel %vm958, %v830, 0.0
        %v1023 = vmul.f32 %v959, %v959
        %v1024 = vmul.f32 %v960, %v960
        %v1025 = vmul.f32 %v961, %v961
        %v1026 = vmul.f32 %v962, %v962
        %v1027 = vmul.f32 %v963, %v963
        %v1028 = vmul.f32 %v964, %v964
        %v1029 = vmul.f32 %v965, %v965
        %v1030 = vmul.f32 %v966, %v966
        %v1031 = vmul.f32 %v967, %v967
        %v1032 = vmul.f32 %v968, %v968
        %v1033 = vmul.f32 %v969, %v969
        %v1034 = vmul.f32 %v970, %v970
        %v1035 = vmul.f32 %v971, %v971
        %v1036 = vmul.f32 %v972, %v972
        %v1037 = vmul.f32 %v973, %v973
        %v1038 = vmul.f32 %v974, %v974
        %v1039 = vmul.f32 %v975, %v975
        %v1040 = vmul.f32 %v976, %v976
        %v1041 = vmul.f32 %v977, %v977
        %v1042 = vmul.f32 %v978, %v978
        %v1043 = vmul.f32 %v979, %v979
        %v1044 = vmul.f32 %v980, %v980
        %v1045 = vmul.f32 %v981, %v981
        %v1046 = vmul.f32 %v982, %v982
        %v1047 = vmul.f32 %v983, %v983
        %v1048 = vmul.f32 %v984, %v984
        %v1049 = vmul.f32 %v985, %v985
        %v1050 = vmul.f32 %v986, %v986
        %v1051 = vmul.f32 %v987, %v987
        %v1052 = vmul.f32 %v988, %v988
        %v1053 = vmul.f32 %v989, %v989
        %v1054 = vmul.f32 %v990, %v990
        %v1055 = vmul.f32 %v991, %v991
        %v1056 = vmul.f32 %v992, %v992
        %v1057 = vmul.f32 %v993, %v993
        %v1058 = vmul.f32 %v994, %v994
        %v1059 = vmul.f32 %v995, %v995
        %v1060 = vmul.f32 %v996, %v996
        %v1061 = vmul.f32 %v997, %v997
        %v1062 = vmul.f32 %v998, %v998
        %v1063 = vmul.f32 %v999, %v999
        %v1064 = vmul.f32 %v1000, %v1000
        %v1065 = vmul.f32 %v1001, %v1001
        %v1066 = vmul.f32 %v1002, %v1002
        %v1067 = vmul.f32 %v1003, %v1003
        %v1068 = vmul.f32 %v1004, %v1004
        %v1069 = vmul.f32 %v1005, %v1005
        %v1070 = vmul.f32 %v1006, %v1006
        %v1071 = vmul.f32 %v1007, %v1007
        %v1072 = vmul.f32 %v1008, %v1008
        %v1073 = vmul.f32 %v1009, %v1009
        %v1074 = vmul.f32 %v1010, %v1010
        %v1075 = vmul.f32 %v1011, %v1011
        %v1076 = vmul.f32 %v1012, %v1012
        %v1077 = vmul.f32 %v1013, %v1013
        %v1078 = vmul.f32 %v1014, %v1014
        %v1079 = vmul.f32 %v1015, %v1015
        %v1080 = vmul.f32 %v1016, %v1016
        %v1081 = vmul.f32 %v1017, %v1017
        %v1082 = vmul.f32 %v1018, %v1018
        %v1083 = vmul.f32 %v1019, %v1019
        %v1084 = vmul.f32 %v1020, %v1020
        %v1085 = vmul.f32 %v1021, %v1021
        %v1086 = vmul.f32 %v1022, %v1022
        %v1087 = vadd.f32 %v1023, %v1024
        %v1088 = vadd.f32 %v1087, %v1025
        %v1089 = vadd.f32 %v1088, %v1026
        %v1090 = vadd.f32 %v1089, %v1027
        %v1091 = vadd.f32 %v1090, %v1028
        %v1092 = vadd.f32 %v1091, %v1029
        %v1093 = vadd.f32 %v1092, %v1030
        %v1094 = vadd.f32 %v1093, %v1031
        %v1095 = vadd.f32 %v1094, %v1032
        %v1096 = vadd.f32 %v1095, %v1033
        %v1097 = vadd.f32 %v1096, %v1034
        %v1098 = vadd.f32 %v1097, %v1035
        %v1099 = vadd.f32 %v1098, %v1036
        %v1100 = vadd.f32 %v1099, %v1037
        %v1101 = vadd.f32 %v1100, %v1038
        %v1102 = vadd.f32 %v1101, %v1039
        %v1103 = vadd.f32 %v1102, %v1040
        %v1104 = vadd.f32 %v1103, %v1041
        %v1105 = vadd.f32 %v1104, %v1042
        %v1106 = vadd.f32 %v1105, %v1043
        %v1107 = vadd.f32 %v1106, %v1044
        %v1108 = vadd.f32 %v1107, %v1045
        %v1109 = vadd.f32 %v1108, %v1046
        %v1110 = vadd.f32 %v1109, %v1047
        %v1111 = vadd.f32 %v1110, %v1048
        %v1112 = vadd.f32 %v1111, %v1049
        %v1113 = vadd.f32 %v1112, %v1050
        %v1114 = vadd.f32 %v1113, %v1051
        %v1115 = vadd.f32 %v1114, %v1052
        %v1116 = vadd.f32 %v1115, %v1053
        %v1117 = vadd.f32 %v1116, %v1054
        %v1118 = vadd.f32 %v1117, %v1055
        %v1119 = vadd.f32 %v1118, %v1056
        %v1120 = vadd.f32 %v1119, %v1057
        %v1121 = vadd.f32 %v1120, %v1058
        %v1122 = vadd.f32 %v1121, %v1059
        %v1123 = vadd.f32 %v1122, %v1060
        %v1124 = vadd.f32 %v1123, %v1061
        %v1125 = vadd.f32 %v1124, %v1062
        %v1126 = vadd.f32 %v1125, %v1063
        %v1127 = vadd.f32 %v1126, %v1064
        %v1128 = vadd.f32 %v1127, %v1065
        %v1129 = vadd.f32 %v1128, %v1066
        %v1130 = vadd.f32 %v1129, %v1067
        %v1131 = vadd.f32 %v1130, %v1068
        %v1132 = vadd.f32 %v1131, %v1069
        %v1133 = vadd.f32 %v1132, %v1070
        %v1134 = vadd.f32 %v1133, %v1071
        %v1135 = vadd.f32 %v1134, %v1072
        %v1136 = vadd.f32 %v1135, %v1073
        %v1137 = vadd.f32 %v1136, %v1074
        %v1138 = vadd.f32 %v1137, %v1075
        %v1139 = vadd.f32 %v1138, %v1076
        %v1140 = vadd.f32 %v1139, %v1077
        %v1141 = vadd.f32 %v1140, %v1078
        %v1142 = vadd.f32 %v1141, %v1079
        %v1143 = vadd.f32 %v1142, %v1080
        %v1144 = vadd.f32 %v1143, %v1081
        %v1145 = vadd.f32 %v1144, %v1082
        %v1146 = vadd.f32 %v1145, %v1083
        %v1147 = vadd.f32 %v1146, %v1084
        %v1148 = vadd.f32 %v1147, %v1085
        %v1149 = vadd.f32 %v1148, %v1086
        %v1150 = vrot.slane %v1149, 4
        %v1151 = vadd.f32 %v1149, %v1150
        %v1152 = vrot.slane %v1151, 2
        %v1153 = vadd.f32 %v1151, %v1152
        %v1154 = vrot.slane %v1153, 1
        %v1155 = vadd.f32 %v1153, %v1154
        %v1156 = vmul.f32 %v1155, 0.001953125
        %v1157 = vadd.f32 %v1156, 1e-05
        %v1158 = vrsqrt.pop %v1157
        %v1159 = vmul.f32 %v1158, %v1157
        %v1160 = vmul.f32 %v1159, %v1158
        %v1161 = vmul.f32 0.5, %v1160
        %v1162 = vsub.f32 1.5, %v1161
        %v1163 = vmul.f32 %v1158, %v1162
        %vm1164 = vweird.f32 %v1157
        %vm1165 = vweird.f32 %v1158
        %vm1166 = vmor %vm1164, %vm1165
        %v1167 = vsel %vm1166, %v1158, %v1163
        %v1168 = vld [vmem:[%s2] sm:$0x1]
        %v1169 = vmul.f32 %v1168, %v1167
        %v1170 = vld [vmem:[%s3] sm:$0x1]
        %v1171 = vmul.f32 %v637, %v1169
        %v1172 = vsub.f32 %v1170, %v1171
        %v1174 = vperm.slane %v1169, 0
        %v1176 = vmul.f32 %v504, %v1174
        %v1177 = vmul.f32 %v505, %v1174
        %v1178 = vmul.f32 %v506, %v1174
        %v1179 = vmul.f32 %v507, %v1174
        %v1180 = vmul.f32 %v508, %v1174
        %v1181 = vmul.f32 %v509, %v1174
        %v1182 = vmul.f32 %v510, %v1174
        %v1183 = vmul.f32 %v511, %v1174
        %v1184 = vmul.f32 %v512, %v1174
        %v1185 = vmul.f32 %v513, %v1174
        %v1186 = vmul.f32 %v514, %v1174
        %v1187 = vmul.f32 %v515, %v1174
        %v1188 = vmul.f32 %v516, %v1174
        %v1189 = vmul.f32 %v517, %v1174
        %v1190 = vmul.f32 %v518, %v1174
        %v1191 = vmul.f32 %v519, %v1174
        %v1192 = vmul.f32 %v520, %v1174
        %v1193 = vmul.f32 %v521, %v1174
        %v1194 = vmul.f32 %v522, %v1174
        %v1195 = vmul.f32 %v523, %v1174
        %v1196 = vmul.f32 %v524, %v1174
        %v1197 = vmul.f32 %v525, %v1174
        %v1198 = vmul.f32 %v526, %v1174
        %v1199 = vmul.f32 %v527, %v1174
        %v1200 = vmul.f32 %v528, %v1174
        %v1201 = vmul.f32 %v529, %v1174
        %v1202 = vmul.f32 %v530, %v1174
        %v1203 = vmul.f32 %v531, %v1174
        %v1204 = vmul.f32 %v532, %v1174
        %v1205 = vmul.f32 %v533, %v1174
        %v1206 = vmul.f32 %v534, %v1174
        %v1207 = vmul.f32 %v535, %v1174
        %v1208 = vmul.f32 %v536, %v1174
        %v1209 = vmul.f32 %v537, %v1174
        %v1210 = vmul.f32 %v538, %v1174
        %v1211 = vmul.f32 %v539, %v1174
        %v1212 = vmul.f32 %v540, %v1174
        %v1213 = vmul.f32 %v541, %v1174
        %v1214 = vmul.f32 %v542, %v1174
        %v1215 = vmul.f32 %v543, %v1174
        %v1216 = vmul.f32 %v544, %v1174
        %v1217 = vmul.f32 %v545, %v1174
        %v1218 = vmul.f32 %v546, %v1174
        %v1219 = vmul.f32 %v547, %v1174
        %v1220 = vmul.f32 %v548, %v1174
        %v1221 = vmul.f32 %v549, %v1174
        %v1222 = vmul.f32 %v550, %v1174
        %v1223 = vmul.f32 %v551, %v1174
        %v1224 = vmul.f32 %v552, %v1174
        %v1225 = vmul.f32 %v553, %v1174
        %v1226 = vmul.f32 %v554, %v1174
        %v1227 = vmul.f32 %v555, %v1174
        %v1228 = vmul.f32 %v556, %v1174
        %v1229 = vmul.f32 %v557, %v1174
        %v1230 = vmul.f32 %v558, %v1174
        %v1231 = vmul.f32 %v559, %v1174
        %v1232 = vmul.f32 %v560, %v1174
        %v1233 = vmul.f32 %v561, %v1174
        %v1234 = vmul.f32 %v562, %v1174
        %v1235 = vmul.f32 %v563, %v1174
        %v1236 = vmul.f32 %v564, %v1174
        %v1237 = vmul.f32 %v565, %v1174
        %v1238 = vmul.f32 %v566, %v1174
        %v1239 = vmul.f32 %v567, %v1174
        %v1241 = vperm.slane %v1172, 0
        %v1243 = vadd.f32 %v1176, %v1241
        %v1244 = vadd.f32 %v1177, %v1241
        %v1245 = vadd.f32 %v1178, %v1241
        %v1246 = vadd.f32 %v1179, %v1241
        %v1247 = vadd.f32 %v1180, %v1241
        %v1248 = vadd.f32 %v1181, %v1241
        %v1249 = vadd.f32 %v1182, %v1241
        %v1250 = vadd.f32 %v1183, %v1241
        %v1251 = vadd.f32 %v1184, %v1241
        %v1252 = vadd.f32 %v1185, %v1241
        %v1253 = vadd.f32 %v1186, %v1241
        %v1254 = vadd.f32 %v1187, %v1241
        %v1255 = vadd.f32 %v1188, %v1241
        %v1256 = vadd.f32 %v1189, %v1241
        %v1257 = vadd.f32 %v1190, %v1241
        %v1258 = vadd.f32 %v1191, %v1241
        %v1259 = vadd.f32 %v1192, %v1241
        %v1260 = vadd.f32 %v1193, %v1241
        %v1261 = vadd.f32 %v1194, %v1241
        %v1262 = vadd.f32 %v1195, %v1241
        %v1263 = vadd.f32 %v1196, %v1241
        %v1264 = vadd.f32 %v1197, %v1241
        %v1265 = vadd.f32 %v1198, %v1241
        %v1266 = vadd.f32 %v1199, %v1241
        %v1267 = vadd.f32 %v1200, %v1241
        %v1268 = vadd.f32 %v1201, %v1241
        %v1269 = vadd.f32 %v1202, %v1241
        %v1270 = vadd.f32 %v1203, %v1241
        %v1271 = vadd.f32 %v1204, %v1241
        %v1272 = vadd.f32 %v1205, %v1241
        %v1273 = vadd.f32 %v1206, %v1241
        %v1274 = vadd.f32 %v1207, %v1241
        %v1275 = vadd.f32 %v1208, %v1241
        %v1276 = vadd.f32 %v1209, %v1241
        %v1277 = vadd.f32 %v1210, %v1241
        %v1278 = vadd.f32 %v1211, %v1241
        %v1279 = vadd.f32 %v1212, %v1241
        %v1280 = vadd.f32 %v1213, %v1241
        %v1281 = vadd.f32 %v1214, %v1241
        %v1282 = vadd.f32 %v1215, %v1241
        %v1283 = vadd.f32 %v1216, %v1241
        %v1284 = vadd.f32 %v1217, %v1241
        %v1285 = vadd.f32 %v1218, %v1241
        %v1286 = vadd.f32 %v1219, %v1241
        %v1287 = vadd.f32 %v1220, %v1241
        %v1288 = vadd.f32 %v1221, %v1241
        %v1289 = vadd.f32 %v1222, %v1241
        %v1290 = vadd.f32 %v1223, %v1241
        %v1291 = vadd.f32 %v1224, %v1241
        %v1292 = vadd.f32 %v1225, %v1241
        %v1293 = vadd.f32 %v1226, %v1241
        %v1294 = vadd.f32 %v1227, %v1241
        %v1295 = vadd.f32 %v1228, %v1241
        %v1296 = vadd.f32 %v1229, %v1241
        %v1297 = vadd.f32 %v1230, %v1241
        %v1298 = vadd.f32 %v1231, %v1241
        %v1299 = vadd.f32 %v1232, %v1241
        %v1300 = vadd.f32 %v1233, %v1241
        %v1301 = vadd.f32 %v1234, %v1241
        %v1302 = vadd.f32 %v1235, %v1241
        %v1303 = vadd.f32 %v1236, %v1241
        %v1304 = vadd.f32 %v1237, %v1241
        %v1305 = vadd.f32 %v1238, %v1241
        %v1306 = vadd.f32 %v1239, %v1241
        %vm1307 = vcmp.ge.f32.partialorder %v1243, 0.0
        %vm1308 = vcmp.ge.f32.partialorder %v1244, 0.0
        %vm1309 = vcmp.ge.f32.partialorder %v1245, 0.0
        %vm1310 = vcmp.ge.f32.partialorder %v1246, 0.0
        %vm1311 = vcmp.ge.f32.partialorder %v1247, 0.0
        %vm1312 = vcmp.ge.f32.partialorder %v1248, 0.0
        %vm1313 = vcmp.ge.f32.partialorder %v1249, 0.0
        %vm1314 = vcmp.ge.f32.partialorder %v1250, 0.0
        %vm1315 = vcmp.ge.f32.partialorder %v1251, 0.0
        %vm1316 = vcmp.ge.f32.partialorder %v1252, 0.0
        %vm1317 = vcmp.ge.f32.partialorder %v1253, 0.0
        %vm1318 = vcmp.ge.f32.partialorder %v1254, 0.0
        %vm1319 = vcmp.ge.f32.partialorder %v1255, 0.0
        %vm1320 = vcmp.ge.f32.partialorder %v1256, 0.0
        %vm1321 = vcmp.ge.f32.partialorder %v1257, 0.0
        %vm1322 = vcmp.ge.f32.partialorder %v1258, 0.0
        %vm1323 = vcmp.ge.f32.partialorder %v1259, 0.0
        %vm1324 = vcmp.ge.f32.partialorder %v1260, 0.0
        %vm1325 = vcmp.ge.f32.partialorder %v1261, 0.0
        %vm1326 = vcmp.ge.f32.partialorder %v1262, 0.0
        %vm1327 = vcmp.ge.f32.partialorder %v1263, 0.0
        %vm1328 = vcmp.ge.f32.partialorder %v1264, 0.0
        %vm1329 = vcmp.ge.f32.partialorder %v1265, 0.0
        %vm1330 = vcmp.ge.f32.partialorder %v1266, 0.0
        %vm1331 = vcmp.ge.f32.partialorder %v1267, 0.0
        %vm1332 = vcmp.ge.f32.partialorder %v1268, 0.0
        %vm1333 = vcmp.ge.f32.partialorder %v1269, 0.0
        %vm1334 = vcmp.ge.f32.partialorder %v1270, 0.0
        %vm1335 = vcmp.ge.f32.partialorder %v1271, 0.0
        %vm1336 = vcmp.ge.f32.partialorder %v1272, 0.0
        %vm1337 = vcmp.ge.f32.partialorder %v1273, 0.0
        %vm1338 = vcmp.ge.f32.partialorder %v1274, 0.0
        %vm1339 = vcmp.ge.f32.partialorder %v1275, 0.0
        %vm1340 = vcmp.ge.f32.partialorder %v1276, 0.0
        %vm1341 = vcmp.ge.f32.partialorder %v1277, 0.0
        %vm1342 = vcmp.ge.f32.partialorder %v1278, 0.0
        %vm1343 = vcmp.ge.f32.partialorder %v1279, 0.0
        %vm1344 = vcmp.ge.f32.partialorder %v1280, 0.0
        %vm1345 = vcmp.ge.f32.partialorder %v1281, 0.0
        %vm1346 = vcmp.ge.f32.partialorder %v1282, 0.0
        %vm1347 = vcmp.ge.f32.partialorder %v1283, 0.0
        %vm1348 = vcmp.ge.f32.partialorder %v1284, 0.0
        %vm1349 = vcmp.ge.f32.partialorder %v1285, 0.0
        %vm1350 = vcmp.ge.f32.partialorder %v1286, 0.0
        %vm1351 = vcmp.ge.f32.partialorder %v1287, 0.0
        %vm1352 = vcmp.ge.f32.partialorder %v1288, 0.0
        %vm1353 = vcmp.ge.f32.partialorder %v1289, 0.0
        %vm1354 = vcmp.ge.f32.partialorder %v1290, 0.0
        %vm1355 = vcmp.ge.f32.partialorder %v1291, 0.0
        %vm1356 = vcmp.ge.f32.partialorder %v1292, 0.0
        %vm1357 = vcmp.ge.f32.partialorder %v1293, 0.0
        %vm1358 = vcmp.ge.f32.partialorder %v1294, 0.0
        %vm1359 = vcmp.ge.f32.partialorder %v1295, 0.0
        %vm1360 = vcmp.ge.f32.partialorder %v1296, 0.0
        %vm1361 = vcmp.ge.f32.partialorder %v1297, 0.0
        %vm1362 = vcmp.ge.f32.partialorder %v1298, 0.0
        %vm1363 = vcmp.ge.f32.partialorder %v1299, 0.0
        %vm1364 = vcmp.ge.f32.partialorder %v1300, 0.0
        %vm1365 = vcmp.ge.f32.partialorder %v1301, 0.0
        %vm1366 = vcmp.ge.f32.partialorder %v1302, 0.0
        %vm1367 = vcmp.ge.f32.partialorder %v1303, 0.0
        %vm1368 = vcmp.ge.f32.partialorder %v1304, 0.0
        %vm1369 = vcmp.ge.f32.partialorder %v1305, 0.0
        %vm1370 = vcmp.ge.f32.partialorder %v1306, 0.0
        %v1371 = vmul.f32 %v1243, 0.2
        %v1372 = vmul.f32 %v1244, 0.2
        %v1373 = vmul.f32 %v1245, 0.2
        %v1374 = vmul.f32 %v1246, 0.2
        %v1375 = vmul.f32 %v1247, 0.2
        %v1376 = vmul.f32 %v1248, 0.2
        %v1377 = vmul.f32 %v1249, 0.2
        %v1378 = vmul.f32 %v1250, 0.2
        %v1379 = vmul.f32 %v1251, 0.2
        %v1380 = vmul.f32 %v1252, 0.2
        %v1381 = vmul.f32 %v1253, 0.2
        %v1382 = vmul.f32 %v1254, 0.2
        %v1383 = vmul.f32 %v1255, 0.2
        %v1384 = vmul.f32 %v1256, 0.2
        %v1385 = vmul.f32 %v1257, 0.2
        %v1386 = vmul.f32 %v1258, 0.2
        %v1387 = vmul.f32 %v1259, 0.2
        %v1388 = vmul.f32 %v1260, 0.2
        %v1389 = vmul.f32 %v1261, 0.2
        %v1390 = vmul.f32 %v1262, 0.2
        %v1391 = vmul.f32 %v1263, 0.2
        %v1392 = vmul.f32 %v1264, 0.2
        %v1393 = vmul.f32 %v1265, 0.2
        %v1394 = vmul.f32 %v1266, 0.2
        %v1395 = vmul.f32 %v1267, 0.2
        %v1396 = vmul.f32 %v1268, 0.2
        %v1397 = vmul.f32 %v1269, 0.2
        %v1398 = vmul.f32 %v1270, 0.2
        %v1399 = vmul.f32 %v1271, 0.2
        %v1400 = vmul.f32 %v1272, 0.2
        %v1401 = vmul.f32 %v1273, 0.2
        %v1402 = vmul.f32 %v1274, 0.2
        %v1403 = vmul.f32 %v1275, 0.2
        %v1404 = vmul.f32 %v1276, 0.2
        %v1405 = vmul.f32 %v1277, 0.2
        %v1406 = vmul.f32 %v1278, 0.2
        %v1407 = vmul.f32 %v1279, 0.2
        %v1408 = vmul.f32 %v1280, 0.2
        %v1409 = vmul.f32 %v1281, 0.2
        %v1410 = vmul.f32 %v1282, 0.2
        %v1411 = vmul.f32 %v1283, 0.2
        %v1412 = vmul.f32 %v1284, 0.2
        %v1413 = vmul.f32 %v1285, 0.2
        %v1414 = vmul.f32 %v1286, 0.2
        %v1415 = vmul.f32 %v1287, 0.2
        %v1416 = vmul.f32 %v1288, 0.2
        %v1417 = vmul.f32 %v1289, 0.2
        %v1418 = vmul.f32 %v1290, 0.2
        %v1419 = vmul.f32 %v1291, 0.2
        %v1420 = vmul.f32 %v1292, 0.2
        %v1421 = vmul.f32 %v1293, 0.2
        %v1422 = vmul.f32 %v1294, 0.2
        %v1423 = vmul.f32 %v1295, 0.2
        %v1424 = vmul.f32 %v1296, 0.2
        %v1425 = vmul.f32 %v1297, 0.2
        %v1426 = vmul.f32 %v1298, 0.2
        %v1427 = vmul.f32 %v1299, 0.2
        %v1428 = vmul.f32 %v1300, 0.2
        %v1429 = vmul.f32 %v1301, 0.2
        %v1430 = vmul.f32 %v1302, 0.2
        %v1431 = vmul.f32 %v1303, 0.2
        %v1432 = vmul.f32 %v1304, 0.2
        %v1433 = vmul.f32 %v1305, 0.2
        %v1434 = vmul.f32 %v1306, 0.2
        %v1435 = vsel %vm1307, %v1243, %v1371
        %v1436 = vsel %vm1308, %v1244, %v1372
        %v1437 = vsel %vm1309, %v1245, %v1373
        %v1438 = vsel %vm1310, %v1246, %v1374
        %v1439 = vsel %vm1311, %v1247, %v1375
        %v1440 = vsel %vm1312, %v1248, %v1376
        %v1441 = vsel %vm1313, %v1249, %v1377
        %v1442 = vsel %vm1314, %v1250, %v1378
        %v1443 = vsel %vm1315, %v1251, %v1379
        %v1444 = vsel %vm1316, %v1252, %v1380
        %v1445 = vsel %vm1317, %v1253, %v1381
        %v1446 = vsel %vm1318, %v1254, %v1382
        %v1447 = vsel %vm1319, %v1255, %v1383
        %v1448 = vsel %vm1320, %v1256, %v1384
        %v1449 = vsel %vm1321, %v1257, %v1385
        %v1450 = vsel %vm1322, %v1258, %v1386
        %v1451 = vsel %vm1323, %v1259, %v1387
        %v1452 = vsel %vm1324, %v1260, %v1388
        %v1453 = vsel %vm1325, %v1261, %v1389
        %v1454 = vsel %vm1326, %v1262, %v1390
        %v1455 = vsel %vm1327, %v1263, %v1391
        %v1456 = vsel %vm1328, %v1264, %v1392
        %v1457 = vsel %vm1329, %v1265, %v1393
        %v1458 = vsel %vm1330, %v1266, %v1394
        %v1459 = vsel %vm1331, %v1267, %v1395
        %v1460 = vsel %vm1332, %v1268, %v1396
        %v1461 = vsel %vm1333, %v1269, %v1397
        %v1462 = vsel %vm1334, %v1270, %v1398
        %v1463 = vsel %vm1335, %v1271, %v1399
        %v1464 = vsel %vm1336, %v1272, %v1400
        %v1465 = vsel %vm1337, %v1273, %v1401
        %v1466 = vsel %vm1338, %v1274, %v1402
        %v1467 = vsel %vm1339, %v1275, %v1403
        %v1468 = vsel %vm1340, %v1276, %v1404
        %v1469 = vsel %vm1341, %v1277, %v1405
        %v1470 = vsel %vm1342, %v1278, %v1406
        %v1471 = vsel %vm1343, %v1279, %v1407
        %v1472 = vsel %vm1344, %v1280, %v1408
        %v1473 = vsel %vm1345, %v1281, %v1409
        %v1474 = vsel %vm1346, %v1282, %v1410
        %v1475 = vsel %vm1347, %v1283, %v1411
        %v1476 = vsel %vm1348, %v1284, %v1412
        %v1477 = vsel %vm1349, %v1285, %v1413
        %v1478 = vsel %vm1350, %v1286, %v1414
        %v1479 = vsel %vm1351, %v1287, %v1415
        %v1480 = vsel %vm1352, %v1288, %v1416
        %v1481 = vsel %vm1353, %v1289, %v1417
        %v1482 = vsel %vm1354, %v1290, %v1418
        %v1483 = vsel %vm1355, %v1291, %v1419
        %v1484 = vsel %vm1356, %v1292, %v1420
        %v1485 = vsel %vm1357, %v1293, %v1421
        %v1486 = vsel %vm1358, %v1294, %v1422
        %v1487 = vsel %vm1359, %v1295, %v1423
        %v1488 = vsel %vm1360, %v1296, %v1424
        %v1489 = vsel %vm1361, %v1297, %v1425
        %v1490 = vsel %vm1362, %v1298, %v1426
        %v1491 = vsel %vm1363, %v1299, %v1427
        %v1492 = vsel %vm1364, %v1300, %v1428
        %v1493 = vsel %vm1365, %v1301, %v1429
        %v1494 = vsel %vm1366, %v1302, %v1430
        %v1495 = vsel %vm1367, %v1303, %v1431
        %v1496 = vsel %vm1368, %v1304, %v1432
        %v1497 = vsel %vm1369, %v1305, %v1433
        %v1498 = vsel %vm1370, %v1306, %v1434
        %v1499 = vpack.c.bf16 %v1435, %v1435
        %v1500 = vpack.c.bf16 %v1436, %v1436
        %v1501 = vpack.c.bf16 %v1437, %v1437
        %v1502 = vpack.c.bf16 %v1438, %v1438
        %v1503 = vpack.c.bf16 %v1439, %v1439
        %v1504 = vpack.c.bf16 %v1440, %v1440
        %v1505 = vpack.c.bf16 %v1441, %v1441
        %v1506 = vpack.c.bf16 %v1442, %v1442
        %v1507 = vpack.c.bf16 %v1443, %v1443
        %v1508 = vpack.c.bf16 %v1444, %v1444
        %v1509 = vpack.c.bf16 %v1445, %v1445
        %v1510 = vpack.c.bf16 %v1446, %v1446
        %v1511 = vpack.c.bf16 %v1447, %v1447
        %v1512 = vpack.c.bf16 %v1448, %v1448
        %v1513 = vpack.c.bf16 %v1449, %v1449
        %v1514 = vpack.c.bf16 %v1450, %v1450
        %v1515 = vpack.c.bf16 %v1451, %v1451
        %v1516 = vpack.c.bf16 %v1452, %v1452
        %v1517 = vpack.c.bf16 %v1453, %v1453
        %v1518 = vpack.c.bf16 %v1454, %v1454
        %v1519 = vpack.c.bf16 %v1455, %v1455
        %v1520 = vpack.c.bf16 %v1456, %v1456
        %v1521 = vpack.c.bf16 %v1457, %v1457
        %v1522 = vpack.c.bf16 %v1458, %v1458
        %v1523 = vpack.c.bf16 %v1459, %v1459
        %v1524 = vpack.c.bf16 %v1460, %v1460
        %v1525 = vpack.c.bf16 %v1461, %v1461
        %v1526 = vpack.c.bf16 %v1462, %v1462
        %v1527 = vpack.c.bf16 %v1463, %v1463
        %v1528 = vpack.c.bf16 %v1464, %v1464
        %v1529 = vpack.c.bf16 %v1465, %v1465
        %v1530 = vpack.c.bf16 %v1466, %v1466
        %v1531 = vpack.c.bf16 %v1467, %v1467
        %v1532 = vpack.c.bf16 %v1468, %v1468
        %v1533 = vpack.c.bf16 %v1469, %v1469
        %v1534 = vpack.c.bf16 %v1470, %v1470
        %v1535 = vpack.c.bf16 %v1471, %v1471
        %v1536 = vpack.c.bf16 %v1472, %v1472
        %v1537 = vpack.c.bf16 %v1473, %v1473
        %v1538 = vpack.c.bf16 %v1474, %v1474
        %v1539 = vpack.c.bf16 %v1475, %v1475
        %v1540 = vpack.c.bf16 %v1476, %v1476
        %v1541 = vpack.c.bf16 %v1477, %v1477
        %v1542 = vpack.c.bf16 %v1478, %v1478
        %v1543 = vpack.c.bf16 %v1479, %v1479
        %v1544 = vpack.c.bf16 %v1480, %v1480
        %v1545 = vpack.c.bf16 %v1481, %v1481
        %v1546 = vpack.c.bf16 %v1482, %v1482
        %v1547 = vpack.c.bf16 %v1483, %v1483
        %v1548 = vpack.c.bf16 %v1484, %v1484
        %v1549 = vpack.c.bf16 %v1485, %v1485
        %v1550 = vpack.c.bf16 %v1486, %v1486
        %v1551 = vpack.c.bf16 %v1487, %v1487
        %v1552 = vpack.c.bf16 %v1488, %v1488
        %v1553 = vpack.c.bf16 %v1489, %v1489
        %v1554 = vpack.c.bf16 %v1490, %v1490
        %v1555 = vpack.c.bf16 %v1491, %v1491
        %v1556 = vpack.c.bf16 %v1492, %v1492
        %v1557 = vpack.c.bf16 %v1493, %v1493
        %v1558 = vpack.c.bf16 %v1494, %v1494
        %v1559 = vpack.c.bf16 %v1495, %v1495
        %v1560 = vpack.c.bf16 %v1496, %v1496
        %v1561 = vpack.c.bf16 %v1497, %v1497
        %v1562 = vpack.c.bf16 %v1498, %v1498
        %1563 = vst [vmem:[%s4] sm:$0xf] %v1499
        %1564 = vst [vmem:[%s4 + $0x4] sm:$0xf] %v1500
        %1565 = vst [vmem:[%s4 + $0x8] sm:$0xf] %v1501
        %1566 = vst [vmem:[%s4 + $0xc] sm:$0xf] %v1502
        %1567 = vst [vmem:[%s4 + $0x10] sm:$0xf] %v1503
        %1568 = vst [vmem:[%s4 + $0x14] sm:$0xf] %v1504
        %1569 = vst [vmem:[%s4 + $0x18] sm:$0xf] %v1505
        %1570 = vst [vmem:[%s4 + $0x1c] sm:$0xf] %v1506
        %1571 = vst [vmem:[%s4 + $0x20] sm:$0xf] %v1507
        %1572 = vst [vmem:[%s4 + $0x24] sm:$0xf] %v1508
        %1573 = vst [vmem:[%s4 + $0x28] sm:$0xf] %v1509
        %1574 = vst [vmem:[%s4 + $0x2c] sm:$0xf] %v1510
        %1575 = vst [vmem:[%s4 + $0x30] sm:$0xf] %v1511
        %1576 = vst [vmem:[%s4 + $0x34] sm:$0xf] %v1512
        %1577 = vst [vmem:[%s4 + $0x38] sm:$0xf] %v1513
        %1578 = vst [vmem:[%s4 + $0x3c] sm:$0xf] %v1514
        %1579 = vst [vmem:[%s4 + $0x40] sm:$0xf] %v1515
        %1580 = vst [vmem:[%s4 + $0x44] sm:$0xf] %v1516
        %1581 = vst [vmem:[%s4 + $0x48] sm:$0xf] %v1517
        %1582 = vst [vmem:[%s4 + $0x4c] sm:$0xf] %v1518
        %1583 = vst [vmem:[%s4 + $0x50] sm:$0xf] %v1519
        %1584 = vst [vmem:[%s4 + $0x54] sm:$0xf] %v1520
        %1585 = vst [vmem:[%s4 + $0x58] sm:$0xf] %v1521
        %1586 = vst [vmem:[%s4 + $0x5c] sm:$0xf] %v1522
        %1587 = vst [vmem:[%s4 + $0x60] sm:$0xf] %v1523
        %1588 = vst [vmem:[%s4 + $0x64] sm:$0xf] %v1524
        %1589 = vst [vmem:[%s4 + $0x68] sm:$0xf] %v1525
        %1590 = vst [vmem:[%s4 + $0x6c] sm:$0xf] %v1526
        %1591 = vst [vmem:[%s4 + $0x70] sm:$0xf] %v1527
        %1592 = vst [vmem:[%s4 + $0x74] sm:$0xf] %v1528
        %1593 = vst [vmem:[%s4 + $0x78] sm:$0xf] %v1529
        %1594 = vst [vmem:[%s4 + $0x7c] sm:$0xf] %v1530
        %1595 = vst [vmem:[%s4 + $0x80] sm:$0xf] %v1531
        %1596 = vst [vmem:[%s4 + $0x84] sm:$0xf] %v1532
        %1597 = vst [vmem:[%s4 + $0x88] sm:$0xf] %v1533
        %1598 = vst [vmem:[%s4 + $0x8c] sm:$0xf] %v1534
        %1599 = vst [vmem:[%s4 + $0x90] sm:$0xf] %v1535
        %1600 = vst [vmem:[%s4 + $0x94] sm:$0xf] %v1536
        %1601 = vst [vmem:[%s4 + $0x98] sm:$0xf] %v1537
        %1602 = vst [vmem:[%s4 + $0x9c] sm:$0xf] %v1538
        %1603 = vst [vmem:[%s4 + $0xa0] sm:$0xf] %v1539
        %1604 = vst [vmem:[%s4 + $0xa4] sm:$0xf] %v1540
        %1605 = vst [vmem:[%s4 + $0xa8] sm:$0xf] %v1541
        %1606 = vst [vmem:[%s4 + $0xac] sm:$0xf] %v1542
        %1607 = vst [vmem:[%s4 + $0xb0] sm:$0xf] %v1543
        %1608 = vst [vmem:[%s4 + $0xb4] sm:$0xf] %v1544
        %1609 = vst [vmem:[%s4 + $0xb8] sm:$0xf] %v1545
        %1610 = vst [vmem:[%s4 + $0xbc] sm:$0xf] %v1546
        %1611 = vst [vmem:[%s4 + $0xc0] sm:$0xf] %v1547
        %1612 = vst [vmem:[%s4 + $0xc4] sm:$0xf] %v1548
        %1613 = vst [vmem:[%s4 + $0xc8] sm:$0xf] %v1549
        %1614 = vst [vmem:[%s4 + $0xcc] sm:$0xf] %v1550
        %1615 = vst [vmem:[%s4 + $0xd0] sm:$0xf] %v1551
        %1616 = vst [vmem:[%s4 + $0xd4] sm:$0xf] %v1552
        %1617 = vst [vmem:[%s4 + $0xd8] sm:$0xf] %v1553
        %1618 = vst [vmem:[%s4 + $0xdc] sm:$0xf] %v1554
        %1619 = vst [vmem:[%s4 + $0xe0] sm:$0xf] %v1555
        %1620 = vst [vmem:[%s4 + $0xe4] sm:$0xf] %v1556
        %1621 = vst [vmem:[%s4 + $0xe8] sm:$0xf] %v1557
        %1622 = vst [vmem:[%s4 + $0xec] sm:$0xf] %v1558
        %1623 = vst [vmem:[%s4 + $0xf0] sm:$0xf] %v1559
        %1624 = vst [vmem:[%s4 + $0xf4] sm:$0xf] %v1560
        %1625 = vst [vmem:[%s4 + $0xf8] sm:$0xf] %v1561
        %1626 = vst [vmem:[%s4 + $0xfc] sm:$0xf] %v1562
      $region40: #{discriminator_forward.6} parent=35 // pred_fallthru
        _
      // Predicated region
      $region41: #{discriminator_forward.6} parent=35 // pred_check
        %p1627 = pneg %p117
      $region42: #{discriminator_forward.6} parent=35 // pred_check_branch
        %1629 = sbr.rel (%p1627) target = $region44
      $region43: #{discriminator_forward.6} parent=35 // pred_region
        _
      $region44: #{discriminator_forward.6} parent=35 // pred_fallthru
        _
      // Predicated region
      $region45: #{discriminator_forward.6} parent=35 // pred_check
        %p1630 = pneg %p117
      $region46: #{discriminator_forward.6} parent=35 // pred_check_branch
        %1632 = sbr.rel (%p1630) target = $region48
      $region47: #{discriminator_forward.6} parent=35 // pred_region
        _
      $region48: #{discriminator_forward.6} parent=35 // pred_fallthru
        _
    $region36: #{discriminator_forward.6} parent=5 // pred_fallthru
      _
    %p1633 = scmp.le.s32.totalorder 2, %s10
    // Predicated region
    $region49: #{discriminator_forward.6} parent=5 // pred_check
      %p1634 = pneg %p1633
    $region50: #{discriminator_forward.6} parent=5 // pred_check_branch
      %1636 = sbr.rel (%p1634) target = $region52
    $region51: #{discriminator_forward.6} parent=5 // pred_region
      %s1637 = ssub.s32 %s10, 2
    $region52: #{discriminator_forward.6} parent=5 // pred_fallthru
      _
  $region6: #{discriminator_forward.6} parent=0 // loop_footer
    %s14 = sadd.s32 1, %s10
  $region7: #{discriminator_forward.6} parent=0 // loop_footer_branch
    %9 = sbr.rel target = $region3
  $region8: #{discriminator_forward.6} parent=0 // loop_exit
    _

// kernel: discriminator_forward.7
$region0: #{discriminator_forward.7}
  #allocation0 [shape = 'u32[]', space=smem, size = 0x4, offset = 0x4, fixed_abs, tag = 'smem constant byte address 0x4 - core index']
  #allocation1 [shape = 'u32[72,128]{1,0:T(1,128)}', space=vmem, size = 0x9000, scoped, tag = 'internal scratch']
  #allocation2 [shape = 'f32[128,128]{1,0:T(8,128)}', space=vmem, size = 0x10000, scoped, tag = 'scratch operand']
  %s0 = inlined_call_operand.vmem [shape: bf16[128,256], index: 0, kind: input, shape index: {}]
  %s1 = inlined_call_operand.vmem [shape: bf16[256,128], index: 1, kind: input, shape index: {}]
  %s2 = inlined_call_operand.vmem [shape: f32[1,128], index: 2, kind: input, shape index: {}]
  %s3 = inlined_call_operand.vmem [shape: f32[1,128], index: 3, kind: input, shape index: {}]
  %s4 = inlined_call_operand.vmem [shape: bf16[128,128], index: 4, kind: output, shape index: {}]
  %s5 = sld [smem:[#allocation0]]
  $region53: #{discriminator_forward.7} parent=0
    _
  %s7 = ssub.s32 1, %s5
  %s8 = scalar_select 0, %s7, %s5
  loop: start=0, step=1, limit=4
  $region2: #{discriminator_forward.7} parent=0 // loop_pre_header
    _
  $region3: #{discriminator_forward.7} parent=0 // loop_header
    %s10 = sphi 0, %s14
    %p11 = scmp.ge.s32.totalorder %s10, 4
    %s20 = sphi 0, %s22
    %s23 = sphi 0, %s20
    %s24 = sphi 0, %s23
    %s40 = sphi 0, %s24
    %s44 = sphi 0, %s44
    %s46 = sphi 0, %s44
    %s47 = sphi 0, %s46
    %s61 = sphi 0, %s47
    %s65 = sphi 0, %s65
    %s67 = sphi 0, %s65
    %s68 = sphi 0, %s67
    %s82 = sphi 0, %s68
    %s86 = sphi 0, %s86
    %s88 = sphi 0, %s86
    %s89 = sphi 0, %s88
    %s103 = sphi 0, %s89
    %s107 = sphi 0, %s107
    %s109 = sphi 0, %s107
    %s110 = sphi 0, %s109
    %s124 = sphi 0, %s110
  $region4: #{discriminator_forward.7} parent=0 // loop_header_branch
    %13 = sbr.rel (%p11) target = $region8
  $region5: #{discriminator_forward.7} parent=0 // loop_body
    %s15 = ssub.s32 %s10, 1
    %s16 = ssub.s32 %s10, 2
    %s17 = sadd.s32 %s10, 1
    %s18 = ssub.s32 %s10, %s17
    %p19 = scmp.eq.s32.totalorder %s18, 0
    %s21 = sadd.s32 %s20, 1
    %s22 = scalar_select %p19, %s20, %s21
    %p25 = pneg %p19
    %p26 = scmp.eq.s32.totalorder %s10, 1
    %p27 = por %p25, %p26
    %p28 = scmp.ne.s32.totalorder %s20, %s23
    %p29 = scmp.eq.s32.totalorder %s10, 0
    %p30 = por %p28, %p29
    %p31 = scmp.ne.s32.totalorder %s20, %s23
    %p32 = scmp.eq.s32.totalorder %s15, 1
    %p33 = por %p31, %p32
    %p34 = scmp.ne.s32.totalorder %s23, %s24
    %p35 = scmp.eq.s32.totalorder %s15, 0
    %p36 = por %p34, %p35
    %p37 = scmp.ne.s32.totalorder %s23, %s24
    %p38 = scmp.eq.s32.totalorder %s16, 1
    %p39 = por %p37, %p38
    %p41 = scmp.ne.s32.totalorder %s24, %s40
    %p42 = scmp.eq.s32.totalorder %s16, 0
    %p43 = por %p41, %p42
    %s45 = sadd.s32 %s44, 1
    %p48 = scmp.eq.s32.totalorder %s10, 1
    %p49 = scmp.ne.s32.totalorder %s44, %s46
    %p50 = scmp.eq.s32.totalorder %s10, 0
    %p51 = por %p49, %p50
    %p52 = scmp.ne.s32.totalorder %s44, %s46
    %p53 = scmp.eq.s32.totalorder %s15, 1
    %p54 = por %p52, %p53
    %p55 = scmp.ne.s32.totalorder %s46, %s47
    %p56 = scmp.eq.s32.totalorder %s15, 0
    %p57 = por %p55, %p56
    %p58 = scmp.ne.s32.totalorder %s46, %s47
    %p59 = scmp.eq.s32.totalorder %s16, 1
    %p60 = por %p58, %p59
    %p62 = scmp.ne.s32.totalorder %s47, %s61
    %p63 = scmp.eq.s32.totalorder %s16, 0
    %p64 = por %p62, %p63
    %s66 = sadd.s32 %s65, 1
    %p69 = scmp.eq.s32.totalorder %s10, 1
    %p70 = scmp.ne.s32.totalorder %s65, %s67
    %p71 = scmp.eq.s32.totalorder %s10, 0
    %p72 = por %p70, %p71
    %p73 = scmp.ne.s32.totalorder %s65, %s67
    %p74 = scmp.eq.s32.totalorder %s15, 1
    %p75 = por %p73, %p74
    %p76 = scmp.ne.s32.totalorder %s67, %s68
    %p77 = scmp.eq.s32.totalorder %s15, 0
    %p78 = por %p76, %p77
    %p79 = scmp.ne.s32.totalorder %s67, %s68
    %p80 = scmp.eq.s32.totalorder %s16, 1
    %p81 = por %p79, %p80
    %p83 = scmp.ne.s32.totalorder %s68, %s82
    %p84 = scmp.eq.s32.totalorder %s16, 0
    %p85 = por %p83, %p84
    %s87 = sadd.s32 %s86, 1
    %p90 = scmp.eq.s32.totalorder %s10, 1
    %p91 = scmp.ne.s32.totalorder %s86, %s88
    %p92 = scmp.eq.s32.totalorder %s10, 0
    %p93 = por %p91, %p92
    %p94 = scmp.ne.s32.totalorder %s86, %s88
    %p95 = scmp.eq.s32.totalorder %s15, 1
    %p96 = por %p94, %p95
    %p97 = scmp.ne.s32.totalorder %s88, %s89
    %p98 = scmp.eq.s32.totalorder %s15, 0
    %p99 = por %p97, %p98
    %p100 = scmp.ne.s32.totalorder %s88, %s89
    %p101 = scmp.eq.s32.totalorder %s16, 1
    %p102 = por %p100, %p101
    %p104 = scmp.ne.s32.totalorder %s89, %s103
    %p105 = scmp.eq.s32.totalorder %s16, 0
    %p106 = por %p104, %p105
    %s108 = sadd.s32 %s107, 1
    %p111 = scmp.eq.s32.totalorder %s10, 1
    %p112 = scmp.ne.s32.totalorder %s107, %s109
    %p113 = scmp.eq.s32.totalorder %s10, 0
    %p114 = por %p112, %p113
    %p115 = scmp.ne.s32.totalorder %s107, %s109
    %p116 = scmp.eq.s32.totalorder %s15, 1
    %p117 = por %p115, %p116
    %p118 = scmp.ne.s32.totalorder %s109, %s110
    %p119 = scmp.eq.s32.totalorder %s15, 0
    %p120 = por %p118, %p119
    %p121 = scmp.ne.s32.totalorder %s109, %s110
    %p122 = scmp.eq.s32.totalorder %s16, 1
    %p123 = por %p121, %p122
    %p125 = scmp.ne.s32.totalorder %s110, %s124
    %p126 = scmp.eq.s32.totalorder %s16, 0
    %p127 = por %p125, %p126
    %p128 = scmp.le.s32.totalorder 1, %s10
    %p129 = scmp.lt.s32.totalorder %s10, 3
    %p130 = pnand %p128, %p129
    %p131 = pneg %p130
    // Predicated region
    $region9: #{discriminator_forward.7} parent=5 // pred_check
      _
    $region10: #{discriminator_forward.7} parent=5 // pred_check_branch
      %133 = sbr.rel (%p130) target = $region12
    $region11: #{discriminator_forward.7} parent=5 // pred_region
      %s134 = ssub.s32 %s10, 1
      // Predicated region
      $region13: #{discriminator_forward.7} parent=11 // pred_check
        %p135 = pneg %p57
      $region14: #{discriminator_forward.7} parent=11 // pred_check_branch
        %137 = sbr.rel (%p135) target = $region16
      $region15: #{discriminator_forward.7} parent=11 // pred_region
        _
      $region16: #{discriminator_forward.7} parent=11 // pred_fallthru
        _
      // Predicated region
      $region17: #{discriminator_forward.7} parent=11 // pred_check
        %p138 = pneg %p78
      $region18: #{discriminator_forward.7} parent=11 // pred_check_branch
        %140 = sbr.rel (%p138) target = $region20
      $region19: #{discriminator_forward.7} parent=11 // pred_region
        _
      $region20: #{discriminator_forward.7} parent=11 // pred_fallthru
        _
      // Predicated region
      $region21: #{discriminator_forward.7} parent=11 // pred_check
        %p141 = pneg %p99
      $region22: #{discriminator_forward.7} parent=11 // pred_check_branch
        %143 = sbr.rel (%p141) target = $region24
      $region23: #{discriminator_forward.7} parent=11 // pred_region
        _
      $region24: #{discriminator_forward.7} parent=11 // pred_fallthru
        _
    $region12: #{discriminator_forward.7} parent=5 // pred_fallthru
      _
    %p144 = scmp.lt.s32.totalorder %s10, 2
    // Predicated region
    $region25: #{discriminator_forward.7} parent=5 // pred_check
      %p145 = pneg %p144
    $region26: #{discriminator_forward.7} parent=5 // pred_check_branch
      %147 = sbr.rel (%p145) target = $region28
    $region27: #{discriminator_forward.7} parent=5 // pred_region
      // Predicated region
      $region29: #{discriminator_forward.7} parent=27 // pred_check
        %p148 = pneg %p30
      $region30: #{discriminator_forward.7} parent=27 // pred_check_branch
        %150 = sbr.rel (%p148) target = $region32
      $region31: #{discriminator_forward.7} parent=27 // pred_region
        %s151 = smul.u32 8, %s10
        %p152 = scmp.lt.s32.totalorder %s151, 15
        %s153 = scalar_select %p152, %s151, 15
        %s154 = smul.addr %s153, 2
        %s155 = smul.addr %s154, 4
        %s156 = scalar_lea.vmem %s0, %s155
        %s157 = smul.u32 8, %s10
      $region32: #{discriminator_forward.7} parent=27 // pred_fallthru
        _
    $region28: #{discriminator_forward.7} parent=5 // pred_fallthru
      _
    %p158 = scmp.le.s32.totalorder 1, %s10
    %p159 = scmp.lt.s32.totalorder %s10, 3
    %p160 = pnand %p158, %p159
    %p161 = pneg %p160
    // Predicated region
    $region33: #{discriminator_forward.7} parent=5 // pred_check
      _
    $region34: #{discriminator_forward.7} parent=5 // pred_check_branch
      %163 = sbr.rel (%p160) target = $region36
    $region35: #{discriminator_forward.7} parent=5 // pred_region
      %s164 = ssub.s32 %s10, 1
      %s165 = smul.u32 8, %s15
      %p166 = scmp.lt.s32.totalorder %s165, 15
      %s167 = scalar_select %p166, %s165, 15
      %s168 = smul.addr %s167, 2
      %s169 = smul.addr %s168, 4
      %s170 = scalar_lea.vmem %s0, %s169
      %p171 = pneg %p36
      %p172 = pneg %p33
      %p173 = pneg %p57
      %p174 = pneg %p54
      %p175 = pneg %p78
      %p176 = pneg %p75
      %p177 = pneg %p99
      %p178 = pneg %p96
      %p179 = pneg %p120
      %p180 = pneg %p117
      %s181 = smul.u32 8, %s15
      %p182 = scmp.lt.s32.totalorder %s181, 15
      %s183 = scalar_select %p182, %s181, 15
      %s184 = smul.addr %s183, 2
      %s185 = smul.addr %s184, 4
      %s186 = scalar_lea.vmem %s0, %s185
      %s187 = smul.u32 8, %s15
      %v188 = vld [vmem:[%s186] sm:$0xff]
      %v189 = vld [vmem:[%s186 + $0x8] sm:$0xff]
      %v190 = vld [vmem:[%s186 + $0x10] sm:$0xff]
      %v191 = vld [vmem:[%s186 + $0x18] sm:$0xff]
      %v192 = vld [vmem:[%s186 + $0x20] sm:$0xff]
      %v193 = vld [vmem:[%s186 + $0x28] sm:$0xff]
      %v194 = vld [vmem:[%s186 + $0x30] sm:$0xff]
      %v195 = vld [vmem:[%s186 + $0x38] sm:$0xff]
      %v196 = vld [vmem:[%s1] sm:$0xf]
      %v197 = vld [vmem:[%s1 + $0x4] sm:$0xf]
      %v198 = vld [vmem:[%s1 + $0x8] sm:$0xf]
      %v199 = vld [vmem:[%s1 + $0xc] sm:$0xf]
      %v200 = vld [vmem:[%s1 + $0x10] sm:$0xf]
      %v201 = vld [vmem:[%s1 + $0x14] sm:$0xf]
      %v202 = vld [vmem:[%s1 + $0x18] sm:$0xf]
      %v203 = vld [vmem:[%s1 + $0x1c] sm:$0xf]
      %v204 = vld [vmem:[%s1 + $0x20] sm:$0xf]
      %v205 = vld [vmem:[%s1 + $0x24] sm:$0xf]
      %v206 = vld [vmem:[%s1 + $0x28] sm:$0xf]
      %v207 = vld [vmem:[%s1 + $0x2c] sm:$0xf]
      %v208 = vld [vmem:[%s1 + $0x30] sm:$0xf]
      %v209 = vld [vmem:[%s1 + $0x34] sm:$0xf]
      %v210 = vld [vmem:[%s1 + $0x38] sm:$0xf]
      %v211 = vld [vmem:[%s1 + $0x3c] sm:$0xf]
      %v212 = vld [vmem:[%s1 + $0x40] sm:$0xf]
      %v213 = vld [vmem:[%s1 + $0x44] sm:$0xf]
      %v214 = vld [vmem:[%s1 + $0x48] sm:$0xf]
      %v215 = vld [vmem:[%s1 + $0x4c] sm:$0xf]
      %v216 = vld [vmem:[%s1 + $0x50] sm:$0xf]
      %v217 = vld [vmem:[%s1 + $0x54] sm:$0xf]
      %v218 = vld [vmem:[%s1 + $0x58] sm:$0xf]
      %v219 = vld [vmem:[%s1 + $0x5c] sm:$0xf]
      %v220 = vld [vmem:[%s1 + $0x60] sm:$0xf]
      %v221 = vld [vmem:[%s1 + $0x64] sm:$0xf]
      %v222 = vld [vmem:[%s1 + $0x68] sm:$0xf]
      %v223 = vld [vmem:[%s1 + $0x6c] sm:$0xf]
      %v224 = vld [vmem:[%s1 + $0x70] sm:$0xf]
      %v225 = vld [vmem:[%s1 + $0x74] sm:$0xf]
      %v226 = vld [vmem:[%s1 + $0x78] sm:$0xf]
      %v227 = vld [vmem:[%s1 + $0x7c] sm:$0xf]
      %v236 = vunpack.c.l.b16 %v188
      %v237 = vunpack.c.h.b16 %v188
      %v238 = vunpack.c.l.b16 %v189
      %v239 = vunpack.c.h.b16 %v189
      %v240 = vunpack.c.l.b16 %v190
      %v241 = vunpack.c.h.b16 %v190
      %v242 = vunpack.c.l.b16 %v191
      %v243 = vunpack.c.h.b16 %v191
      %v244 = vunpack.c.l.b16 %v192
      %v245 = vunpack.c.h.b16 %v192
      %v246 = vunpack.c.l.b16 %v193
      %v247 = vunpack.c.h.b16 %v193
      %v248 = vunpack.c.l.b16 %v194
      %v249 = vunpack.c.h.b16 %v194
      %v250 = vunpack.c.l.b16 %v195
      %v251 = vunpack.c.h.b16 %v195
      %v252 = vpack.c.b16 %v238, %v236
      %v253 = vpack.c.b16 %v239, %v237
      %v254 = vpack.c.b16 %v242, %v240
      %v255 = vpack.c.b16 %v243, %v241
      %v256 = vpack.c.b16 %v246, %v244
      %v257 = vpack.c.b16 %v247, %v245
      %v258 = vpack.c.b16 %v250, %v248
      %v259 = vpack.c.b16 %v251, %v249
      %v300 = vunpack.c.l.b16 %v196
      %v301 = vunpack.c.l.b16 %v197
      %v302 = vunpack.c.l.b16 %v198
      %v303 = vunpack.c.l.b16 %v199
      %v304 = vunpack.c.l.b16 %v200
      %v305 = vunpack.c.l.b16 %v201
      %v306 = vunpack.c.l.b16 %v202
      %v307 = vunpack.c.l.b16 %v203
      %v308 = vunpack.c.l.b16 %v204
      %v309 = vunpack.c.l.b16 %v205
      %v310 = vunpack.c.l.b16 %v206
      %v311 = vunpack.c.l.b16 %v207
      %v312 = vunpack.c.l.b16 %v208
      %v313 = vunpack.c.l.b16 %v209
      %v314 = vunpack.c.l.b16 %v210
      %v315 = vunpack.c.l.b16 %v211
      %v316 = vunpack.c.l.b16 %v212
      %v317 = vunpack.c.l.b16 %v213
      %v318 = vunpack.c.l.b16 %v214
      %v319 = vunpack.c.l.b16 %v215
      %v320 = vunpack.c.l.b16 %v216
      %v321 = vunpack.c.l.b16 %v217
      %v322 = vunpack.c.l.b16 %v218
      %v323 = vunpack.c.l.b16 %v219
      %v324 = vunpack.c.l.b16 %v220
      %v325 = vunpack.c.l.b16 %v221
      %v326 = vunpack.c.l.b16 %v222
      %v327 = vunpack.c.l.b16 %v223
      %v328 = vunpack.c.l.b16 %v224
      %v329 = vunpack.c.l.b16 %v225
      %v330 = vunpack.c.l.b16 %v226
      %v331 = vunpack.c.l.b16 %v227
      %v332 = vpack.c.b16 %v301, %v300
      %v333 = vpack.c.b16 %v303, %v302
      %v334 = vpack.c.b16 %v305, %v304
      %v335 = vpack.c.b16 %v307, %v306
      %v336 = vpack.c.b16 %v309, %v308
      %v337 = vpack.c.b16 %v311, %v310
      %v338 = vpack.c.b16 %v313, %v312
      %v339 = vpack.c.b16 %v315, %v314
      %v340 = vpack.c.b16 %v317, %v316
      %v341 = vpack.c.b16 %v319, %v318
      %v342 = vpack.c.b16 %v321, %v320
      %v343 = vpack.c.b16 %v323, %v322
      %v344 = vpack.c.b16 %v325, %v324
      %v345 = vpack.c.b16 %v327, %v326
      %v346 = vpack.c.b16 %v329, %v328
      %v347 = vpack.c.b16 %v331, %v330
      %364 = vmatpush.bf16.msra.mxu0 %v339
      %365 = vmatpush.bf16.msra.mxu0 %v338
      %366 = vmatpush.bf16.msra.mxu0 %v337
      %367 = vmatpush.bf16.msra.mxu0 %v336
      %368 = vmatpush.bf16.msra.mxu0 %v335
      %369 = vmatpush.bf16.msra.mxu0 %v334
      %370 = vmatpush.bf16.msra.mxu0 %v333
      %371 = vmatpush.bf16.msra.mxu0 %v332
      %372 = vmatmul.bf16.gmra.mxu0 %v252
      %v373 = vpop.f32.mrf.mxu0
      %v374 = vadd.f32 0.0, %v373
      %v375 = vpop.f32.mrf.mxu0
      %v376 = vadd.f32 0.0, %v375
      %377 = vmatmul.bf16.gmra.mxu0 %v254
      %v378 = vpop.f32.mrf.mxu0
      %v379 = vadd.f32 0.0, %v378
      %v380 = vpop.f32.mrf.mxu0
      %v381 = vadd.f32 0.0, %v380
      %382 = vmatmul.bf16.gmra.mxu0 %v256
      %v383 = vpop.f32.mrf.mxu0
      %v384 = vadd.f32 0.0, %v383
      %v385 = vpop.f32.mrf.mxu0
      %v386 = vadd.f32 0.0, %v385
      %387 = vmatmul.bf16.gmra.mxu0 %v258
      %v388 = vpop.f32.mrf.mxu0
      %v389 = vadd.f32 0.0, %v388
      %v390 = vpop.f32.mrf.mxu0
      %v391 = vadd.f32 0.0, %v390
      %392 = vdwg.mxu0
      %393 = vmatpush.bf16.msra.mxu0 %v347
      %394 = vmatpush.bf16.msra.mxu0 %v346
      %395 = vmatpush.bf16.msra.mxu0 %v345
      %396 = vmatpush.bf16.msra.mxu0 %v344
      %397 = vmatpush.bf16.msra.mxu0 %v343
      %398 = vmatpush.bf16.msra.mxu0 %v342
      %399 = vmatpush.bf16.msra.mxu0 %v341
      %400 = vmatpush.bf16.msra.mxu0 %v340
      %401 = vmatmul.bf16.gmra.mxu0 %v253
      %v402 = vpop.f32.mrf.mxu0
      %v403 = vadd.f32 %v374, %v402
      %v404 = vpop.f32.mrf.mxu0
      %v405 = vadd.f32 %v376, %v404
      %406 = vmatmul.bf16.gmra.mxu0 %v255
      %v407 = vpop.f32.mrf.mxu0
      %v408 = vadd.f32 %v379, %v407
      %v409 = vpop.f32.mrf.mxu0
      %v410 = vadd.f32 %v381, %v409
      %411 = vmatmul.bf16.gmra.mxu0 %v257
      %v412 = vpop.f32.mrf.mxu0
      %v413 = vadd.f32 %v384, %v412
      %v414 = vpop.f32.mrf.mxu0
      %v415 = vadd.f32 %v386, %v414
      %416 = vmatmul.bf16.gmra.mxu0 %v259
      %v417 = vpop.f32.mrf.mxu0
      %v418 = vadd.f32 %v389, %v417
      %v419 = vpop.f32.mrf.mxu0
      %v420 = vadd.f32 %v391, %v419
      %421 = vdwg.mxu0
      %s422 = smul.u32 %s15, 64
      %s423 = scalar_lea.vmem [#allocation2], %s422
      %424 = vst [vmem:[%s423] sm:$0xff] %v403
      %425 = vst [vmem:[%s423 + $0x8] sm:$0xff] %v405
      %426 = vst [vmem:[%s423 + $0x10] sm:$0xff] %v408
      %427 = vst [vmem:[%s423 + $0x18] sm:$0xff] %v410
      %428 = vst [vmem:[%s423 + $0x20] sm:$0xff] %v413
      %429 = vst [vmem:[%s423 + $0x28] sm:$0xff] %v415
      %430 = vst [vmem:[%s423 + $0x30] sm:$0xff] %v418
      %431 = vst [vmem:[%s423 + $0x38] sm:$0xff] %v420
      %p432 = scmp.eq.s32.totalorder %s15, 1
      // Predicated region
      $region37: #{discriminator_forward.7} parent=35 // pred_check
        %p433 = pneg %p432
      $region38: #{discriminator_forward.7} parent=35 // pred_check_branch
        %435 = sbr.rel (%p433) target = $region40
      $region39: #{discriminator_forward.7} parent=35 // pred_region
        %v436 = vld [vmem:[#allocation2] sm:$0xff]
        %v437 = vld [vmem:[#allocation2 + $0x8] sm:$0xff]
        %v438 = vld [vmem:[#allocation2 + $0x10] sm:$0xff]
        %v439 = vld [vmem:[#allocation2 + $0x18] sm:$0xff]
        %v440 = vld [vmem:[#allocation2 + $0x20] sm:$0xff]
        %v441 = vld [vmem:[#allocation2 + $0x28] sm:$0xff]
        %v442 = vld [vmem:[#allocation2 + $0x30] sm:$0xff]
        %v443 = vld [vmem:[#allocation2 + $0x38] sm:$0xff]
        %v444 = vld [vmem:[#allocation2 + $0x40] sm:$0xff]
        %v445 = vld [vmem:[#allocation2 + $0x48] sm:$0xff]
        %v446 = vld [vmem:[#allocation2 + $0x50] sm:$0xff]
        %v447 = vld [vmem:[#allocation2 + $0x58] sm:$0xff]
        %v448 = vld [vmem:[#allocation2 + $0x60] sm:$0xff]
        %v449 = vld [vmem:[#allocation2 + $0x68] sm:$0xff]
        %v450 = vld [vmem:[#allocation2 + $0x70] sm:$0xff]
        %v451 = vld [vmem:[#allocation2 + $0x78] sm:$0xff]
        %v452 = vadd.f32 %v436, %v437
        %v453 = vadd.f32 %v452, %v438
        %v454 = vadd.f32 %v453, %v439
        %v455 = vadd.f32 %v454, %v440
        %v456 = vadd.f32 %v455, %v441
        %v457 = vadd.f32 %v456, %v442
        %v458 = vadd.f32 %v457, %v443
        %v459 = vadd.f32 %v458, %v444
        %v460 = vadd.f32 %v459, %v445
        %v461 = vadd.f32 %v460, %v446
        %v462 = vadd.f32 %v461, %v447
        %v463 = vadd.f32 %v462, %v448
        %v464 = vadd.f32 %v463, %v449
        %v465 = vadd.f32 %v464, %v450
        %v466 = vadd.f32 %v465, %v451
        %v467 = vrot.slane %v466, 4
        %v468 = vadd.f32 %v466, %v467
        %v469 = vrot.slane %v468, 2
        %v470 = vadd.f32 %v468, %v469
        %v471 = vrot.slane %v470, 1
        %v472 = vadd.f32 %v470, %v471
        %v473 = vmul.f32 %v472, 0.0078125
        %v474 = vlaneseq
        %v475 = vshrl.u32 %v474, 7
        %v476 = vadd.s32 %v475, 8
        %v477 = vadd.s32 %v475, 16
        %v478 = vadd.s32 %v475, 24
        %v479 = vadd.s32 %v475, 32
        %v480 = vadd.s32 %v475, 40
        %v481 = vadd.s32 %v475, 48
        %v482 = vadd.s32 %v475, 56
        %v483 = vadd.s32 %v475, 64
        %v484 = vadd.s32 %v475, 72
        %v485 = vadd.s32 %v475, 80
        %v486 = vadd.s32 %v475, 88
        %v487 = vadd.s32 %v475, 96
        %v488 = vadd.s32 %v475, 104
        %v489 = vadd.s32 %v475, 112
        %v490 = vadd.s32 %v475, 120
        %vm491 = vcmp.lt.s32.totalorder %v475, 128
        %vm492 = vcmp.lt.s32.totalorder %v476, 128
        %vm493 = vcmp.lt.s32.totalorder %v477, 128
        %vm494 = vcmp.lt.s32.totalorder %v478, 128
        %vm495 = vcmp.lt.s32.totalorder %v479, 128
        %vm496 = vcmp.lt.s32.totalorder %v480, 128
        %vm497 = vcmp.lt.s32.totalorder %v481, 128
        %vm498 = vcmp.lt.s32.totalorder %v482, 128
        %vm499 = vcmp.lt.s32.totalorder %v483, 128
        %vm500 = vcmp.lt.s32.totalorder %v484, 128
        %vm501 = vcmp.lt.s32.totalorder %v485, 128
        %vm502 = vcmp.lt.s32.totalorder %v486, 128
        %vm503 = vcmp.lt.s32.totalorder %v487, 128
        %vm504 = vcmp.lt.s32.totalorder %v488, 128
        %vm505 = vcmp.lt.s32.totalorder %v489, 128
        %vm506 = vcmp.lt.s32.totalorder %v490, 128
        %v507 = vsub.f32 %v436, %v473
        %v508 = vsub.f32 %v437, %v473
        %v509 = vsub.f32 %v438, %v473
        %v510 = vsub.f32 %v439, %v473
        %v511 = vsub.f32 %v440, %v473
        %v512 = vsub.f32 %v441, %v473
        %v513 = vsub.f32 %v442, %v473
        %v514 = vsub.f32 %v443, %v473
        %v515 = vsub.f32 %v444, %v473
        %v516 = vsub.f32 %v445, %v473
        %v517 = vsub.f32 %v446, %v473
        %v518 = vsub.f32 %v447, %v473
        %v519 = vsub.f32 %v448, %v473
        %v520 = vsub.f32 %v449, %v473
        %v521 = vsub.f32 %v450, %v473
        %v522 = vsub.f32 %v451, %v473
        %v523 = vsel %vm491, 1, 0
        %v524 = vsel %vm492, 1, 0
        %v525 = vsel %vm493, 1, 0
        %v526 = vsel %vm494, 1, 0
        %v527 = vsel %vm495, 1, 0
        %v528 = vsel %vm496, 1, 0
        %v529 = vsel %vm497, 1, 0
        %v530 = vsel %vm498, 1, 0
        %v531 = vsel %vm499, 1, 0
        %v532 = vsel %vm500, 1, 0
        %v533 = vsel %vm501, 1, 0
        %v534 = vsel %vm502, 1, 0
        %v535 = vsel %vm503, 1, 0
        %v536 = vsel %vm504, 1, 0
        %v537 = vsel %vm505, 1, 0
        %v538 = vsel %vm506, 1, 0
        %vm539 = vcmp.eq.s32.totalorder %v523, 1
        %vm540 = vcmp.eq.s32.totalorder %v524, 1
        %vm541 = vcmp.eq.s32.totalorder %v525, 1
        %vm542 = vcmp.eq.s32.totalorder %v526, 1
        %vm543 = vcmp.eq.s32.totalorder %v527, 1
        %vm544 = vcmp.eq.s32.totalorder %v528, 1
        %vm545 = vcmp.eq.s32.totalorder %v529, 1
        %vm546 = vcmp.eq.s32.totalorder %v530, 1
        %vm547 = vcmp.eq.s32.totalorder %v531, 1
        %vm548 = vcmp.eq.s32.totalorder %v532, 1
        %vm549 = vcmp.eq.s32.totalorder %v533, 1
        %vm550 = vcmp.eq.s32.totalorder %v534, 1
        %vm551 = vcmp.eq.s32.totalorder %v535, 1
        %vm552 = vcmp.eq.s32.totalorder %v536, 1
        %vm553 = vcmp.eq.s32.totalorder %v537, 1
        %vm554 = vcmp.eq.s32.totalorder %v538, 1
        %v555 = vsel %vm539, %v507, 0.0
        %v556 = vsel %vm540, %v508, 0.0
        %v557 = vsel %vm541, %v509, 0.0
        %v558 = vsel %vm542, %v510, 0.0
        %v559 = vsel %vm543, %v511, 0.0
        %v560 = vsel %vm544, %v512, 0.0
        %v561 = vsel %vm545, %v513, 0.0
        %v562 = vsel %vm546, %v514, 0.0
        %v563 = vsel %vm547, %v515, 0.0
        %v564 = vsel %vm548, %v516, 0.0
        %v565 = vsel %vm549, %v517, 0.0
        %v566 = vsel %vm550, %v518, 0.0
        %v567 = vsel %vm551, %v519, 0.0
        %v568 = vsel %vm552, %v520, 0.0
        %v569 = vsel %vm553, %v521, 0.0
        %v570 = vsel %vm554, %v522, 0.0
        %v571 = vmul.f32 %v555, %v555
        %v572 = vmul.f32 %v556, %v556
        %v573 = vmul.f32 %v557, %v557
        %v574 = vmul.f32 %v558, %v558
        %v575 = vmul.f32 %v559, %v559
        %v576 = vmul.f32 %v560, %v560
        %v577 = vmul.f32 %v561, %v561
        %v578 = vmul.f32 %v562, %v562
        %v579 = vmul.f32 %v563, %v563
        %v580 = vmul.f32 %v564, %v564
        %v581 = vmul.f32 %v565, %v565
        %v582 = vmul.f32 %v566, %v566
        %v583 = vmul.f32 %v567, %v567
        %v584 = vmul.f32 %v568, %v568
        %v585 = vmul.f32 %v569, %v569
        %v586 = vmul.f32 %v570, %v570
        %v587 = vadd.f32 %v571, %v572
        %v588 = vadd.f32 %v587, %v573
        %v589 = vadd.f32 %v588, %v574
        %v590 = vadd.f32 %v589, %v575
        %v591 = vadd.f32 %v590, %v576
        %v592 = vadd.f32 %v591, %v577
        %v593 = vadd.f32 %v592, %v578
        %v594 = vadd.f32 %v593, %v579
        %v595 = vadd.f32 %v594, %v580
        %v596 = vadd.f32 %v595, %v581
        %v597 = vadd.f32 %v596, %v582
        %v598 = vadd.f32 %v597, %v583
        %v599 = vadd.f32 %v598, %v584
        %v600 = vadd.f32 %v599, %v585
        %v601 = vadd.f32 %v600, %v586
        %v602 = vrot.slane %v601, 4
        %v603 = vadd.f32 %v601, %v602
        %v604 = vrot.slane %v603, 2
        %v605 = vadd.f32 %v603, %v604
        %v606 = vrot.slane %v605, 1
        %v607 = vadd.f32 %v605, %v606
        %v608 = vmul.f32 %v607, 0.0078125
        %v609 = vadd.f32 %v608, 1e-05
        %v610 = vrsqrt.pop %v609
        %v611 = vmul.f32 %v610, %v609
        %v612 = vmul.f32 %v611, %v610
        %v613 = vmul.f32 0.5, %v612
        %v614 = vsub.f32 1.5, %v613
        %v615 = vmul.f32 %v610, %v614
        %vm616 = vweird.f32 %v609
        %vm617 = vweird.f32 %v610
        %vm618 = vmor %vm616, %vm617
        %v619 = vsel %vm618, %v610, %v615
        %v620 = vld [vmem:[%s2] sm:$0x1]
        %v621 = vmul.f32 %v620, %v619
        %v622 = vld [vmem:[%s3] sm:$0x1]
        %v623 = vmul.f32 %v473, %v621
        %v624 = vsub.f32 %v622, %v623
        %v626 = vperm.slane %v621, 0
        %v628 = vmul.f32 %v436, %v626
        %v629 = vmul.f32 %v437, %v626
        %v630 = vmul.f32 %v438, %v626
        %v631 = vmul.f32 %v439, %v626
        %v632 = vmul.f32 %v440, %v626
        %v633 = vmul.f32 %v441, %v626
        %v634 = vmul.f32 %v442, %v626
        %v635 = vmul.f32 %v443, %v626
        %v636 = vmul.f32 %v444, %v626
        %v637 = vmul.f32 %v445, %v626
        %v638 = vmul.f32 %v446, %v626
        %v639 = vmul.f32 %v447, %v626
        %v640 = vmul.f32 %v448, %v626
        %v641 = vmul.f32 %v449, %v626
        %v642 = vmul.f32 %v450, %v626
        %v643 = vmul.f32 %v451, %v626
        %v645 = vperm.slane %v624, 0
        %v647 = vadd.f32 %v628, %v645
        %v648 = vadd.f32 %v629, %v645
        %v649 = vadd.f32 %v630, %v645
        %v650 = vadd.f32 %v631, %v645
        %v651 = vadd.f32 %v632, %v645
        %v652 = vadd.f32 %v633, %v645
        %v653 = vadd.f32 %v634, %v645
        %v654 = vadd.f32 %v635, %v645
        %v655 = vadd.f32 %v636, %v645
        %v656 = vadd.f32 %v637, %v645
        %v657 = vadd.f32 %v638, %v645
        %v658 = vadd.f32 %v639, %v645
        %v659 = vadd.f32 %v640, %v645
        %v660 = vadd.f32 %v641, %v645
        %v661 = vadd.f32 %v642, %v645
        %v662 = vadd.f32 %v643, %v645
        %vm663 = vcmp.ge.f32.partialorder %v647, 0.0
        %vm664 = vcmp.ge.f32.partialorder %v648, 0.0
        %vm665 = vcmp.ge.f32.partialorder %v649, 0.0
        %vm666 = vcmp.ge.f32.partialorder %v650, 0.0
        %vm667 = vcmp.ge.f32.partialorder %v651, 0.0
        %vm668 = vcmp.ge.f32.partialorder %v652, 0.0
        %vm669 = vcmp.ge.f32.partialorder %v653, 0.0
        %vm670 = vcmp.ge.f32.partialorder %v654, 0.0
        %vm671 = vcmp.ge.f32.partialorder %v655, 0.0
        %vm672 = vcmp.ge.f32.partialorder %v656, 0.0
        %vm673 = vcmp.ge.f32.partialorder %v657, 0.0
        %vm674 = vcmp.ge.f32.partialorder %v658, 0.0
        %vm675 = vcmp.ge.f32.partialorder %v659, 0.0
        %vm676 = vcmp.ge.f32.partialorder %v660, 0.0
        %vm677 = vcmp.ge.f32.partialorder %v661, 0.0
        %vm678 = vcmp.ge.f32.partialorder %v662, 0.0
        %v679 = vmul.f32 %v647, 0.2
        %v680 = vmul.f32 %v648, 0.2
        %v681 = vmul.f32 %v649, 0.2
        %v682 = vmul.f32 %v650, 0.2
        %v683 = vmul.f32 %v651, 0.2
        %v684 = vmul.f32 %v652, 0.2
        %v685 = vmul.f32 %v653, 0.2
        %v686 = vmul.f32 %v654, 0.2
        %v687 = vmul.f32 %v655, 0.2
        %v688 = vmul.f32 %v656, 0.2
        %v689 = vmul.f32 %v657, 0.2
        %v690 = vmul.f32 %v658, 0.2
        %v691 = vmul.f32 %v659, 0.2
        %v692 = vmul.f32 %v660, 0.2
        %v693 = vmul.f32 %v661, 0.2
        %v694 = vmul.f32 %v662, 0.2
        %v695 = vsel %vm663, %v647, %v679
        %v696 = vsel %vm664, %v648, %v680
        %v697 = vsel %vm665, %v649, %v681
        %v698 = vsel %vm666, %v650, %v682
        %v699 = vsel %vm667, %v651, %v683
        %v700 = vsel %vm668, %v652, %v684
        %v701 = vsel %vm669, %v653, %v685
        %v702 = vsel %vm670, %v654, %v686
        %v703 = vsel %vm671, %v655, %v687
        %v704 = vsel %vm672, %v656, %v688
        %v705 = vsel %vm673, %v657, %v689
        %v706 = vsel %vm674, %v658, %v690
        %v707 = vsel %vm675, %v659, %v691
        %v708 = vsel %vm676, %v660, %v692
        %v709 = vsel %vm677, %v661, %v693
        %v710 = vsel %vm678, %v662, %v694
        %v711 = vpack.c.bf16 %v695, %v695
        %v712 = vpack.c.bf16 %v696, %v696
        %v713 = vpack.c.bf16 %v697, %v697
        %v714 = vpack.c.bf16 %v698, %v698
        %v715 = vpack.c.bf16 %v699, %v699
        %v716 = vpack.c.bf16 %v700, %v700
        %v717 = vpack.c.bf16 %v701, %v701
        %v718 = vpack.c.bf16 %v702, %v702
        %v719 = vpack.c.bf16 %v703, %v703
        %v720 = vpack.c.bf16 %v704, %v704
        %v721 = vpack.c.bf16 %v705, %v705
        %v722 = vpack.c.bf16 %v706, %v706
        %v723 = vpack.c.bf16 %v707, %v707
        %v724 = vpack.c.bf16 %v708, %v708
        %v725 = vpack.c.bf16 %v709, %v709
        %v726 = vpack.c.bf16 %v710, %v710
        %727 = vst [vmem:[%s4] sm:$0xf] %v711
        %728 = vst [vmem:[%s4 + $0x4] sm:$0xf] %v712
        %729 = vst [vmem:[%s4 + $0x8] sm:$0xf] %v713
        %730 = vst [vmem:[%s4 + $0xc] sm:$0xf] %v714
        %731 = vst [vmem:[%s4 + $0x10] sm:$0xf] %v715
        %732 = vst [vmem:[%s4 + $0x14] sm:$0xf] %v716
        %733 = vst [vmem:[%s4 + $0x18] sm:$0xf] %v717
        %734 = vst [vmem:[%s4 + $0x1c] sm:$0xf] %v718
        %735 = vst [vmem:[%s4 + $0x20] sm:$0xf] %v719
        %736 = vst [vmem:[%s4 + $0x24] sm:$0xf] %v720
        %737 = vst [vmem:[%s4 + $0x28] sm:$0xf] %v721
        %738 = vst [vmem:[%s4 + $0x2c] sm:$0xf] %v722
        %739 = vst [vmem:[%s4 + $0x30] sm:$0xf] %v723
        %740 = vst [vmem:[%s4 + $0x34] sm:$0xf] %v724
        %741 = vst [vmem:[%s4 + $0x38] sm:$0xf] %v725
        %742 = vst [vmem:[%s4 + $0x3c] sm:$0xf] %v726
      $region40: #{discriminator_forward.7} parent=35 // pred_fallthru
        _
      // Predicated region
      $region41: #{discriminator_forward.7} parent=35 // pred_check
        %p743 = pneg %p117
      $region42: #{discriminator_forward.7} parent=35 // pred_check_branch
        %745 = sbr.rel (%p743) target = $region44
      $region43: #{discriminator_forward.7} parent=35 // pred_region
        _
      $region44: #{discriminator_forward.7} parent=35 // pred_fallthru
        _
      // Predicated region
      $region45: #{discriminator_forward.7} parent=35 // pred_check
        %p746 = pneg %p117
      $region46: #{discriminator_forward.7} parent=35 // pred_check_branch
        %748 = sbr.rel (%p746) target = $region48
      $region47: #{discriminator_forward.7} parent=35 // pred_region
        _
      $region48: #{discriminator_forward.7} parent=35 // pred_fallthru
        _
    $region36: #{discriminator_forward.7} parent=5 // pred_fallthru
      _
    %p749 = scmp.le.s32.totalorder 2, %s10
    // Predicated region
    $region49: #{discriminator_forward.7} parent=5 // pred_check
      %p750 = pneg %p749
    $region50: #{discriminator_forward.7} parent=5 // pred_check_branch
      %752 = sbr.rel (%p750) target = $region52
    $region51: #{discriminator_forward.7} parent=5 // pred_region
      %s753 = ssub.s32 %s10, 2
    $region52: #{discriminator_forward.7} parent=5 // pred_fallthru
      _
  $region6: #{discriminator_forward.7} parent=0 // loop_footer
    %s14 = sadd.s32 1, %s10
  $region7: #{discriminator_forward.7} parent=0 // loop_footer_branch
    %9 = sbr.rel target = $region3
  $region8: #{discriminator_forward.7} parent=0 // loop_exit
    _

// kernel: discriminator_forward.8
$region0: #{discriminator_forward.8}
  #allocation0 [shape = 'u32[]', space=smem, size = 0x4, offset = 0x4, fixed_abs, tag = 'smem constant byte address 0x4 - core index']
  #allocation1 [shape = 'u32[72,128]{1,0:T(1,128)}', space=vmem, size = 0x9000, scoped, tag = 'internal scratch']
  #allocation2 [shape = 'f32[32,128]{1,0:T(8,128)}', space=vmem, size = 0x4000, scoped, tag = 'scratch operand']
  %s0 = inlined_call_operand.vmem [shape: bf16[32,512], index: 0, kind: input, shape index: {}]
  %s1 = inlined_call_operand.vmem [shape: bf16[512,128], index: 1, kind: input, shape index: {}]
  %s2 = inlined_call_operand.vmem [shape: f32[1,128], index: 2, kind: input, shape index: {}]
  %s3 = inlined_call_operand.vmem [shape: f32[1,128], index: 3, kind: input, shape index: {}]
  %s4 = inlined_call_operand.vmem [shape: bf16[32,128], index: 4, kind: output, shape index: {}]
  %s5 = sld [smem:[#allocation0]]
  $region53: #{discriminator_forward.8} parent=0
    _
  %s7 = ssub.s32 1, %s5
  %s8 = scalar_select 0, %s7, %s5
  loop: start=0, step=1, limit=4
  $region2: #{discriminator_forward.8} parent=0 // loop_pre_header
    _
  $region3: #{discriminator_forward.8} parent=0 // loop_header
    %s10 = sphi 0, %s14
    %p11 = scmp.ge.s32.totalorder %s10, 4
    %s20 = sphi 0, %s22
    %s23 = sphi 0, %s20
    %s24 = sphi 0, %s23
    %s40 = sphi 0, %s24
    %s44 = sphi 0, %s44
    %s46 = sphi 0, %s44
    %s47 = sphi 0, %s46
    %s61 = sphi 0, %s47
    %s65 = sphi 0, %s65
    %s67 = sphi 0, %s65
    %s68 = sphi 0, %s67
    %s82 = sphi 0, %s68
    %s86 = sphi 0, %s86
    %s88 = sphi 0, %s86
    %s89 = sphi 0, %s88
    %s103 = sphi 0, %s89
    %s107 = sphi 0, %s107
    %s109 = sphi 0, %s107
    %s110 = sphi 0, %s109
    %s124 = sphi 0, %s110
  $region4: #{discriminator_forward.8} parent=0 // loop_header_branch
    %13 = sbr.rel (%p11) target = $region8
  $region5: #{discriminator_forward.8} parent=0 // loop_body
    %s15 = ssub.s32 %s10, 1
    %s16 = ssub.s32 %s10, 2
    %s17 = sadd.s32 %s10, 1
    %s18 = ssub.s32 %s10, %s17
    %p19 = scmp.eq.s32.totalorder %s18, 0
    %s21 = sadd.s32 %s20, 1
    %s22 = scalar_select %p19, %s20, %s21
    %p25 = pneg %p19
    %p26 = scmp.eq.s32.totalorder %s10, 1
    %p27 = por %p25, %p26
    %p28 = scmp.ne.s32.totalorder %s20, %s23
    %p29 = scmp.eq.s32.totalorder %s10, 0
    %p30 = por %p28, %p29
    %p31 = scmp.ne.s32.totalorder %s20, %s23
    %p32 = scmp.eq.s32.totalorder %s15, 1
    %p33 = por %p31, %p32
    %p34 = scmp.ne.s32.totalorder %s23, %s24
    %p35 = scmp.eq.s32.totalorder %s15, 0
    %p36 = por %p34, %p35
    %p37 = scmp.ne.s32.totalorder %s23, %s24
    %p38 = scmp.eq.s32.totalorder %s16, 1
    %p39 = por %p37, %p38
    %p41 = scmp.ne.s32.totalorder %s24, %s40
    %p42 = scmp.eq.s32.totalorder %s16, 0
    %p43 = por %p41, %p42
    %s45 = sadd.s32 %s44, 1
    %p48 = scmp.eq.s32.totalorder %s10, 1
    %p49 = scmp.ne.s32.totalorder %s44, %s46
    %p50 = scmp.eq.s32.totalorder %s10, 0
    %p51 = por %p49, %p50
    %p52 = scmp.ne.s32.totalorder %s44, %s46
    %p53 = scmp.eq.s32.totalorder %s15, 1
    %p54 = por %p52, %p53
    %p55 = scmp.ne.s32.totalorder %s46, %s47
    %p56 = scmp.eq.s32.totalorder %s15, 0
    %p57 = por %p55, %p56
    %p58 = scmp.ne.s32.totalorder %s46, %s47
    %p59 = scmp.eq.s32.totalorder %s16, 1
    %p60 = por %p58, %p59
    %p62 = scmp.ne.s32.totalorder %s47, %s61
    %p63 = scmp.eq.s32.totalorder %s16, 0
    %p64 = por %p62, %p63
    %s66 = sadd.s32 %s65, 1
    %p69 = scmp.eq.s32.totalorder %s10, 1
    %p70 = scmp.ne.s32.totalorder %s65, %s67
    %p71 = scmp.eq.s32.totalorder %s10, 0
    %p72 = por %p70, %p71
    %p73 = scmp.ne.s32.totalorder %s65, %s67
    %p74 = scmp.eq.s32.totalorder %s15, 1
    %p75 = por %p73, %p74
    %p76 = scmp.ne.s32.totalorder %s67, %s68
    %p77 = scmp.eq.s32.totalorder %s15, 0
    %p78 = por %p76, %p77
    %p79 = scmp.ne.s32.totalorder %s67, %s68
    %p80 = scmp.eq.s32.totalorder %s16, 1
    %p81 = por %p79, %p80
    %p83 = scmp.ne.s32.totalorder %s68, %s82
    %p84 = scmp.eq.s32.totalorder %s16, 0
    %p85 = por %p83, %p84
    %s87 = sadd.s32 %s86, 1
    %p90 = scmp.eq.s32.totalorder %s10, 1
    %p91 = scmp.ne.s32.totalorder %s86, %s88
    %p92 = scmp.eq.s32.totalorder %s10, 0
    %p93 = por %p91, %p92
    %p94 = scmp.ne.s32.totalorder %s86, %s88
    %p95 = scmp.eq.s32.totalorder %s15, 1
    %p96 = por %p94, %p95
    %p97 = scmp.ne.s32.totalorder %s88, %s89
    %p98 = scmp.eq.s32.totalorder %s15, 0
    %p99 = por %p97, %p98
    %p100 = scmp.ne.s32.totalorder %s88, %s89
    %p101 = scmp.eq.s32.totalorder %s16, 1
    %p102 = por %p100, %p101
    %p104 = scmp.ne.s32.totalorder %s89, %s103
    %p105 = scmp.eq.s32.totalorder %s16, 0
    %p106 = por %p104, %p105
    %s108 = sadd.s32 %s107, 1
    %p111 = scmp.eq.s32.totalorder %s10, 1
    %p112 = scmp.ne.s32.totalorder %s107, %s109
    %p113 = scmp.eq.s32.totalorder %s10, 0
    %p114 = por %p112, %p113
    %p115 = scmp.ne.s32.totalorder %s107, %s109
    %p116 = scmp.eq.s32.totalorder %s15, 1
    %p117 = por %p115, %p116
    %p118 = scmp.ne.s32.totalorder %s109, %s110
    %p119 = scmp.eq.s32.totalorder %s15, 0
    %p120 = por %p118, %p119
    %p121 = scmp.ne.s32.totalorder %s109, %s110
    %p122 = scmp.eq.s32.totalorder %s16, 1
    %p123 = por %p121, %p122
    %p125 = scmp.ne.s32.totalorder %s110, %s124
    %p126 = scmp.eq.s32.totalorder %s16, 0
    %p127 = por %p125, %p126
    %p128 = scmp.le.s32.totalorder 1, %s10
    %p129 = scmp.lt.s32.totalorder %s10, 3
    %p130 = pnand %p128, %p129
    %p131 = pneg %p130
    // Predicated region
    $region9: #{discriminator_forward.8} parent=5 // pred_check
      _
    $region10: #{discriminator_forward.8} parent=5 // pred_check_branch
      %133 = sbr.rel (%p130) target = $region12
    $region11: #{discriminator_forward.8} parent=5 // pred_region
      %s134 = ssub.s32 %s10, 1
      // Predicated region
      $region13: #{discriminator_forward.8} parent=11 // pred_check
        %p135 = pneg %p57
      $region14: #{discriminator_forward.8} parent=11 // pred_check_branch
        %137 = sbr.rel (%p135) target = $region16
      $region15: #{discriminator_forward.8} parent=11 // pred_region
        _
      $region16: #{discriminator_forward.8} parent=11 // pred_fallthru
        _
      // Predicated region
      $region17: #{discriminator_forward.8} parent=11 // pred_check
        %p138 = pneg %p78
      $region18: #{discriminator_forward.8} parent=11 // pred_check_branch
        %140 = sbr.rel (%p138) target = $region20
      $region19: #{discriminator_forward.8} parent=11 // pred_region
        _
      $region20: #{discriminator_forward.8} parent=11 // pred_fallthru
        _
      // Predicated region
      $region21: #{discriminator_forward.8} parent=11 // pred_check
        %p141 = pneg %p99
      $region22: #{discriminator_forward.8} parent=11 // pred_check_branch
        %143 = sbr.rel (%p141) target = $region24
      $region23: #{discriminator_forward.8} parent=11 // pred_region
        _
      $region24: #{discriminator_forward.8} parent=11 // pred_fallthru
        _
    $region12: #{discriminator_forward.8} parent=5 // pred_fallthru
      _
    %p144 = scmp.lt.s32.totalorder %s10, 2
    // Predicated region
    $region25: #{discriminator_forward.8} parent=5 // pred_check
      %p145 = pneg %p144
    $region26: #{discriminator_forward.8} parent=5 // pred_check_branch
      %147 = sbr.rel (%p145) target = $region28
    $region27: #{discriminator_forward.8} parent=5 // pred_region
      // Predicated region
      $region29: #{discriminator_forward.8} parent=27 // pred_check
        %p148 = pneg %p30
      $region30: #{discriminator_forward.8} parent=27 // pred_check_branch
        %150 = sbr.rel (%p148) target = $region32
      $region31: #{discriminator_forward.8} parent=27 // pred_region
        %s151 = smul.u32 2, %s10
        %p152 = scmp.lt.s32.totalorder %s151, 3
        %s153 = scalar_select %p152, %s151, 3
        %s154 = smul.addr %s153, 4
        %s155 = smul.addr %s154, 4
        %s156 = scalar_lea.vmem %s0, %s155
        %s157 = smul.u32 2, %s10
      $region32: #{discriminator_forward.8} parent=27 // pred_fallthru
        _
    $region28: #{discriminator_forward.8} parent=5 // pred_fallthru
      _
    %p158 = scmp.le.s32.totalorder 1, %s10
    %p159 = scmp.lt.s32.totalorder %s10, 3
    %p160 = pnand %p158, %p159
    %p161 = pneg %p160
    // Predicated region
    $region33: #{discriminator_forward.8} parent=5 // pred_check
      _
    $region34: #{discriminator_forward.8} parent=5 // pred_check_branch
      %163 = sbr.rel (%p160) target = $region36
    $region35: #{discriminator_forward.8} parent=5 // pred_region
      %s164 = ssub.s32 %s10, 1
      %s165 = smul.u32 2, %s15
      %p166 = scmp.lt.s32.totalorder %s165, 3
      %s167 = scalar_select %p166, %s165, 3
      %s168 = smul.addr %s167, 4
      %s169 = smul.addr %s168, 4
      %s170 = scalar_lea.vmem %s0, %s169
      %p171 = pneg %p36
      %p172 = pneg %p33
      %p173 = pneg %p57
      %p174 = pneg %p54
      %p175 = pneg %p78
      %p176 = pneg %p75
      %p177 = pneg %p99
      %p178 = pneg %p96
      %p179 = pneg %p120
      %p180 = pneg %p117
      %s181 = smul.u32 2, %s15
      %p182 = scmp.lt.s32.totalorder %s181, 3
      %s183 = scalar_select %p182, %s181, 3
      %s184 = smul.addr %s183, 4
      %s185 = smul.addr %s184, 4
      %s186 = scalar_lea.vmem %s0, %s185
      %s187 = smul.u32 2, %s15
      %v188 = vld [vmem:[%s186] sm:$0xff]
      %v189 = vld [vmem:[%s186 + $0x8] sm:$0xff]
      %v190 = vld [vmem:[%s186 + $0x10] sm:$0xff]
      %v191 = vld [vmem:[%s186 + $0x18] sm:$0xff]
      %v192 = vld [vmem:[%s1] sm:$0xf]
      %v193 = vld [vmem:[%s1 + $0x4] sm:$0xf]
      %v194 = vld [vmem:[%s1 + $0x8] sm:$0xf]
      %v195 = vld [vmem:[%s1 + $0xc] sm:$0xf]
      %v196 = vld [vmem:[%s1 + $0x10] sm:$0xf]
      %v197 = vld [vmem:[%s1 + $0x14] sm:$0xf]
      %v198 = vld [vmem:[%s1 + $0x18] sm:$0xf]
      %v199 = vld [vmem:[%s1 + $0x1c] sm:$0xf]
      %v200 = vld [vmem:[%s1 + $0x20] sm:$0xf]
      %v201 = vld [vmem:[%s1 + $0x24] sm:$0xf]
      %v202 = vld [vmem:[%s1 + $0x28] sm:$0xf]
      %v203 = vld [vmem:[%s1 + $0x2c] sm:$0xf]
      %v204 = vld [vmem:[%s1 + $0x30] sm:$0xf]
      %v205 = vld [vmem:[%s1 + $0x34] sm:$0xf]
      %v206 = vld [vmem:[%s1 + $0x38] sm:$0xf]
      %v207 = vld [vmem:[%s1 + $0x3c] sm:$0xf]
      %v208 = vld [vmem:[%s1 + $0x40] sm:$0xf]
      %v209 = vld [vmem:[%s1 + $0x44] sm:$0xf]
      %v210 = vld [vmem:[%s1 + $0x48] sm:$0xf]
      %v211 = vld [vmem:[%s1 + $0x4c] sm:$0xf]
      %v212 = vld [vmem:[%s1 + $0x50] sm:$0xf]
      %v213 = vld [vmem:[%s1 + $0x54] sm:$0xf]
      %v214 = vld [vmem:[%s1 + $0x58] sm:$0xf]
      %v215 = vld [vmem:[%s1 + $0x5c] sm:$0xf]
      %v216 = vld [vmem:[%s1 + $0x60] sm:$0xf]
      %v217 = vld [vmem:[%s1 + $0x64] sm:$0xf]
      %v218 = vld [vmem:[%s1 + $0x68] sm:$0xf]
      %v219 = vld [vmem:[%s1 + $0x6c] sm:$0xf]
      %v220 = vld [vmem:[%s1 + $0x70] sm:$0xf]
      %v221 = vld [vmem:[%s1 + $0x74] sm:$0xf]
      %v222 = vld [vmem:[%s1 + $0x78] sm:$0xf]
      %v223 = vld [vmem:[%s1 + $0x7c] sm:$0xf]
      %v224 = vld [vmem:[%s1 + $0x80] sm:$0xf]
      %v225 = vld [vmem:[%s1 + $0x84] sm:$0xf]
      %v226 = vld [vmem:[%s1 + $0x88] sm:$0xf]
      %v227 = vld [vmem:[%s1 + $0x8c] sm:$0xf]
      %v228 = vld [vmem:[%s1 + $0x90] sm:$0xf]
      %v229 = vld [vmem:[%s1 + $0x94] sm:$0xf]
      %v230 = vld [vmem:[%s1 + $0x98] sm:$0xf]
      %v231 = vld [vmem:[%s1 + $0x9c] sm:$0xf]
      %v232 = vld [vmem:[%s1 + $0xa0] sm:$0xf]
      %v233 = vld [vmem:[%s1 + $0xa4] sm:$0xf]
      %v234 = vld [vmem:[%s1 + $0xa8] sm:$0xf]
      %v235 = vld [vmem:[%s1 + $0xac] sm:$0xf]
      %v236 = vld [vmem:[%s1 + $0xb0] sm:$0xf]
      %v237 = vld [vmem:[%s1 + $0xb4] sm:$0xf]
      %v238 = vld [vmem:[%s1 + $0xb8] sm:$0xf]
      %v239 = vld [vmem:[%s1 + $0xbc] sm:$0xf]
      %v240 = vld [vmem:[%s1 + $0xc0] sm:$0xf]
      %v241 = vld [vmem:[%s1 + $0xc4] sm:$0xf]
      %v242 = vld [vmem:[%s1 + $0xc8] sm:$0xf]
      %v243 = vld [vmem:[%s1 + $0xcc] sm:$0xf]
      %v244 = vld [vmem:[%s1 + $0xd0] sm:$0xf]
      %v245 = vld [vmem:[%s1 + $0xd4] sm:$0xf]
      %v246 = vld [vmem:[%s1 + $0xd8] sm:$0xf]
      %v247 = vld [vmem:[%s1 + $0xdc] sm:$0xf]
      %v248 = vld [vmem:[%s1 + $0xe0] sm:$0xf]
      %v249 = vld [vmem:[%s1 + $0xe4] sm:$0xf]
      %v250 = vld [vmem:[%s1 + $0xe8] sm:$0xf]
      %v251 = vld [vmem:[%s1 + $0xec] sm:$0xf]
      %v252 = vld [vmem:[%s1 + $0xf0] sm:$0xf]
      %v253 = vld [vmem:[%s1 + $0xf4] sm:$0xf]
      %v254 = vld [vmem:[%s1 + $0xf8] sm:$0xf]
      %v255 = vld [vmem:[%s1 + $0xfc] sm:$0xf]
      %v260 = vunpack.c.l.b16 %v188
      %v261 = vunpack.c.h.b16 %v188
      %v262 = vunpack.c.l.b16 %v189
      %v263 = vunpack.c.h.b16 %v189
      %v264 = vunpack.c.l.b16 %v190
      %v265 = vunpack.c.h.b16 %v190
      %v266 = vunpack.c.l.b16 %v191
      %v267 = vunpack.c.h.b16 %v191
      %v268 = vpack.c.b16 %v264, %v260
      %v269 = vpack.c.b16 %v265, %v261
      %v270 = vpack.c.b16 %v266, %v262
      %v271 = vpack.c.b16 %v267, %v263
      %v340 = vunpack.c.l.b16 %v192
      %v341 = vunpack.c.l.b16 %v193
      %v342 = vunpack.c.l.b16 %v194
      %v343 = vunpack.c.l.b16 %v195
      %v344 = vunpack.c.l.b16 %v196
      %v345 = vunpack.c.l.b16 %v197
      %v346 = vunpack.c.l.b16 %v198
      %v347 = vunpack.c.l.b16 %v199
      %v348 = vunpack.c.l.b16 %v200
      %v349 = vunpack.c.l.b16 %v201
      %v350 = vunpack.c.l.b16 %v202
      %v351 = vunpack.c.l.b16 %v203
      %v352 = vunpack.c.l.b16 %v204
      %v353 = vunpack.c.l.b16 %v205
      %v354 = vunpack.c.l.b16 %v206
      %v355 = vunpack.c.l.b16 %v207
      %v356 = vunpack.c.l.b16 %v208
      %v357 = vunpack.c.l.b16 %v209
      %v358 = vunpack.c.l.b16 %v210
      %v359 = vunpack.c.l.b16 %v211
      %v360 = vunpack.c.l.b16 %v212
      %v361 = vunpack.c.l.b16 %v213
      %v362 = vunpack.c.l.b16 %v214
      %v363 = vunpack.c.l.b16 %v215
      %v364 = vunpack.c.l.b16 %v216
      %v365 = vunpack.c.l.b16 %v217
      %v366 = vunpack.c.l.b16 %v218
      %v367 = vunpack.c.l.b16 %v219
      %v368 = vunpack.c.l.b16 %v220
      %v369 = vunpack.c.l.b16 %v221
      %v370 = vunpack.c.l.b16 %v222
      %v371 = vunpack.c.l.b16 %v223
      %v372 = vunpack.c.l.b16 %v224
      %v373 = vunpack.c.l.b16 %v225
      %v374 = vunpack.c.l.b16 %v226
      %v375 = vunpack.c.l.b16 %v227
      %v376 = vunpack.c.l.b16 %v228
      %v377 = vunpack.c.l.b16 %v229
      %v378 = vunpack.c.l.b16 %v230
      %v379 = vunpack.c.l.b16 %v231
      %v380 = vunpack.c.l.b16 %v232
      %v381 = vunpack.c.l.b16 %v233
      %v382 = vunpack.c.l.b16 %v234
      %v383 = vunpack.c.l.b16 %v235
      %v384 = vunpack.c.l.b16 %v236
      %v385 = vunpack.c.l.b16 %v237
      %v386 = vunpack.c.l.b16 %v238
      %v387 = vunpack.c.l.b16 %v239
      %v388 = vunpack.c.l.b16 %v240
      %v389 = vunpack.c.l.b16 %v241
      %v390 = vunpack.c.l.b16 %v242
      %v391 = vunpack.c.l.b16 %v243
      %v392 = vunpack.c.l.b16 %v244
      %v393 = vunpack.c.l.b16 %v245
      %v394 = vunpack.c.l.b16 %v246
      %v395 = vunpack.c.l.b16 %v247
      %v396 = vunpack.c.l.b16 %v248
      %v397 = vunpack.c.l.b16 %v249
      %v398 = vunpack.c.l.b16 %v250
      %v399 = vunpack.c.l.b16 %v251
      %v400 = vunpack.c.l.b16 %v252
      %v401 = vunpack.c.l.b16 %v253
      %v402 = vunpack.c.l.b16 %v254
      %v403 = vunpack.c.l.b16 %v255
      %v404 = vpack.c.b16 %v341, %v340
      %v405 = vpack.c.b16 %v343, %v342
      %v406 = vpack.c.b16 %v345, %v344
      %v407 = vpack.c.b16 %v347, %v346
      %v408 = vpack.c.b16 %v349, %v348
      %v409 = vpack.c.b16 %v351, %v350
      %v410 = vpack.c.b16 %v353, %v352
      %v411 = vpack.c.b16 %v355, %v354
      %v412 = vpack.c.b16 %v357, %v356
      %v413 = vpack.c.b16 %v359, %v358
      %v414 = vpack.c.b16 %v361, %v360
      %v415 = vpack.c.b16 %v363, %v362
      %v416 = vpack.c.b16 %v365, %v364
      %v417 = vpack.c.b16 %v367, %v366
      %v418 = vpack.c.b16 %v369, %v368
      %v419 = vpack.c.b16 %v371, %v370
      %v420 = vpack.c.b16 %v373, %v372
      %v421 = vpack.c.b16 %v375, %v374
      %v422 = vpack.c.b16 %v377, %v376
      %v423 = vpack.c.b16 %v379, %v378
      %v424 = vpack.c.b16 %v381, %v380
      %v425 = vpack.c.b16 %v383, %v382
      %v426 = vpack.c.b16 %v385, %v384
      %v427 = vpack.c.b16 %v387, %v386
      %v428 = vpack.c.b16 %v389, %v388
      %v429 = vpack.c.b16 %v391, %v390
      %v430 = vpack.c.b16 %v393, %v392
      %v431 = vpack.c.b16 %v395, %v394
      %v432 = vpack.c.b16 %v397, %v396
      %v433 = vpack.c.b16 %v399, %v398
      %v434 = vpack.c.b16 %v401, %v400
      %v435 = vpack.c.b16 %v403, %v402
      %468 = vmatpush.bf16.msra.mxu0 %v411
      %469 = vmatpush.bf16.msra.mxu0 %v410
      %470 = vmatpush.bf16.msra.mxu0 %v409
      %471 = vmatpush.bf16.msra.mxu0 %v408
      %472 = vmatpush.bf16.msra.mxu0 %v407
      %473 = vmatpush.bf16.msra.mxu0 %v406
      %474 = vmatpush.bf16.msra.mxu0 %v405
      %475 = vmatpush.bf16.msra.mxu0 %v404
      %476 = vmatmul.bf16.gmra.mxu0 %v268
      %v477 = vpop.f32.mrf.mxu0
      %v478 = vadd.f32 0.0, %v477
      %v479 = vpop.f32.mrf.mxu0
      %v480 = vadd.f32 0.0, %v479
      %481 = vdwg.mxu0
      %482 = vmatpush.bf16.msra.mxu0 %v419
      %483 = vmatpush.bf16.msra.mxu0 %v418
      %484 = vmatpush.bf16.msra.mxu0 %v417
      %485 = vmatpush.bf16.msra.mxu0 %v416
      %486 = vmatpush.bf16.msra.mxu0 %v415
      %487 = vmatpush.bf16.msra.mxu0 %v414
      %488 = vmatpush.bf16.msra.mxu0 %v413
      %489 = vmatpush.bf16.msra.mxu0 %v412
      %490 = vmatmul.bf16.gmra.mxu0 %v269
      %v491 = vpop.f32.mrf.mxu0
      %v492 = vadd.f32 %v478, %v491
      %v493 = vpop.f32.mrf.mxu0
      %v494 = vadd.f32 %v480, %v493
      %495 = vdwg.mxu0
      %496 = vmatpush.bf16.msra.mxu0 %v427
      %497 = vmatpush.bf16.msra.mxu0 %v426
      %498 = vmatpush.bf16.msra.mxu0 %v425
      %499 = vmatpush.bf16.msra.mxu0 %v424
      %500 = vmatpush.bf16.msra.mxu0 %v423
      %501 = vmatpush.bf16.msra.mxu0 %v422
      %502 = vmatpush.bf16.msra.mxu0 %v421
      %503 = vmatpush.bf16.msra.mxu0 %v420
      %504 = vmatmul.bf16.gmra.mxu0 %v270
      %v505 = vpop.f32.mrf.mxu0
      %v506 = vadd.f32 %v492, %v505
      %v507 = vpop.f32.mrf.mxu0
      %v508 = vadd.f32 %v494, %v507
      %509 = vdwg.mxu0
      %510 = vmatpush.bf16.msra.mxu0 %v435
      %511 = vmatpush.bf16.msra.mxu0 %v434
      %512 = vmatpush.bf16.msra.mxu0 %v433
      %513 = vmatpush.bf16.msra.mxu0 %v432
      %514 = vmatpush.bf16.msra.mxu0 %v431
      %515 = vmatpush.bf16.msra.mxu0 %v430
      %516 = vmatpush.bf16.msra.mxu0 %v429
      %517 = vmatpush.bf16.msra.mxu0 %v428
      %518 = vmatmul.bf16.gmra.mxu0 %v271
      %v519 = vpop.f32.mrf.mxu0
      %v520 = vadd.f32 %v506, %v519
      %v521 = vpop.f32.mrf.mxu0
      %v522 = vadd.f32 %v508, %v521
      %523 = vdwg.mxu0
      %s524 = smul.u32 %s15, 16
      %s525 = scalar_lea.vmem [#allocation2], %s524
      %526 = vst [vmem:[%s525] sm:$0xff] %v520
      %527 = vst [vmem:[%s525 + $0x8] sm:$0xff] %v522
      %p528 = scmp.eq.s32.totalorder %s15, 1
      // Predicated region
      $region37: #{discriminator_forward.8} parent=35 // pred_check
        %p529 = pneg %p528
      $region38: #{discriminator_forward.8} parent=35 // pred_check_branch
        %531 = sbr.rel (%p529) target = $region40
      $region39: #{discriminator_forward.8} parent=35 // pred_region
        %v532 = vld [vmem:[#allocation2] sm:$0xff]
        %v533 = vld [vmem:[#allocation2 + $0x8] sm:$0xff]
        %v534 = vld [vmem:[#allocation2 + $0x10] sm:$0xff]
        %v535 = vld [vmem:[#allocation2 + $0x18] sm:$0xff]
        %v536 = vadd.f32 %v532, %v533
        %v537 = vadd.f32 %v536, %v534
        %v538 = vadd.f32 %v537, %v535
        %v539 = vrot.slane %v538, 4
        %v540 = vadd.f32 %v538, %v539
        %v541 = vrot.slane %v540, 2
        %v542 = vadd.f32 %v540, %v541
        %v543 = vrot.slane %v542, 1
        %v544 = vadd.f32 %v542, %v543
        %v545 = vmul.f32 %v544, 0.03125
        %v546 = vlaneseq
        %v547 = vshrl.u32 %v546, 7
        %v548 = vadd.s32 %v547, 8
        %v549 = vadd.s32 %v547, 16
        %v550 = vadd.s32 %v547, 24
        %vm551 = vcmp.lt.s32.totalorder %v547, 32
        %vm552 = vcmp.lt.s32.totalorder %v548, 32
        %vm553 = vcmp.lt.s32.totalorder %v549, 32
        %vm554 = vcmp.lt.s32.totalorder %v550, 32
        %v555 = vsub.f32 %v532, %v545
        %v556 = vsub.f32 %v533, %v545
        %v557 = vsub.f32 %v534, %v545
        %v558 = vsub.f32 %v535, %v545
        %v559 = vsel %vm551, 1, 0
        %v560 = vsel %vm552, 1, 0
        %v561 = vsel %vm553, 1, 0
        %v562 = vsel %vm554, 1, 0
        %vm563 = vcmp.eq.s32.totalorder %v559, 1
        %vm564 = vcmp.eq.s32.totalorder %v560, 1
        %vm565 = vcmp.eq.s32.totalorder %v561, 1
        %vm566 = vcmp.eq.s32.totalorder %v562, 1
        %v567 = vsel %vm563, %v555, 0.0
        %v568 = vsel %vm564, %v556, 0.0
        %v569 = vsel %vm565, %v557, 0.0
        %v570 = vsel %vm566, %v558, 0.0
        %v571 = vmul.f32 %v567, %v567
        %v572 = vmul.f32 %v568, %v568
        %v573 = vmul.f32 %v569, %v569
        %v574 = vmul.f32 %v570, %v570
        %v575 = vadd.f32 %v571, %v572
        %v576 = vadd.f32 %v575, %v573
        %v577 = vadd.f32 %v576, %v574
        %v578 = vrot.slane %v577, 4
        %v579 = vadd.f32 %v577, %v578
        %v580 = vrot.slane %v579, 2
        %v581 = vadd.f32 %v579, %v580
        %v582 = vrot.slane %v581, 1
        %v583 = vadd.f32 %v581, %v582
        %v584 = vmul.f32 %v583, 0.03125
        %v585 = vadd.f32 %v584, 1e-05
        %v586 = vrsqrt.pop %v585
        %v587 = vmul.f32 %v586, %v585
        %v588 = vmul.f32 %v587, %v586
        %v589 = vmul.f32 0.5, %v588
        %v590 = vsub.f32 1.5, %v589
        %v591 = vmul.f32 %v586, %v590
        %vm592 = vweird.f32 %v585
        %vm593 = vweird.f32 %v586
        %vm594 = vmor %vm592, %vm593
        %v595 = vsel %vm594, %v586, %v591
        %v596 = vld [vmem:[%s2] sm:$0x1]
        %v597 = vmul.f32 %v596, %v595
        %v598 = vld [vmem:[%s3] sm:$0x1]
        %v599 = vmul.f32 %v545, %v597
        %v600 = vsub.f32 %v598, %v599
        %v602 = vperm.slane %v597, 0
        %v604 = vmul.f32 %v532, %v602
        %v605 = vmul.f32 %v533, %v602
        %v606 = vmul.f32 %v534, %v602
        %v607 = vmul.f32 %v535, %v602
        %v609 = vperm.slane %v600, 0
        %v611 = vadd.f32 %v604, %v609
        %v612 = vadd.f32 %v605, %v609
        %v613 = vadd.f32 %v606, %v609
        %v614 = vadd.f32 %v607, %v609
        %vm615 = vcmp.ge.f32.partialorder %v611, 0.0
        %vm616 = vcmp.ge.f32.partialorder %v612, 0.0
        %vm617 = vcmp.ge.f32.partialorder %v613, 0.0
        %vm618 = vcmp.ge.f32.partialorder %v614, 0.0
        %v619 = vmul.f32 %v611, 0.2
        %v620 = vmul.f32 %v612, 0.2
        %v621 = vmul.f32 %v613, 0.2
        %v622 = vmul.f32 %v614, 0.2
        %v623 = vsel %vm615, %v611, %v619
        %v624 = vsel %vm616, %v612, %v620
        %v625 = vsel %vm617, %v613, %v621
        %v626 = vsel %vm618, %v614, %v622
        %v627 = vpack.c.bf16 %v623, %v623
        %v628 = vpack.c.bf16 %v624, %v624
        %v629 = vpack.c.bf16 %v625, %v625
        %v630 = vpack.c.bf16 %v626, %v626
        %631 = vst [vmem:[%s4] sm:$0xf] %v627
        %632 = vst [vmem:[%s4 + $0x4] sm:$0xf] %v628
        %633 = vst [vmem:[%s4 + $0x8] sm:$0xf] %v629
        %634 = vst [vmem:[%s4 + $0xc] sm:$0xf] %v630
      $region40: #{discriminator_forward.8} parent=35 // pred_fallthru
        _
      // Predicated region
      $region41: #{discriminator_forward.8} parent=35 // pred_check
        %p635 = pneg %p117
      $region42: #{discriminator_forward.8} parent=35 // pred_check_branch
        %637 = sbr.rel (%p635) target = $region44
      $region43: #{discriminator_forward.8} parent=35 // pred_region
        _
      $region44: #{discriminator_forward.8} parent=35 // pred_fallthru
        _
      // Predicated region
      $region45: #{discriminator_forward.8} parent=35 // pred_check
        %p638 = pneg %p117
      $region46: #{discriminator_forward.8} parent=35 // pred_check_branch
        %640 = sbr.rel (%p638) target = $region48
      $region47: #{discriminator_forward.8} parent=35 // pred_region
        _
      $region48: #{discriminator_forward.8} parent=35 // pred_fallthru
        _
    $region36: #{discriminator_forward.8} parent=5 // pred_fallthru
      _
    %p641 = scmp.le.s32.totalorder 2, %s10
    // Predicated region
    $region49: #{discriminator_forward.8} parent=5 // pred_check
      %p642 = pneg %p641
    $region50: #{discriminator_forward.8} parent=5 // pred_check_branch
      %644 = sbr.rel (%p642) target = $region52
    $region51: #{discriminator_forward.8} parent=5 // pred_region
      %s645 = ssub.s32 %s10, 2
    $region52: #{discriminator_forward.8} parent=5 // pred_fallthru
      _
  $region6: #{discriminator_forward.8} parent=0 // loop_footer
    %s14 = sadd.s32 1, %s10
  $region7: #{discriminator_forward.8} parent=0 // loop_footer_branch
    %9 = sbr.rel target = $region3
  $region8: #{discriminator_forward.8} parent=0 // loop_exit
    _

// kernel: discriminator_forward.9
$region0: #{discriminator_forward.9}
  #allocation0 [shape = 'u32[]', space=smem, size = 0x4, offset = 0x4, fixed_abs, tag = 'smem constant byte address 0x4 - core index']
  #allocation1 [shape = 'u32[72,128]{1,0:T(1,128)}', space=vmem, size = 0x9000, scoped, tag = 'internal scratch']
  %s0 = inlined_call_operand.vmem [shape: bf16[8,1024], index: 0, kind: input, shape index: {}]
  %s1 = inlined_call_operand.vmem [shape: bf16[1024,128], index: 1, kind: input, shape index: {}]
  %s2 = inlined_call_operand.vmem [shape: bf16[8,128], index: 2, kind: output, shape index: {}]
  %s3 = sld [smem:[#allocation0]]
  $region18: #{discriminator_forward.9} parent=0
    _
  %s5 = ssub.s32 1, %s3
  %s6 = scalar_select 0, %s5, %s3
  // Predicated region
  $region2: #{discriminator_forward.9} parent=0 // pred_check
    _
  $region3: #{discriminator_forward.9} parent=0 // pred_check_branch
    %8 = sbr.rel (0) target = $region5
  $region4: #{discriminator_forward.9} parent=0 // pred_region
    _
  $region5: #{discriminator_forward.9} parent=0 // pred_fallthru
    _
  // Predicated region
  $region6: #{discriminator_forward.9} parent=0 // pred_check
    _
  $region7: #{discriminator_forward.9} parent=0 // pred_check_branch
    %10 = sbr.rel (0) target = $region9
  $region8: #{discriminator_forward.9} parent=0 // pred_region
    _
  $region9: #{discriminator_forward.9} parent=0 // pred_fallthru
    _
  %v11 = vld [vmem:[%s0] sm:$0xff]
  %v12 = vld [vmem:[%s0 + $0x8] sm:$0xff]
  %v13 = vld [vmem:[%s0 + $0x10] sm:$0xff]
  %v14 = vld [vmem:[%s0 + $0x18] sm:$0xff]
  %v15 = vld [vmem:[%s1] sm:$0xf]
  %v16 = vld [vmem:[%s1 + $0x4] sm:$0xf]
  %v17 = vld [vmem:[%s1 + $0x8] sm:$0xf]
  %v18 = vld [vmem:[%s1 + $0xc] sm:$0xf]
  %v19 = vld [vmem:[%s1 + $0x10] sm:$0xf]
  %v20 = vld [vmem:[%s1 + $0x14] sm:$0xf]
  %v21 = vld [vmem:[%s1 + $0x18] sm:$0xf]
  %v22 = vld [vmem:[%s1 + $0x1c] sm:$0xf]
  %v23 = vld [vmem:[%s1 + $0x20] sm:$0xf]
  %v24 = vld [vmem:[%s1 + $0x24] sm:$0xf]
  %v25 = vld [vmem:[%s1 + $0x28] sm:$0xf]
  %v26 = vld [vmem:[%s1 + $0x2c] sm:$0xf]
  %v27 = vld [vmem:[%s1 + $0x30] sm:$0xf]
  %v28 = vld [vmem:[%s1 + $0x34] sm:$0xf]
  %v29 = vld [vmem:[%s1 + $0x38] sm:$0xf]
  %v30 = vld [vmem:[%s1 + $0x3c] sm:$0xf]
  %v31 = vld [vmem:[%s1 + $0x40] sm:$0xf]
  %v32 = vld [vmem:[%s1 + $0x44] sm:$0xf]
  %v33 = vld [vmem:[%s1 + $0x48] sm:$0xf]
  %v34 = vld [vmem:[%s1 + $0x4c] sm:$0xf]
  %v35 = vld [vmem:[%s1 + $0x50] sm:$0xf]
  %v36 = vld [vmem:[%s1 + $0x54] sm:$0xf]
  %v37 = vld [vmem:[%s1 + $0x58] sm:$0xf]
  %v38 = vld [vmem:[%s1 + $0x5c] sm:$0xf]
  %v39 = vld [vmem:[%s1 + $0x60] sm:$0xf]
  %v40 = vld [vmem:[%s1 + $0x64] sm:$0xf]
  %v41 = vld [vmem:[%s1 + $0x68] sm:$0xf]
  %v42 = vld [vmem:[%s1 + $0x6c] sm:$0xf]
  %v43 = vld [vmem:[%s1 + $0x70] sm:$0xf]
  %v44 = vld [vmem:[%s1 + $0x74] sm:$0xf]
  %v45 = vld [vmem:[%s1 + $0x78] sm:$0xf]
  %v46 = vld [vmem:[%s1 + $0x7c] sm:$0xf]
  %v47 = vld [vmem:[%s1 + $0x80] sm:$0xf]
  %v48 = vld [vmem:[%s1 + $0x84] sm:$0xf]
  %v49 = vld [vmem:[%s1 + $0x88] sm:$0xf]
  %v50 = vld [vmem:[%s1 + $0x8c] sm:$0xf]
  %v51 = vld [vmem:[%s1 + $0x90] sm:$0xf]
  %v52 = vld [vmem:[%s1 + $0x94] sm:$0xf]
  %v53 = vld [vmem:[%s1 + $0x98] sm:$0xf]
  %v54 = vld [vmem:[%s1 + $0x9c] sm:$0xf]
  %v55 = vld [vmem:[%s1 + $0xa0] sm:$0xf]
  %v56 = vld [vmem:[%s1 + $0xa4] sm:$0xf]
  %v57 = vld [vmem:[%s1 + $0xa8] sm:$0xf]
  %v58 = vld [vmem:[%s1 + $0xac] sm:$0xf]
  %v59 = vld [vmem:[%s1 + $0xb0] sm:$0xf]
  %v60 = vld [vmem:[%s1 + $0xb4] sm:$0xf]
  %v61 = vld [vmem:[%s1 + $0xb8] sm:$0xf]
  %v62 = vld [vmem:[%s1 + $0xbc] sm:$0xf]
  %v63 = vld [vmem:[%s1 + $0xc0] sm:$0xf]
  %v64 = vld [vmem:[%s1 + $0xc4] sm:$0xf]
  %v65 = vld [vmem:[%s1 + $0xc8] sm:$0xf]
  %v66 = vld [vmem:[%s1 + $0xcc] sm:$0xf]
  %v67 = vld [vmem:[%s1 + $0xd0] sm:$0xf]
  %v68 = vld [vmem:[%s1 + $0xd4] sm:$0xf]
  %v69 = vld [vmem:[%s1 + $0xd8] sm:$0xf]
  %v70 = vld [vmem:[%s1 + $0xdc] sm:$0xf]
  %v71 = vld [vmem:[%s1 + $0xe0] sm:$0xf]
  %v72 = vld [vmem:[%s1 + $0xe4] sm:$0xf]
  %v73 = vld [vmem:[%s1 + $0xe8] sm:$0xf]
  %v74 = vld [vmem:[%s1 + $0xec] sm:$0xf]
  %v75 = vld [vmem:[%s1 + $0xf0] sm:$0xf]
  %v76 = vld [vmem:[%s1 + $0xf4] sm:$0xf]
  %v77 = vld [vmem:[%s1 + $0xf8] sm:$0xf]
  %v78 = vld [vmem:[%s1 + $0xfc] sm:$0xf]
  %v79 = vld [vmem:[%s1 + $0x100] sm:$0xf]
  %v80 = vld [vmem:[%s1 + $0x104] sm:$0xf]
  %v81 = vld [vmem:[%s1 + $0x108] sm:$0xf]
  %v82 = vld [vmem:[%s1 + $0x10c] sm:$0xf]
  %v83 = vld [vmem:[%s1 + $0x110] sm:$0xf]
  %v84 = vld [vmem:[%s1 + $0x114] sm:$0xf]
  %v85 = vld [vmem:[%s1 + $0x118] sm:$0xf]
  %v86 = vld [vmem:[%s1 + $0x11c] sm:$0xf]
  %v87 = vld [vmem:[%s1 + $0x120] sm:$0xf]
  %v88 = vld [vmem:[%s1 + $0x124] sm:$0xf]
  %v89 = vld [vmem:[%s1 + $0x128] sm:$0xf]
  %v90 = vld [vmem:[%s1 + $0x12c] sm:$0xf]
  %v91 = vld [vmem:[%s1 + $0x130] sm:$0xf]
  %v92 = vld [vmem:[%s1 + $0x134] sm:$0xf]
  %v93 = vld [vmem:[%s1 + $0x138] sm:$0xf]
  %v94 = vld [vmem:[%s1 + $0x13c] sm:$0xf]
  %v95 = vld [vmem:[%s1 + $0x140] sm:$0xf]
  %v96 = vld [vmem:[%s1 + $0x144] sm:$0xf]
  %v97 = vld [vmem:[%s1 + $0x148] sm:$0xf]
  %v98 = vld [vmem:[%s1 + $0x14c] sm:$0xf]
  %v99 = vld [vmem:[%s1 + $0x150] sm:$0xf]
  %v100 = vld [vmem:[%s1 + $0x154] sm:$0xf]
  %v101 = vld [vmem:[%s1 + $0x158] sm:$0xf]
  %v102 = vld [vmem:[%s1 + $0x15c] sm:$0xf]
  %v103 = vld [vmem:[%s1 + $0x160] sm:$0xf]
  %v104 = vld [vmem:[%s1 + $0x164] sm:$0xf]
  %v105 = vld [vmem:[%s1 + $0x168] sm:$0xf]
  %v106 = vld [vmem:[%s1 + $0x16c] sm:$0xf]
  %v107 = vld [vmem:[%s1 + $0x170] sm:$0xf]
  %v108 = vld [vmem:[%s1 + $0x174] sm:$0xf]
  %v109 = vld [vmem:[%s1 + $0x178] sm:$0xf]
  %v110 = vld [vmem:[%s1 + $0x17c] sm:$0xf]
  %v111 = vld [vmem:[%s1 + $0x180] sm:$0xf]
  %v112 = vld [vmem:[%s1 + $0x184] sm:$0xf]
  %v113 = vld [vmem:[%s1 + $0x188] sm:$0xf]
  %v114 = vld [vmem:[%s1 + $0x18c] sm:$0xf]
  %v115 = vld [vmem:[%s1 + $0x190] sm:$0xf]
  %v116 = vld [vmem:[%s1 + $0x194] sm:$0xf]
  %v117 = vld [vmem:[%s1 + $0x198] sm:$0xf]
  %v118 = vld [vmem:[%s1 + $0x19c] sm:$0xf]
  %v119 = vld [vmem:[%s1 + $0x1a0] sm:$0xf]
  %v120 = vld [vmem:[%s1 + $0x1a4] sm:$0xf]
  %v121 = vld [vmem:[%s1 + $0x1a8] sm:$0xf]
  %v122 = vld [vmem:[%s1 + $0x1ac] sm:$0xf]
  %v123 = vld [vmem:[%s1 + $0x1b0] sm:$0xf]
  %v124 = vld [vmem:[%s1 + $0x1b4] sm:$0xf]
  %v125 = vld [vmem:[%s1 + $0x1b8] sm:$0xf]
  %v126 = vld [vmem:[%s1 + $0x1bc] sm:$0xf]
  %v127 = vld [vmem:[%s1 + $0x1c0] sm:$0xf]
  %v128 = vld [vmem:[%s1 + $0x1c4] sm:$0xf]
  %v129 = vld [vmem:[%s1 + $0x1c8] sm:$0xf]
  %v130 = vld [vmem:[%s1 + $0x1cc] sm:$0xf]
  %v131 = vld [vmem:[%s1 + $0x1d0] sm:$0xf]
  %v132 = vld [vmem:[%s1 + $0x1d4] sm:$0xf]
  %v133 = vld [vmem:[%s1 + $0x1d8] sm:$0xf]
  %v134 = vld [vmem:[%s1 + $0x1dc] sm:$0xf]
  %v135 = vld [vmem:[%s1 + $0x1e0] sm:$0xf]
  %v136 = vld [vmem:[%s1 + $0x1e4] sm:$0xf]
  %v137 = vld [vmem:[%s1 + $0x1e8] sm:$0xf]
  %v138 = vld [vmem:[%s1 + $0x1ec] sm:$0xf]
  %v139 = vld [vmem:[%s1 + $0x1f0] sm:$0xf]
  %v140 = vld [vmem:[%s1 + $0x1f4] sm:$0xf]
  %v141 = vld [vmem:[%s1 + $0x1f8] sm:$0xf]
  %v142 = vld [vmem:[%s1 + $0x1fc] sm:$0xf]
  %v147 = vunpack.c.l.b16 %v11
  %v148 = vunpack.c.h.b16 %v11
  %v149 = vunpack.c.l.b16 %v12
  %v150 = vunpack.c.h.b16 %v12
  %v151 = vunpack.c.l.b16 %v13
  %v152 = vunpack.c.h.b16 %v13
  %v153 = vunpack.c.l.b16 %v14
  %v154 = vunpack.c.h.b16 %v14
  %v155 = vpack.c.b16 %v147, %v147
  %v156 = vpack.c.b16 %v148, %v148
  %v157 = vpack.c.b16 %v149, %v149
  %v158 = vpack.c.b16 %v150, %v150
  %v159 = vpack.c.b16 %v151, %v151
  %v160 = vpack.c.b16 %v152, %v152
  %v161 = vpack.c.b16 %v153, %v153
  %v162 = vpack.c.b16 %v154, %v154
  %v299 = vunpack.c.l.b16 %v15
  %v300 = vunpack.c.l.b16 %v16
  %v301 = vunpack.c.l.b16 %v17
  %v302 = vunpack.c.l.b16 %v18
  %v303 = vunpack.c.l.b16 %v19
  %v304 = vunpack.c.l.b16 %v20
  %v305 = vunpack.c.l.b16 %v21
  %v306 = vunpack.c.l.b16 %v22
  %v307 = vunpack.c.l.b16 %v23
  %v308 = vunpack.c.l.b16 %v24
  %v309 = vunpack.c.l.b16 %v25
  %v310 = vunpack.c.l.b16 %v26
  %v311 = vunpack.c.l.b16 %v27
  %v312 = vunpack.c.l.b16 %v28
  %v313 = vunpack.c.l.b16 %v29
  %v314 = vunpack.c.l.b16 %v30
  %v315 = vunpack.c.l.b16 %v31
  %v316 = vunpack.c.l.b16 %v32
  %v317 = vunpack.c.l.b16 %v33
  %v318 = vunpack.c.l.b16 %v34
  %v319 = vunpack.c.l.b16 %v35
  %v320 = vunpack.c.l.b16 %v36
  %v321 = vunpack.c.l.b16 %v37
  %v322 = vunpack.c.l.b16 %v38
  %v323 = vunpack.c.l.b16 %v39
  %v324 = vunpack.c.l.b16 %v40
  %v325 = vunpack.c.l.b16 %v41
  %v326 = vunpack.c.l.b16 %v42
  %v327 = vunpack.c.l.b16 %v43
  %v328 = vunpack.c.l.b16 %v44
  %v329 = vunpack.c.l.b16 %v45
  %v330 = vunpack.c.l.b16 %v46
  %v331 = vunpack.c.l.b16 %v47
  %v332 = vunpack.c.l.b16 %v48
  %v333 = vunpack.c.l.b16 %v49
  %v334 = vunpack.c.l.b16 %v50
  %v335 = vunpack.c.l.b16 %v51
  %v336 = vunpack.c.l.b16 %v52
  %v337 = vunpack.c.l.b16 %v53
  %v338 = vunpack.c.l.b16 %v54
  %v339 = vunpack.c.l.b16 %v55
  %v340 = vunpack.c.l.b16 %v56
  %v341 = vunpack.c.l.b16 %v57
  %v342 = vunpack.c.l.b16 %v58
  %v343 = vunpack.c.l.b16 %v59
  %v344 = vunpack.c.l.b16 %v60
  %v345 = vunpack.c.l.b16 %v61
  %v346 = vunpack.c.l.b16 %v62
  %v347 = vunpack.c.l.b16 %v63
  %v348 = vunpack.c.l.b16 %v64
  %v349 = vunpack.c.l.b16 %v65
  %v350 = vunpack.c.l.b16 %v66
  %v351 = vunpack.c.l.b16 %v67
  %v352 = vunpack.c.l.b16 %v68
  %v353 = vunpack.c.l.b16 %v69
  %v354 = vunpack.c.l.b16 %v70
  %v355 = vunpack.c.l.b16 %v71
  %v356 = vunpack.c.l.b16 %v72
  %v357 = vunpack.c.l.b16 %v73
  %v358 = vunpack.c.l.b16 %v74
  %v359 = vunpack.c.l.b16 %v75
  %v360 = vunpack.c.l.b16 %v76
  %v361 = vunpack.c.l.b16 %v77
  %v362 = vunpack.c.l.b16 %v78
  %v363 = vunpack.c.l.b16 %v79
  %v364 = vunpack.c.l.b16 %v80
  %v365 = vunpack.c.l.b16 %v81
  %v366 = vunpack.c.l.b16 %v82
  %v367 = vunpack.c.l.b16 %v83
  %v368 = vunpack.c.l.b16 %v84
  %v369 = vunpack.c.l.b16 %v85
  %v370 = vunpack.c.l.b16 %v86
  %v371 = vunpack.c.l.b16 %v87
  %v372 = vunpack.c.l.b16 %v88
  %v373 = vunpack.c.l.b16 %v89
  %v374 = vunpack.c.l.b16 %v90
  %v375 = vunpack.c.l.b16 %v91
  %v376 = vunpack.c.l.b16 %v92
  %v377 = vunpack.c.l.b16 %v93
  %v378 = vunpack.c.l.b16 %v94
  %v379 = vunpack.c.l.b16 %v95
  %v380 = vunpack.c.l.b16 %v96
  %v381 = vunpack.c.l.b16 %v97
  %v382 = vunpack.c.l.b16 %v98
  %v383 = vunpack.c.l.b16 %v99
  %v384 = vunpack.c.l.b16 %v100
  %v385 = vunpack.c.l.b16 %v101
  %v386 = vunpack.c.l.b16 %v102
  %v387 = vunpack.c.l.b16 %v103
  %v388 = vunpack.c.l.b16 %v104
  %v389 = vunpack.c.l.b16 %v105
  %v390 = vunpack.c.l.b16 %v106
  %v391 = vunpack.c.l.b16 %v107
  %v392 = vunpack.c.l.b16 %v108
  %v393 = vunpack.c.l.b16 %v109
  %v394 = vunpack.c.l.b16 %v110
  %v395 = vunpack.c.l.b16 %v111
  %v396 = vunpack.c.l.b16 %v112
  %v397 = vunpack.c.l.b16 %v113
  %v398 = vunpack.c.l.b16 %v114
  %v399 = vunpack.c.l.b16 %v115
  %v400 = vunpack.c.l.b16 %v116
  %v401 = vunpack.c.l.b16 %v117
  %v402 = vunpack.c.l.b16 %v118
  %v403 = vunpack.c.l.b16 %v119
  %v404 = vunpack.c.l.b16 %v120
  %v405 = vunpack.c.l.b16 %v121
  %v406 = vunpack.c.l.b16 %v122
  %v407 = vunpack.c.l.b16 %v123
  %v408 = vunpack.c.l.b16 %v124
  %v409 = vunpack.c.l.b16 %v125
  %v410 = vunpack.c.l.b16 %v126
  %v411 = vunpack.c.l.b16 %v127
  %v412 = vunpack.c.l.b16 %v128
  %v413 = vunpack.c.l.b16 %v129
  %v414 = vunpack.c.l.b16 %v130
  %v415 = vunpack.c.l.b16 %v131
  %v416 = vunpack.c.l.b16 %v132
  %v417 = vunpack.c.l.b16 %v133
  %v418 = vunpack.c.l.b16 %v134
  %v419 = vunpack.c.l.b16 %v135
  %v420 = vunpack.c.l.b16 %v136
  %v421 = vunpack.c.l.b16 %v137
  %v422 = vunpack.c.l.b16 %v138
  %v423 = vunpack.c.l.b16 %v139
  %v424 = vunpack.c.l.b16 %v140
  %v425 = vunpack.c.l.b16 %v141
  %v426 = vunpack.c.l.b16 %v142
  %v427 = vpack.c.b16 %v300, %v299
  %v428 = vpack.c.b16 %v302, %v301
  %v429 = vpack.c.b16 %v304, %v303
  %v430 = vpack.c.b16 %v306, %v305
  %v431 = vpack.c.b16 %v308, %v307
  %v432 = vpack.c.b16 %v310, %v309
  %v433 = vpack.c.b16 %v312, %v311
  %v434 = vpack.c.b16 %v314, %v313
  %v435 = vpack.c.b16 %v316, %v315
  %v436 = vpack.c.b16 %v318, %v317
  %v437 = vpack.c.b16 %v320, %v319
  %v438 = vpack.c.b16 %v322, %v321
  %v439 = vpack.c.b16 %v324, %v323
  %v440 = vpack.c.b16 %v326, %v325
  %v441 = vpack.c.b16 %v328, %v327
  %v442 = vpack.c.b16 %v330, %v329
  %v443 = vpack.c.b16 %v332, %v331
  %v444 = vpack.c.b16 %v334, %v333
  %v445 = vpack.c.b16 %v336, %v335
  %v446 = vpack.c.b16 %v338, %v337
  %v447 = vpack.c.b16 %v340, %v339
  %v448 = vpack.c.b16 %v342, %v341
  %v449 = vpack.c.b16 %v344, %v343
  %v450 = vpack.c.b16 %v346, %v345
  %v451 = vpack.c.b16 %v348, %v347
  %v452 = vpack.c.b16 %v350, %v349
  %v453 = vpack.c.b16 %v352, %v351
  %v454 = vpack.c.b16 %v354, %v353
  %v455 = vpack.c.b16 %v356, %v355
  %v456 = vpack.c.b16 %v358, %v357
  %v457 = vpack.c.b16 %v360, %v359
  %v458 = vpack.c.b16 %v362, %v361
  %v459 = vpack.c.b16 %v364, %v363
  %v460 = vpack.c.b16 %v366, %v365
  %v461 = vpack.c.b16 %v368, %v367
  %v462 = vpack.c.b16 %v370, %v369
  %v463 = vpack.c.b16 %v372, %v371
  %v464 = vpack.c.b16 %v374, %v373
  %v465 = vpack.c.b16 %v376, %v375
  %v466 = vpack.c.b16 %v378, %v377
  %v467 = vpack.c.b16 %v380, %v379
  %v468 = vpack.c.b16 %v382, %v381
  %v469 = vpack.c.b16 %v384, %v383
  %v470 = vpack.c.b16 %v386, %v385
  %v471 = vpack.c.b16 %v388, %v387
  %v472 = vpack.c.b16 %v390, %v389
  %v473 = vpack.c.b16 %v392, %v391
  %v474 = vpack.c.b16 %v394, %v393
  %v475 = vpack.c.b16 %v396, %v395
  %v476 = vpack.c.b16 %v398, %v397
  %v477 = vpack.c.b16 %v400, %v399
  %v478 = vpack.c.b16 %v402, %v401
  %v479 = vpack.c.b16 %v404, %v403
  %v480 = vpack.c.b16 %v406, %v405
  %v481 = vpack.c.b16 %v408, %v407
  %v482 = vpack.c.b16 %v410, %v409
  %v483 = vpack.c.b16 %v412, %v411
  %v484 = vpack.c.b16 %v414, %v413
  %v485 = vpack.c.b16 %v416, %v415
  %v486 = vpack.c.b16 %v418, %v417
  %v487 = vpack.c.b16 %v420, %v419
  %v488 = vpack.c.b16 %v422, %v421
  %v489 = vpack.c.b16 %v424, %v423
  %v490 = vpack.c.b16 %v426, %v425
  %555 = vmatpush.bf16.msra.mxu0 %v434
  %556 = vmatpush.bf16.msra.mxu0 %v433
  %557 = vmatpush.bf16.msra.mxu0 %v432
  %558 = vmatpush.bf16.msra.mxu0 %v431
  %559 = vmatpush.bf16.msra.mxu0 %v430
  %560 = vmatpush.bf16.msra.mxu0 %v429
  %561 = vmatpush.bf16.msra.mxu0 %v428
  %562 = vmatpush.bf16.msra.mxu0 %v427
  %563 = vmatmul.bf16.gmra.mxu0 %v155
  %v564 = vpop.f32.mrf.mxu0
  %v565 = vadd.f32 0.0, %v564
  %v566 = vpop.f32.mrf.mxu0
  %567 = vdwg.mxu0
  %568 = vmatpush.bf16.msra.mxu0 %v442
  %569 = vmatpush.bf16.msra.mxu0 %v441
  %570 = vmatpush.bf16.msra.mxu0 %v440
  %571 = vmatpush.bf16.msra.mxu0 %v439
  %572 = vmatpush.bf16.msra.mxu0 %v438
  %573 = vmatpush.bf16.msra.mxu0 %v437
  %574 = vmatpush.bf16.msra.mxu0 %v436
  %575 = vmatpush.bf16.msra.mxu0 %v435
  %576 = vmatmul.bf16.gmra.mxu0 %v156
  %v577 = vpop.f32.mrf.mxu0
  %v578 = vadd.f32 %v565, %v577
  %v579 = vpop.f32.mrf.mxu0
  %580 = vdwg.mxu0
  %581 = vmatpush.bf16.msra.mxu0 %v450
  %582 = vmatpush.bf16.msra.mxu0 %v449
  %583 = vmatpush.bf16.msra.mxu0 %v448
  %584 = vmatpush.bf16.msra.mxu0 %v447
  %585 = vmatpush.bf16.msra.mxu0 %v446
  %586 = vmatpush.bf16.msra.mxu0 %v445
  %587 = vmatpush.bf16.msra.mxu0 %v444
  %588 = vmatpush.bf16.msra.mxu0 %v443
  %589 = vmatmul.bf16.gmra.mxu0 %v157
  %v590 = vpop.f32.mrf.mxu0
  %v591 = vadd.f32 %v578, %v590
  %v592 = vpop.f32.mrf.mxu0
  %593 = vdwg.mxu0
  %594 = vmatpush.bf16.msra.mxu0 %v458
  %595 = vmatpush.bf16.msra.mxu0 %v457
  %596 = vmatpush.bf16.msra.mxu0 %v456
  %597 = vmatpush.bf16.msra.mxu0 %v455
  %598 = vmatpush.bf16.msra.mxu0 %v454
  %599 = vmatpush.bf16.msra.mxu0 %v453
  %600 = vmatpush.bf16.msra.mxu0 %v452
  %601 = vmatpush.bf16.msra.mxu0 %v451
  %602 = vmatmul.bf16.gmra.mxu0 %v158
  %v603 = vpop.f32.mrf.mxu0
  %v604 = vadd.f32 %v591, %v603
  %v605 = vpop.f32.mrf.mxu0
  %606 = vdwg.mxu0
  %607 = vmatpush.bf16.msra.mxu0 %v466
  %608 = vmatpush.bf16.msra.mxu0 %v465
  %609 = vmatpush.bf16.msra.mxu0 %v464
  %610 = vmatpush.bf16.msra.mxu0 %v463
  %611 = vmatpush.bf16.msra.mxu0 %v462
  %612 = vmatpush.bf16.msra.mxu0 %v461
  %613 = vmatpush.bf16.msra.mxu0 %v460
  %614 = vmatpush.bf16.msra.mxu0 %v459
  %615 = vmatmul.bf16.gmra.mxu0 %v159
  %v616 = vpop.f32.mrf.mxu0
  %v617 = vadd.f32 %v604, %v616
  %v618 = vpop.f32.mrf.mxu0
  %619 = vdwg.mxu0
  %620 = vmatpush.bf16.msra.mxu0 %v474
  %621 = vmatpush.bf16.msra.mxu0 %v473
  %622 = vmatpush.bf16.msra.mxu0 %v472
  %623 = vmatpush.bf16.msra.mxu0 %v471
  %624 = vmatpush.bf16.msra.mxu0 %v470
  %625 = vmatpush.bf16.msra.mxu0 %v469
  %626 = vmatpush.bf16.msra.mxu0 %v468
  %627 = vmatpush.bf16.msra.mxu0 %v467
  %628 = vmatmul.bf16.gmra.mxu0 %v160
  %v629 = vpop.f32.mrf.mxu0
  %v630 = vadd.f32 %v617, %v629
  %v631 = vpop.f32.mrf.mxu0
  %632 = vdwg.mxu0
  %633 = vmatpush.bf16.msra.mxu0 %v482
  %634 = vmatpush.bf16.msra.mxu0 %v481
  %635 = vmatpush.bf16.msra.mxu0 %v480
  %636 = vmatpush.bf16.msra.mxu0 %v479
  %637 = vmatpush.bf16.msra.mxu0 %v478
  %638 = vmatpush.bf16.msra.mxu0 %v477
  %639 = vmatpush.bf16.msra.mxu0 %v476
  %640 = vmatpush.bf16.msra.mxu0 %v475
  %641 = vmatmul.bf16.gmra.mxu0 %v161
  %v642 = vpop.f32.mrf.mxu0
  %v643 = vadd.f32 %v630, %v642
  %v644 = vpop.f32.mrf.mxu0
  %645 = vdwg.mxu0
  %646 = vmatpush.bf16.msra.mxu0 %v490
  %647 = vmatpush.bf16.msra.mxu0 %v489
  %648 = vmatpush.bf16.msra.mxu0 %v488
  %649 = vmatpush.bf16.msra.mxu0 %v487
  %650 = vmatpush.bf16.msra.mxu0 %v486
  %651 = vmatpush.bf16.msra.mxu0 %v485
  %652 = vmatpush.bf16.msra.mxu0 %v484
  %653 = vmatpush.bf16.msra.mxu0 %v483
  %654 = vmatmul.bf16.gmra.mxu0 %v162
  %v655 = vpop.f32.mrf.mxu0
  %v656 = vadd.f32 %v643, %v655
  %v657 = vpop.f32.mrf.mxu0
  %658 = vdwg.mxu0
  %v659 = vmul.f32 %v656, 0.5
  %v660 = vtanh.pop %v659
  %v661 = vmul.f32 %v660, 0.5
  %v662 = vadd.f32 %v661, 0.5
  %v663 = vpack.c.bf16 %v662, %v662
  %664 = vst [vmem:[%s2] sm:$0xf] %v663
  // Predicated region
  $region10: #{discriminator_forward.9} parent=0 // pred_check
    _
  $region11: #{discriminator_forward.9} parent=0 // pred_check_branch
    %666 = sbr.rel (0) target = $region13
  $region12: #{discriminator_forward.9} parent=0 // pred_region
    _
  $region13: #{discriminator_forward.9} parent=0 // pred_fallthru
    _
  // Predicated region
  $region14: #{discriminator_forward.9} parent=0 // pred_check
    _
  $region15: #{discriminator_forward.9} parent=0 // pred_check_branch
    %668 = sbr.rel (0) target = $region17
  $region16: #{discriminator_forward.9} parent=0 // pred_region
    _
  $region17: #{discriminator_forward.9} parent=0 // pred_fallthru
    _

</llo_original>
